<compile_context>
chip_gen: v7x
topology: tpu7x:2x2x1
jax: 0.10.0
libtpu: 0.0.40
codegen_flags: <defaults>
</compile_context>

<pallas_src>
import jax
import jax.numpy as jnp
from jax.experimental import pallas as pl
from jax.experimental.pallas import tpu as pltpu


def _decoder_kernel(x_ref, wih_ref, whh_ref, bias_ref, h0_ref, out_ref, hn_ref):
    """Fused GRU recurrence (+ input projection) + log-softmax over batch."""
    S, B, H = out_ref.shape
    f32 = jnp.float32

    # Per-gate weights selected on a LEADING axis (no sub-128-lane slicing).
    wih_r, wih_z, wih_n = wih_ref[0], wih_ref[1], wih_ref[2]   # (I, H) each
    whh_r, whh_z, whh_n = whh_ref[0], whh_ref[1], whh_ref[2]   # (H, H) each

    # Biases: r/z have b_ih and b_hh pre-folded together; the n gate keeps
    # b_hh_n inside r*(.) per PyTorch semantics.  Broadcast once (not per step).
    b_r = jnp.broadcast_to(bias_ref[0], (B, H))
    b_z = jnp.broadcast_to(bias_ref[1], (B, H))
    b_in = jnp.broadcast_to(bias_ref[2], (B, H))
    b_hn = jnp.broadcast_to(bias_ref[3], (B, H))

    h = h0_ref[...].astype(f32)                                # (B, H)
    hs = []
    for t in range(S):   # fully unrolled; S is small and static here
        x_t = x_ref[t].astype(f32)                             # (B, I)

        # Input-side projection, fused into the kernel.  Independent of h, so
        # these MXU pushes hide under the recurrent dependency chain.
        i_r = jnp.dot(x_t, wih_r, preferred_element_type=f32) + b_r
        i_z = jnp.dot(x_t, wih_z, preferred_element_type=f32) + b_z
        i_n = jnp.dot(x_t, wih_n, preferred_element_type=f32) + b_in

        # Recurrent projection, per gate (leading-axis gate selection).
        h_r = jnp.dot(h, whh_r, preferred_element_type=f32)
        h_z = jnp.dot(h, whh_z, preferred_element_type=f32)
        h_n = jnp.dot(h, whh_n, preferred_element_type=f32)

        r = jax.nn.sigmoid(i_r + h_r)
        z = jax.nn.sigmoid(i_z + h_z)
        n = jnp.tanh(i_n + r * (h_n + b_hn))    # b_hh_n stays inside r*(.)
        h = (1.0 - z) * n + z * h
        hs.append(h)

    # Final hidden state written exactly once.
    hn_ref[...] = h.astype(hn_ref.dtype)

    # Per-step states stay in vregs; one whole-slab log-softmax over the batch
    # axis (dim=1 of (S, B, H)) and ONE block store.  exp/log go to the EUP,
    # the batch reduce goes to the XLU.
    slab = jnp.stack(hs, axis=0)                               # (S, B, H)
    m = jnp.max(slab, axis=1, keepdims=True)
    lse = jnp.log(jnp.sum(jnp.exp(slab - m), axis=1, keepdims=True)) + m
    out_ref[...] = (slab - lse).astype(out_ref.dtype)


def decoder_forward(x, h0, w_ih, w_hh, b_ih, b_hh):
    """x: (S, B, I), h0: (1, B, H), w_ih: (3H, I), w_hh: (3H, H), b_*: (3H,)."""
    S, B, I = x.shape
    H = h0.shape[-1]
    f32 = jnp.float32

    # Per-gate, pre-transposed weights with gates on a LEADING axis.
    wih_g = jnp.transpose(w_ih.astype(f32).reshape(3, H, I), (0, 2, 1))   # (3, I, H)
    whh_g = jnp.transpose(w_hh.astype(f32).reshape(3, H, H), (0, 2, 1))   # (3, H, H)

    b_ih3 = b_ih.astype(f32).reshape(3, H)
    b_hh3 = b_hh.astype(f32).reshape(3, H)
    bias = jnp.stack([
        b_ih3[0] + b_hh3[0],      # r-gate: both biases folded
        b_ih3[1] + b_hh3[1],      # z-gate: both biases folded
        b_ih3[2],                 # n-gate, input side
        b_hh3[2],                 # n-gate, hidden side (stays inside r*(.))
    ], axis=0).reshape(4, 1, H)

    out, hn = pl.pallas_call(
        _decoder_kernel,
        out_shape=(
            jax.ShapeDtypeStruct((S, B, H), jnp.float32),
            jax.ShapeDtypeStruct((B, H), jnp.float32),
        ),
        grid_spec=pltpu.PrefetchScalarGridSpec(
            num_scalar_prefetch=0,
            grid=(1,),                                        # whole sequence in one invocation
            in_specs=[
                pl.BlockSpec((S, B, I), lambda i: (0, 0, 0)),   # x
                pl.BlockSpec((3, I, H), lambda i: (0, 0, 0)),   # W_ih^T per gate
                pl.BlockSpec((3, H, H), lambda i: (0, 0, 0)),   # W_hh^T per gate
                pl.BlockSpec((4, 1, H), lambda i: (0, 0, 0)),   # folded biases
                pl.BlockSpec((B, H), lambda i: (0, 0)),         # h0
            ],
            out_specs=[
                pl.BlockSpec((S, B, H), lambda i: (0, 0, 0)),   # output (one store)
                pl.BlockSpec((B, H), lambda i: (0, 0)),         # final hidden
            ],
        ),
        compiler_params=pltpu.CompilerParams(
            dimension_semantics=("arbitrary",)),
    )(x.astype(f32), wih_g, whh_g, bias, h0.reshape(B, H).astype(f32))

    return out, hn.reshape(1, B, H)


def decoder_reference(x, h0, w_ih, w_hh, b_ih, b_hh):
    """Pure-JAX reference matching torch.nn.GRU + LogSoftmax(dim=1)."""
    H = h0.shape[-1]

    def step(h, x_t):
        gi = x_t @ w_ih.T + b_ih
        gh = h @ w_hh.T + b_hh
        i_r, i_z, i_n = gi[:, :H], gi[:, H:2 * H], gi[:, 2 * H:]
        h_r, h_z, h_n = gh[:, :H], gh[:, H:2 * H], gh[:, 2 * H:]
        r = jax.nn.sigmoid(i_r + h_r)
        z = jax.nn.sigmoid(i_z + h_z)
        n = jnp.tanh(i_n + r * h_n)
        h_new = (1.0 - z) * n + z * h
        return h_new, h_new

    h_last, outs = jax.lax.scan(step, h0[0], x)
    outs = jax.nn.log_softmax(outs, axis=1)
    return outs, h_last[None]


if __name__ == "__main__":
    input_size, hidden_size, batch, seq = 16, 32, 2, 8

    key = jax.random.PRNGKey(0)
    ks = jax.random.split(key, 6)
    bound = 1.0 / jnp.sqrt(hidden_size)

    w_ih = jax.random.uniform(ks[0], (3 * hidden_size, input_size),
                              minval=-bound, maxval=bound, dtype=jnp.float32)
    w_hh = jax.random.uniform(ks[1], (3 * hidden_size, hidden_size),
                              minval=-bound, maxval=bound, dtype=jnp.float32)
    b_ih = jax.random.uniform(ks[2], (3 * hidden_size,),
                              minval=-bound, maxval=bound, dtype=jnp.float32)
    b_hh = jax.random.uniform(ks[3], (3 * hidden_size,),
                              minval=-bound, maxval=bound, dtype=jnp.float32)

    x = jax.random.normal(ks[4], (seq, batch, input_size), dtype=jnp.float32)
    h0 = jax.random.normal(ks[5], (1, batch, hidden_size), dtype=jnp.float32)

    out, hn = decoder_forward(x, h0, w_ih, w_hh, b_ih, b_hh)
    out = jax.block_until_ready(out)
    hn = jax.block_until_ready(hn)

    out_ref, hn_ref = decoder_reference(x, h0, w_ih, w_hh, b_ih, b_hh)
    assert out.shape == (seq, batch, hidden_size)
    assert hn.shape == (1, batch, hidden_size)
    assert jnp.allclose(out, out_ref, atol=2e-5, rtol=2e-5)
    assert jnp.allclose(hn, hn_ref, atol=2e-5, rtol=2e-5)

    print("KERNEL_OK")
</pallas_src>

<mosaic_0001>
module attributes {stable_mosaic.version = 11 : i64} {
  func.func @_decoder_kernel(%arg0: i32, %arg1: memref<8x2x16xf32, #tpu.memory_space<vmem>>, %arg2: memref<3x16x32xf32, #tpu.memory_space<vmem>>, %arg3: memref<3x32x32xf32, #tpu.memory_space<vmem>>, %arg4: memref<4x1x32xf32, #tpu.memory_space<vmem>>, %arg5: memref<2x32xf32, #tpu.memory_space<vmem>>, %arg6: memref<8x2x32xf32, #tpu.memory_space<vmem>>, %arg7: memref<2x32xf32, #tpu.memory_space<vmem>>) attributes {dimension_semantics = [#tpu.dimension_semantics<arbitrary>], iteration_bounds = array<i64: 1>, scalar_prefetch = 0 : i64, scratch_operands = 0 : i64, tpu.core_type = #tpu.core_type<tc>, window_params = [{pipeline_mode = #tpu.pipeline_mode<synchronous>, transform_indices = @transform_0, window_bounds = array<i64: 8, 2, 16>}, {pipeline_mode = #tpu.pipeline_mode<synchronous>, transform_indices = @transform_1, window_bounds = array<i64: 3, 16, 32>}, {pipeline_mode = #tpu.pipeline_mode<synchronous>, transform_indices = @transform_2, window_bounds = array<i64: 3, 32, 32>}, {pipeline_mode = #tpu.pipeline_mode<synchronous>, transform_indices = @transform_3, window_bounds = array<i64: 4, 1, 32>}, {pipeline_mode = #tpu.pipeline_mode<synchronous>, transform_indices = @transform_4, window_bounds = array<i64: 2, 32>}, {pipeline_mode = #tpu.pipeline_mode<synchronous>, transform_indices = @transform_5, window_bounds = array<i64: 8, 2, 32>}, {pipeline_mode = #tpu.pipeline_mode<synchronous>, transform_indices = @transform_6, window_bounds = array<i64: 2, 32>}]} {
    %c0 = arith.constant 0 : index
    %c0_0 = arith.constant 0 : index
    %c0_1 = arith.constant 0 : index
    %0 = vector.load %arg2[%c0, %c0_0, %c0_1] : memref<3x16x32xf32, #tpu.memory_space<vmem>>, vector<1x16x32xf32>
    %1 = vector.shape_cast %0 : vector<1x16x32xf32> to vector<16x32xf32>
    %c1 = arith.constant 1 : index
    %c0_2 = arith.constant 0 : index
    %c0_3 = arith.constant 0 : index
    %2 = vector.load %arg2[%c1, %c0_2, %c0_3] : memref<3x16x32xf32, #tpu.memory_space<vmem>>, vector<1x16x32xf32>
    %3 = vector.shape_cast %2 : vector<1x16x32xf32> to vector<16x32xf32>
    %c2 = arith.constant 2 : index
    %c0_4 = arith.constant 0 : index
    %c0_5 = arith.constant 0 : index
    %4 = vector.load %arg2[%c2, %c0_4, %c0_5] : memref<3x16x32xf32, #tpu.memory_space<vmem>>, vector<1x16x32xf32>
    %5 = vector.shape_cast %4 : vector<1x16x32xf32> to vector<16x32xf32>
    %c0_6 = arith.constant 0 : index
    %c0_7 = arith.constant 0 : index
    %c0_8 = arith.constant 0 : index
    %6 = vector.load %arg3[%c0_6, %c0_7, %c0_8] : memref<3x32x32xf32, #tpu.memory_space<vmem>>, vector<1x32x32xf32>
    %7 = vector.shape_cast %6 : vector<1x32x32xf32> to vector<32x32xf32>
    %c1_9 = arith.constant 1 : index
    %c0_10 = arith.constant 0 : index
    %c0_11 = arith.constant 0 : index
    %8 = vector.load %arg3[%c1_9, %c0_10, %c0_11] : memref<3x32x32xf32, #tpu.memory_space<vmem>>, vector<1x32x32xf32>
    %9 = vector.shape_cast %8 : vector<1x32x32xf32> to vector<32x32xf32>
    %c2_12 = arith.constant 2 : index
    %c0_13 = arith.constant 0 : index
    %c0_14 = arith.constant 0 : index
    %10 = vector.load %arg3[%c2_12, %c0_13, %c0_14] : memref<3x32x32xf32, #tpu.memory_space<vmem>>, vector<1x32x32xf32>
    %11 = vector.shape_cast %10 : vector<1x32x32xf32> to vector<32x32xf32>
    %c0_15 = arith.constant 0 : index
    %c0_16 = arith.constant 0 : index
    %c0_17 = arith.constant 0 : index
    %12 = vector.load %arg4[%c0_15, %c0_16, %c0_17] : memref<4x1x32xf32, #tpu.memory_space<vmem>>, vector<1x1x32xf32>
    %13 = vector.shape_cast %12 : vector<1x1x32xf32> to vector<1x32xf32>
    %14 = vector.shape_cast %13 : vector<1x32xf32> to vector<1x32xf32>
    %15 = vector.broadcast %14 : vector<1x32xf32> to vector<2x32xf32>
    %c1_18 = arith.constant 1 : index
    %c0_19 = arith.constant 0 : index
    %c0_20 = arith.constant 0 : index
    %16 = vector.load %arg4[%c1_18, %c0_19, %c0_20] : memref<4x1x32xf32, #tpu.memory_space<vmem>>, vector<1x1x32xf32>
    %17 = vector.shape_cast %16 : vector<1x1x32xf32> to vector<1x32xf32>
    %18 = vector.shape_cast %17 : vector<1x32xf32> to vector<1x32xf32>
    %19 = vector.broadcast %18 : vector<1x32xf32> to vector<2x32xf32>
    %c2_21 = arith.constant 2 : index
    %c0_22 = arith.constant 0 : index
    %c0_23 = arith.constant 0 : index
    %20 = vector.load %arg4[%c2_21, %c0_22, %c0_23] : memref<4x1x32xf32, #tpu.memory_space<vmem>>, vector<1x1x32xf32>
    %21 = vector.shape_cast %20 : vector<1x1x32xf32> to vector<1x32xf32>
    %22 = vector.shape_cast %21 : vector<1x32xf32> to vector<1x32xf32>
    %23 = vector.broadcast %22 : vector<1x32xf32> to vector<2x32xf32>
    %c3 = arith.constant 3 : index
    %c0_24 = arith.constant 0 : index
    %c0_25 = arith.constant 0 : index
    %24 = vector.load %arg4[%c3, %c0_24, %c0_25] : memref<4x1x32xf32, #tpu.memory_space<vmem>>, vector<1x1x32xf32>
    %25 = vector.shape_cast %24 : vector<1x1x32xf32> to vector<1x32xf32>
    %26 = vector.shape_cast %25 : vector<1x32xf32> to vector<1x32xf32>
    %27 = vector.broadcast %26 : vector<1x32xf32> to vector<2x32xf32>
    %c0_26 = arith.constant 0 : index
    %c0_27 = arith.constant 0 : index
    %28 = vector.load %arg5[%c0_26, %c0_27] : memref<2x32xf32, #tpu.memory_space<vmem>>, vector<2x32xf32>
    %c0_28 = arith.constant 0 : index
    %c0_29 = arith.constant 0 : index
    %c0_30 = arith.constant 0 : index
    %29 = vector.load %arg1[%c0_28, %c0_29, %c0_30] : memref<8x2x16xf32, #tpu.memory_space<vmem>>, vector<1x2x16xf32>
    %30 = vector.shape_cast %29 : vector<1x2x16xf32> to vector<2x16xf32>
    %cst = arith.constant dense<0.000000e+00> : vector<2x32xf32>
    %31 = tpu.matmul %30, %1, %cst {dimension_numbers = #tpu.dot_dimension_numbers<[1], [0], [0], [1], [0, 0, 1, 1], [], []>} : vector<2x16xf32>, vector<16x32xf32>, vector<2x32xf32> -> vector<2x32xf32>
    %32 = arith.addf %31, %15 : vector<2x32xf32>
    %cst_31 = arith.constant dense<0.000000e+00> : vector<2x32xf32>
    %33 = tpu.matmul %30, %3, %cst_31 {dimension_numbers = #tpu.dot_dimension_numbers<[1], [0], [0], [1], [0, 0, 1, 1], [], []>} : vector<2x16xf32>, vector<16x32xf32>, vector<2x32xf32> -> vector<2x32xf32>
    %34 = arith.addf %33, %19 : vector<2x32xf32>
    %cst_32 = arith.constant dense<0.000000e+00> : vector<2x32xf32>
    %35 = tpu.matmul %30, %5, %cst_32 {dimension_numbers = #tpu.dot_dimension_numbers<[1], [0], [0], [1], [0, 0, 1, 1], [], []>} : vector<2x16xf32>, vector<16x32xf32>, vector<2x32xf32> -> vector<2x32xf32>
    %36 = arith.addf %35, %23 : vector<2x32xf32>
    %cst_33 = arith.constant dense<0.000000e+00> : vector<2x32xf32>
    %37 = tpu.matmul %28, %7, %cst_33 {dimension_numbers = #tpu.dot_dimension_numbers<[1], [0], [0], [1], [0, 0, 1, 1], [], []>} : vector<2x32xf32>, vector<32x32xf32>, vector<2x32xf32> -> vector<2x32xf32>
    %cst_34 = arith.constant dense<0.000000e+00> : vector<2x32xf32>
    %38 = tpu.matmul %28, %9, %cst_34 {dimension_numbers = #tpu.dot_dimension_numbers<[1], [0], [0], [1], [0, 0, 1, 1], [], []>} : vector<2x32xf32>, vector<32x32xf32>, vector<2x32xf32> -> vector<2x32xf32>
    %cst_35 = arith.constant dense<0.000000e+00> : vector<2x32xf32>
    %39 = tpu.matmul %28, %11, %cst_35 {dimension_numbers = #tpu.dot_dimension_numbers<[1], [0], [0], [1], [0, 0, 1, 1], [], []>} : vector<2x32xf32>, vector<32x32xf32>, vector<2x32xf32> -> vector<2x32xf32>
    %40 = arith.addf %32, %37 : vector<2x32xf32>
    %41 = arith.negf %40 : vector<2x32xf32>
    %42 = math.exp %41 : vector<2x32xf32>
    %cst_36 = arith.constant 1.000000e+00 : f32
    %43 = vector.broadcast %cst_36 : f32 to vector<2x32xf32>
    %44 = arith.addf %43, %42 : vector<2x32xf32>
    %45 = arith.divf %43, %44 : vector<2x32xf32>
    %46 = arith.addf %34, %38 : vector<2x32xf32>
    %47 = arith.negf %46 : vector<2x32xf32>
    %48 = math.exp %47 : vector<2x32xf32>
    %cst_37 = arith.constant 1.000000e+00 : f32
    %49 = vector.broadcast %cst_37 : f32 to vector<2x32xf32>
    %50 = arith.addf %49, %48 : vector<2x32xf32>
    %51 = arith.divf %49, %50 : vector<2x32xf32>
    %52 = arith.addf %39, %27 : vector<2x32xf32>
    %53 = arith.mulf %45, %52 : vector<2x32xf32>
    %54 = arith.addf %36, %53 : vector<2x32xf32>
    %55 = math.tanh %54 : vector<2x32xf32>
    %cst_38 = arith.constant 1.000000e+00 : f32
    %56 = vector.broadcast %cst_38 : f32 to vector<2x32xf32>
    %57 = arith.subf %56, %51 : vector<2x32xf32>
    %58 = arith.mulf %57, %55 : vector<2x32xf32>
    %59 = arith.mulf %51, %28 : vector<2x32xf32>
    %60 = arith.addf %58, %59 : vector<2x32xf32>
    %c1_39 = arith.constant 1 : index
    %c0_40 = arith.constant 0 : index
    %c0_41 = arith.constant 0 : index
    %61 = vector.load %arg1[%c1_39, %c0_40, %c0_41] : memref<8x2x16xf32, #tpu.memory_space<vmem>>, vector<1x2x16xf32>
    %62 = vector.shape_cast %61 : vector<1x2x16xf32> to vector<2x16xf32>
    %cst_42 = arith.constant dense<0.000000e+00> : vector<2x32xf32>
    %63 = tpu.matmul %62, %1, %cst_42 {dimension_numbers = #tpu.dot_dimension_numbers<[1], [0], [0], [1], [0, 0, 1, 1], [], []>} : vector<2x16xf32>, vector<16x32xf32>, vector<2x32xf32> -> vector<2x32xf32>
    %64 = arith.addf %63, %15 : vector<2x32xf32>
    %cst_43 = arith.constant dense<0.000000e+00> : vector<2x32xf32>
    %65 = tpu.matmul %62, %3, %cst_43 {dimension_numbers = #tpu.dot_dimension_numbers<[1], [0], [0], [1], [0, 0, 1, 1], [], []>} : vector<2x16xf32>, vector<16x32xf32>, vector<2x32xf32> -> vector<2x32xf32>
    %66 = arith.addf %65, %19 : vector<2x32xf32>
    %cst_44 = arith.constant dense<0.000000e+00> : vector<2x32xf32>
    %67 = tpu.matmul %62, %5, %cst_44 {dimension_numbers = #tpu.dot_dimension_numbers<[1], [0], [0], [1], [0, 0, 1, 1], [], []>} : vector<2x16xf32>, vector<16x32xf32>, vector<2x32xf32> -> vector<2x32xf32>
    %68 = arith.addf %67, %23 : vector<2x32xf32>
    %cst_45 = arith.constant dense<0.000000e+00> : vector<2x32xf32>
    %69 = tpu.matmul %60, %7, %cst_45 {dimension_numbers = #tpu.dot_dimension_numbers<[1], [0], [0], [1], [0, 0, 1, 1], [], []>} : vector<2x32xf32>, vector<32x32xf32>, vector<2x32xf32> -> vector<2x32xf32>
    %cst_46 = arith.constant dense<0.000000e+00> : vector<2x32xf32>
    %70 = tpu.matmul %60, %9, %cst_46 {dimension_numbers = #tpu.dot_dimension_numbers<[1], [0], [0], [1], [0, 0, 1, 1], [], []>} : vector<2x32xf32>, vector<32x32xf32>, vector<2x32xf32> -> vector<2x32xf32>
    %cst_47 = arith.constant dense<0.000000e+00> : vector<2x32xf32>
    %71 = tpu.matmul %60, %11, %cst_47 {dimension_numbers = #tpu.dot_dimension_numbers<[1], [0], [0], [1], [0, 0, 1, 1], [], []>} : vector<2x32xf32>, vector<32x32xf32>, vector<2x32xf32> -> vector<2x32xf32>
    %72 = arith.addf %64, %69 : vector<2x32xf32>
    %73 = arith.negf %72 : vector<2x32xf32>
    %74 = math.exp %73 : vector<2x32xf32>
    %cst_48 = arith.constant 1.000000e+00 : f32
    %75 = vector.broadcast %cst_48 : f32 to vector<2x32xf32>
    %76 = arith.addf %75, %74 : vector<2x32xf32>
    %77 = arith.divf %75, %76 : vector<2x32xf32>
    %78 = arith.addf %66, %70 : vector<2x32xf32>
    %79 = arith.negf %78 : vector<2x32xf32>
    %80 = math.exp %79 : vector<2x32xf32>
    %cst_49 = arith.constant 1.000000e+00 : f32
    %81 = vector.broadcast %cst_49 : f32 to vector<2x32xf32>
    %82 = arith.addf %81, %80 : vector<2x32xf32>
    %83 = arith.divf %81, %82 : vector<2x32xf32>
    %84 = arith.addf %71, %27 : vector<2x32xf32>
    %85 = arith.mulf %77, %84 : vector<2x32xf32>
    %86 = arith.addf %68, %85 : vector<2x32xf32>
    %87 = math.tanh %86 : vector<2x32xf32>
    %cst_50 = arith.constant 1.000000e+00 : f32
    %88 = vector.broadcast %cst_50 : f32 to vector<2x32xf32>
    %89 = arith.subf %88, %83 : vector<2x32xf32>
    %90 = arith.mulf %89, %87 : vector<2x32xf32>
    %91 = arith.mulf %83, %60 : vector<2x32xf32>
    %92 = arith.addf %90, %91 : vector<2x32xf32>
    %c2_51 = arith.constant 2 : index
    %c0_52 = arith.constant 0 : index
    %c0_53 = arith.constant 0 : index
    %93 = vector.load %arg1[%c2_51, %c0_52, %c0_53] : memref<8x2x16xf32, #tpu.memory_space<vmem>>, vector<1x2x16xf32>
    %94 = vector.shape_cast %93 : vector<1x2x16xf32> to vector<2x16xf32>
    %cst_54 = arith.constant dense<0.000000e+00> : vector<2x32xf32>
    %95 = tpu.matmul %94, %1, %cst_54 {dimension_numbers = #tpu.dot_dimension_numbers<[1], [0], [0], [1], [0, 0, 1, 1], [], []>} : vector<2x16xf32>, vector<16x32xf32>, vector<2x32xf32> -> vector<2x32xf32>
    %96 = arith.addf %95, %15 : vector<2x32xf32>
    %cst_55 = arith.constant dense<0.000000e+00> : vector<2x32xf32>
    %97 = tpu.matmul %94, %3, %cst_55 {dimension_numbers = #tpu.dot_dimension_numbers<[1], [0], [0], [1], [0, 0, 1, 1], [], []>} : vector<2x16xf32>, vector<16x32xf32>, vector<2x32xf32> -> vector<2x32xf32>
    %98 = arith.addf %97, %19 : vector<2x32xf32>
    %cst_56 = arith.constant dense<0.000000e+00> : vector<2x32xf32>
    %99 = tpu.matmul %94, %5, %cst_56 {dimension_numbers = #tpu.dot_dimension_numbers<[1], [0], [0], [1], [0, 0, 1, 1], [], []>} : vector<2x16xf32>, vector<16x32xf32>, vector<2x32xf32> -> vector<2x32xf32>
    %100 = arith.addf %99, %23 : vector<2x32xf32>
    %cst_57 = arith.constant dense<0.000000e+00> : vector<2x32xf32>
    %101 = tpu.matmul %92, %7, %cst_57 {dimension_numbers = #tpu.dot_dimension_numbers<[1], [0], [0], [1], [0, 0, 1, 1], [], []>} : vector<2x32xf32>, vector<32x32xf32>, vector<2x32xf32> -> vector<2x32xf32>
    %cst_58 = arith.constant dense<0.000000e+00> : vector<2x32xf32>
    %102 = tpu.matmul %92, %9, %cst_58 {dimension_numbers = #tpu.dot_dimension_numbers<[1], [0], [0], [1], [0, 0, 1, 1], [], []>} : vector<2x32xf32>, vector<32x32xf32>, vector<2x32xf32> -> vector<2x32xf32>
    %cst_59 = arith.constant dense<0.000000e+00> : vector<2x32xf32>
    %103 = tpu.matmul %92, %11, %cst_59 {dimension_numbers = #tpu.dot_dimension_numbers<[1], [0], [0], [1], [0, 0, 1, 1], [], []>} : vector<2x32xf32>, vector<32x32xf32>, vector<2x32xf32> -> vector<2x32xf32>
    %104 = arith.addf %96, %101 : vector<2x32xf32>
    %105 = arith.negf %104 : vector<2x32xf32>
    %106 = math.exp %105 : vector<2x32xf32>
    %cst_60 = arith.constant 1.000000e+00 : f32
    %107 = vector.broadcast %cst_60 : f32 to vector<2x32xf32>
    %108 = arith.addf %107, %106 : vector<2x32xf32>
    %109 = arith.divf %107, %108 : vector<2x32xf32>
    %110 = arith.addf %98, %102 : vector<2x32xf32>
    %111 = arith.negf %110 : vector<2x32xf32>
    %112 = math.exp %111 : vector<2x32xf32>
    %cst_61 = arith.constant 1.000000e+00 : f32
    %113 = vector.broadcast %cst_61 : f32 to vector<2x32xf32>
    %114 = arith.addf %113, %112 : vector<2x32xf32>
    %115 = arith.divf %113, %114 : vector<2x32xf32>
    %116 = arith.addf %103, %27 : vector<2x32xf32>
    %117 = arith.mulf %109, %116 : vector<2x32xf32>
    %118 = arith.addf %100, %117 : vector<2x32xf32>
    %119 = math.tanh %118 : vector<2x32xf32>
    %cst_62 = arith.constant 1.000000e+00 : f32
    %120 = vector.broadcast %cst_62 : f32 to vector<2x32xf32>
    %121 = arith.subf %120, %115 : vector<2x32xf32>
    %122 = arith.mulf %121, %119 : vector<2x32xf32>
    %123 = arith.mulf %115, %92 : vector<2x32xf32>
    %124 = arith.addf %122, %123 : vector<2x32xf32>
    %c3_63 = arith.constant 3 : index
    %c0_64 = arith.constant 0 : index
    %c0_65 = arith.constant 0 : index
    %125 = vector.load %arg1[%c3_63, %c0_64, %c0_65] : memref<8x2x16xf32, #tpu.memory_space<vmem>>, vector<1x2x16xf32>
    %126 = vector.shape_cast %125 : vector<1x2x16xf32> to vector<2x16xf32>
    %cst_66 = arith.constant dense<0.000000e+00> : vector<2x32xf32>
    %127 = tpu.matmul %126, %1, %cst_66 {dimension_numbers = #tpu.dot_dimension_numbers<[1], [0], [0], [1], [0, 0, 1, 1], [], []>} : vector<2x16xf32>, vector<16x32xf32>, vector<2x32xf32> -> vector<2x32xf32>
    %128 = arith.addf %127, %15 : vector<2x32xf32>
    %cst_67 = arith.constant dense<0.000000e+00> : vector<2x32xf32>
    %129 = tpu.matmul %126, %3, %cst_67 {dimension_numbers = #tpu.dot_dimension_numbers<[1], [0], [0], [1], [0, 0, 1, 1], [], []>} : vector<2x16xf32>, vector<16x32xf32>, vector<2x32xf32> -> vector<2x32xf32>
    %130 = arith.addf %129, %19 : vector<2x32xf32>
    %cst_68 = arith.constant dense<0.000000e+00> : vector<2x32xf32>
    %131 = tpu.matmul %126, %5, %cst_68 {dimension_numbers = #tpu.dot_dimension_numbers<[1], [0], [0], [1], [0, 0, 1, 1], [], []>} : vector<2x16xf32>, vector<16x32xf32>, vector<2x32xf32> -> vector<2x32xf32>
    %132 = arith.addf %131, %23 : vector<2x32xf32>
    %cst_69 = arith.constant dense<0.000000e+00> : vector<2x32xf32>
    %133 = tpu.matmul %124, %7, %cst_69 {dimension_numbers = #tpu.dot_dimension_numbers<[1], [0], [0], [1], [0, 0, 1, 1], [], []>} : vector<2x32xf32>, vector<32x32xf32>, vector<2x32xf32> -> vector<2x32xf32>
    %cst_70 = arith.constant dense<0.000000e+00> : vector<2x32xf32>
    %134 = tpu.matmul %124, %9, %cst_70 {dimension_numbers = #tpu.dot_dimension_numbers<[1], [0], [0], [1], [0, 0, 1, 1], [], []>} : vector<2x32xf32>, vector<32x32xf32>, vector<2x32xf32> -> vector<2x32xf32>
    %cst_71 = arith.constant dense<0.000000e+00> : vector<2x32xf32>
    %135 = tpu.matmul %124, %11, %cst_71 {dimension_numbers = #tpu.dot_dimension_numbers<[1], [0], [0], [1], [0, 0, 1, 1], [], []>} : vector<2x32xf32>, vector<32x32xf32>, vector<2x32xf32> -> vector<2x32xf32>
    %136 = arith.addf %128, %133 : vector<2x32xf32>
    %137 = arith.negf %136 : vector<2x32xf32>
    %138 = math.exp %137 : vector<2x32xf32>
    %cst_72 = arith.constant 1.000000e+00 : f32
    %139 = vector.broadcast %cst_72 : f32 to vector<2x32xf32>
    %140 = arith.addf %139, %138 : vector<2x32xf32>
    %141 = arith.divf %139, %140 : vector<2x32xf32>
    %142 = arith.addf %130, %134 : vector<2x32xf32>
    %143 = arith.negf %142 : vector<2x32xf32>
    %144 = math.exp %143 : vector<2x32xf32>
    %cst_73 = arith.constant 1.000000e+00 : f32
    %145 = vector.broadcast %cst_73 : f32 to vector<2x32xf32>
    %146 = arith.addf %145, %144 : vector<2x32xf32>
    %147 = arith.divf %145, %146 : vector<2x32xf32>
    %148 = arith.addf %135, %27 : vector<2x32xf32>
    %149 = arith.mulf %141, %148 : vector<2x32xf32>
    %150 = arith.addf %132, %149 : vector<2x32xf32>
    %151 = math.tanh %150 : vector<2x32xf32>
    %cst_74 = arith.constant 1.000000e+00 : f32
    %152 = vector.broadcast %cst_74 : f32 to vector<2x32xf32>
    %153 = arith.subf %152, %147 : vector<2x32xf32>
    %154 = arith.mulf %153, %151 : vector<2x32xf32>
    %155 = arith.mulf %147, %124 : vector<2x32xf32>
    %156 = arith.addf %154, %155 : vector<2x32xf32>
    %c4 = arith.constant 4 : index
    %c0_75 = arith.constant 0 : index
    %c0_76 = arith.constant 0 : index
    %157 = vector.load %arg1[%c4, %c0_75, %c0_76] : memref<8x2x16xf32, #tpu.memory_space<vmem>>, vector<1x2x16xf32>
    %158 = vector.shape_cast %157 : vector<1x2x16xf32> to vector<2x16xf32>
    %cst_77 = arith.constant dense<0.000000e+00> : vector<2x32xf32>
    %159 = tpu.matmul %158, %1, %cst_77 {dimension_numbers = #tpu.dot_dimension_numbers<[1], [0], [0], [1], [0, 0, 1, 1], [], []>} : vector<2x16xf32>, vector<16x32xf32>, vector<2x32xf32> -> vector<2x32xf32>
    %160 = arith.addf %159, %15 : vector<2x32xf32>
    %cst_78 = arith.constant dense<0.000000e+00> : vector<2x32xf32>
    %161 = tpu.matmul %158, %3, %cst_78 {dimension_numbers = #tpu.dot_dimension_numbers<[1], [0], [0], [1], [0, 0, 1, 1], [], []>} : vector<2x16xf32>, vector<16x32xf32>, vector<2x32xf32> -> vector<2x32xf32>
    %162 = arith.addf %161, %19 : vector<2x32xf32>
    %cst_79 = arith.constant dense<0.000000e+00> : vector<2x32xf32>
    %163 = tpu.matmul %158, %5, %cst_79 {dimension_numbers = #tpu.dot_dimension_numbers<[1], [0], [0], [1], [0, 0, 1, 1], [], []>} : vector<2x16xf32>, vector<16x32xf32>, vector<2x32xf32> -> vector<2x32xf32>
    %164 = arith.addf %163, %23 : vector<2x32xf32>
    %cst_80 = arith.constant dense<0.000000e+00> : vector<2x32xf32>
    %165 = tpu.matmul %156, %7, %cst_80 {dimension_numbers = #tpu.dot_dimension_numbers<[1], [0], [0], [1], [0, 0, 1, 1], [], []>} : vector<2x32xf32>, vector<32x32xf32>, vector<2x32xf32> -> vector<2x32xf32>
    %cst_81 = arith.constant dense<0.000000e+00> : vector<2x32xf32>
    %166 = tpu.matmul %156, %9, %cst_81 {dimension_numbers = #tpu.dot_dimension_numbers<[1], [0], [0], [1], [0, 0, 1, 1], [], []>} : vector<2x32xf32>, vector<32x32xf32>, vector<2x32xf32> -> vector<2x32xf32>
    %cst_82 = arith.constant dense<0.000000e+00> : vector<2x32xf32>
    %167 = tpu.matmul %156, %11, %cst_82 {dimension_numbers = #tpu.dot_dimension_numbers<[1], [0], [0], [1], [0, 0, 1, 1], [], []>} : vector<2x32xf32>, vector<32x32xf32>, vector<2x32xf32> -> vector<2x32xf32>
    %168 = arith.addf %160, %165 : vector<2x32xf32>
    %169 = arith.negf %168 : vector<2x32xf32>
    %170 = math.exp %169 : vector<2x32xf32>
    %cst_83 = arith.constant 1.000000e+00 : f32
    %171 = vector.broadcast %cst_83 : f32 to vector<2x32xf32>
    %172 = arith.addf %171, %170 : vector<2x32xf32>
    %173 = arith.divf %171, %172 : vector<2x32xf32>
    %174 = arith.addf %162, %166 : vector<2x32xf32>
    %175 = arith.negf %174 : vector<2x32xf32>
    %176 = math.exp %175 : vector<2x32xf32>
    %cst_84 = arith.constant 1.000000e+00 : f32
    %177 = vector.broadcast %cst_84 : f32 to vector<2x32xf32>
    %178 = arith.addf %177, %176 : vector<2x32xf32>
    %179 = arith.divf %177, %178 : vector<2x32xf32>
    %180 = arith.addf %167, %27 : vector<2x32xf32>
    %181 = arith.mulf %173, %180 : vector<2x32xf32>
    %182 = arith.addf %164, %181 : vector<2x32xf32>
    %183 = math.tanh %182 : vector<2x32xf32>
    %cst_85 = arith.constant 1.000000e+00 : f32
    %184 = vector.broadcast %cst_85 : f32 to vector<2x32xf32>
    %185 = arith.subf %184, %179 : vector<2x32xf32>
    %186 = arith.mulf %185, %183 : vector<2x32xf32>
    %187 = arith.mulf %179, %156 : vector<2x32xf32>
    %188 = arith.addf %186, %187 : vector<2x32xf32>
    %c5 = arith.constant 5 : index
    %c0_86 = arith.constant 0 : index
    %c0_87 = arith.constant 0 : index
    %189 = vector.load %arg1[%c5, %c0_86, %c0_87] : memref<8x2x16xf32, #tpu.memory_space<vmem>>, vector<1x2x16xf32>
    %190 = vector.shape_cast %189 : vector<1x2x16xf32> to vector<2x16xf32>
    %cst_88 = arith.constant dense<0.000000e+00> : vector<2x32xf32>
    %191 = tpu.matmul %190, %1, %cst_88 {dimension_numbers = #tpu.dot_dimension_numbers<[1], [0], [0], [1], [0, 0, 1, 1], [], []>} : vector<2x16xf32>, vector<16x32xf32>, vector<2x32xf32> -> vector<2x32xf32>
    %192 = arith.addf %191, %15 : vector<2x32xf32>
    %cst_89 = arith.constant dense<0.000000e+00> : vector<2x32xf32>
    %193 = tpu.matmul %190, %3, %cst_89 {dimension_numbers = #tpu.dot_dimension_numbers<[1], [0], [0], [1], [0, 0, 1, 1], [], []>} : vector<2x16xf32>, vector<16x32xf32>, vector<2x32xf32> -> vector<2x32xf32>
    %194 = arith.addf %193, %19 : vector<2x32xf32>
    %cst_90 = arith.constant dense<0.000000e+00> : vector<2x32xf32>
    %195 = tpu.matmul %190, %5, %cst_90 {dimension_numbers = #tpu.dot_dimension_numbers<[1], [0], [0], [1], [0, 0, 1, 1], [], []>} : vector<2x16xf32>, vector<16x32xf32>, vector<2x32xf32> -> vector<2x32xf32>
    %196 = arith.addf %195, %23 : vector<2x32xf32>
    %cst_91 = arith.constant dense<0.000000e+00> : vector<2x32xf32>
    %197 = tpu.matmul %188, %7, %cst_91 {dimension_numbers = #tpu.dot_dimension_numbers<[1], [0], [0], [1], [0, 0, 1, 1], [], []>} : vector<2x32xf32>, vector<32x32xf32>, vector<2x32xf32> -> vector<2x32xf32>
    %cst_92 = arith.constant dense<0.000000e+00> : vector<2x32xf32>
    %198 = tpu.matmul %188, %9, %cst_92 {dimension_numbers = #tpu.dot_dimension_numbers<[1], [0], [0], [1], [0, 0, 1, 1], [], []>} : vector<2x32xf32>, vector<32x32xf32>, vector<2x32xf32> -> vector<2x32xf32>
    %cst_93 = arith.constant dense<0.000000e+00> : vector<2x32xf32>
    %199 = tpu.matmul %188, %11, %cst_93 {dimension_numbers = #tpu.dot_dimension_numbers<[1], [0], [0], [1], [0, 0, 1, 1], [], []>} : vector<2x32xf32>, vector<32x32xf32>, vector<2x32xf32> -> vector<2x32xf32>
    %200 = arith.addf %192, %197 : vector<2x32xf32>
    %201 = arith.negf %200 : vector<2x32xf32>
    %202 = math.exp %201 : vector<2x32xf32>
    %cst_94 = arith.constant 1.000000e+00 : f32
    %203 = vector.broadcast %cst_94 : f32 to vector<2x32xf32>
    %204 = arith.addf %203, %202 : vector<2x32xf32>
    %205 = arith.divf %203, %204 : vector<2x32xf32>
    %206 = arith.addf %194, %198 : vector<2x32xf32>
    %207 = arith.negf %206 : vector<2x32xf32>
    %208 = math.exp %207 : vector<2x32xf32>
    %cst_95 = arith.constant 1.000000e+00 : f32
    %209 = vector.broadcast %cst_95 : f32 to vector<2x32xf32>
    %210 = arith.addf %209, %208 : vector<2x32xf32>
    %211 = arith.divf %209, %210 : vector<2x32xf32>
    %212 = arith.addf %199, %27 : vector<2x32xf32>
    %213 = arith.mulf %205, %212 : vector<2x32xf32>
    %214 = arith.addf %196, %213 : vector<2x32xf32>
    %215 = math.tanh %214 : vector<2x32xf32>
    %cst_96 = arith.constant 1.000000e+00 : f32
    %216 = vector.broadcast %cst_96 : f32 to vector<2x32xf32>
    %217 = arith.subf %216, %211 : vector<2x32xf32>
    %218 = arith.mulf %217, %215 : vector<2x32xf32>
    %219 = arith.mulf %211, %188 : vector<2x32xf32>
    %220 = arith.addf %218, %219 : vector<2x32xf32>
    %c6 = arith.constant 6 : index
    %c0_97 = arith.constant 0 : index
    %c0_98 = arith.constant 0 : index
    %221 = vector.load %arg1[%c6, %c0_97, %c0_98] : memref<8x2x16xf32, #tpu.memory_space<vmem>>, vector<1x2x16xf32>
    %222 = vector.shape_cast %221 : vector<1x2x16xf32> to vector<2x16xf32>
    %cst_99 = arith.constant dense<0.000000e+00> : vector<2x32xf32>
    %223 = tpu.matmul %222, %1, %cst_99 {dimension_numbers = #tpu.dot_dimension_numbers<[1], [0], [0], [1], [0, 0, 1, 1], [], []>} : vector<2x16xf32>, vector<16x32xf32>, vector<2x32xf32> -> vector<2x32xf32>
    %224 = arith.addf %223, %15 : vector<2x32xf32>
    %cst_100 = arith.constant dense<0.000000e+00> : vector<2x32xf32>
    %225 = tpu.matmul %222, %3, %cst_100 {dimension_numbers = #tpu.dot_dimension_numbers<[1], [0], [0], [1], [0, 0, 1, 1], [], []>} : vector<2x16xf32>, vector<16x32xf32>, vector<2x32xf32> -> vector<2x32xf32>
    %226 = arith.addf %225, %19 : vector<2x32xf32>
    %cst_101 = arith.constant dense<0.000000e+00> : vector<2x32xf32>
    %227 = tpu.matmul %222, %5, %cst_101 {dimension_numbers = #tpu.dot_dimension_numbers<[1], [0], [0], [1], [0, 0, 1, 1], [], []>} : vector<2x16xf32>, vector<16x32xf32>, vector<2x32xf32> -> vector<2x32xf32>
    %228 = arith.addf %227, %23 : vector<2x32xf32>
    %cst_102 = arith.constant dense<0.000000e+00> : vector<2x32xf32>
    %229 = tpu.matmul %220, %7, %cst_102 {dimension_numbers = #tpu.dot_dimension_numbers<[1], [0], [0], [1], [0, 0, 1, 1], [], []>} : vector<2x32xf32>, vector<32x32xf32>, vector<2x32xf32> -> vector<2x32xf32>
    %cst_103 = arith.constant dense<0.000000e+00> : vector<2x32xf32>
    %230 = tpu.matmul %220, %9, %cst_103 {dimension_numbers = #tpu.dot_dimension_numbers<[1], [0], [0], [1], [0, 0, 1, 1], [], []>} : vector<2x32xf32>, vector<32x32xf32>, vector<2x32xf32> -> vector<2x32xf32>
    %cst_104 = arith.constant dense<0.000000e+00> : vector<2x32xf32>
    %231 = tpu.matmul %220, %11, %cst_104 {dimension_numbers = #tpu.dot_dimension_numbers<[1], [0], [0], [1], [0, 0, 1, 1], [], []>} : vector<2x32xf32>, vector<32x32xf32>, vector<2x32xf32> -> vector<2x32xf32>
    %232 = arith.addf %224, %229 : vector<2x32xf32>
    %233 = arith.negf %232 : vector<2x32xf32>
    %234 = math.exp %233 : vector<2x32xf32>
    %cst_105 = arith.constant 1.000000e+00 : f32
    %235 = vector.broadcast %cst_105 : f32 to vector<2x32xf32>
    %236 = arith.addf %235, %234 : vector<2x32xf32>
    %237 = arith.divf %235, %236 : vector<2x32xf32>
    %238 = arith.addf %226, %230 : vector<2x32xf32>
    %239 = arith.negf %238 : vector<2x32xf32>
    %240 = math.exp %239 : vector<2x32xf32>
    %cst_106 = arith.constant 1.000000e+00 : f32
    %241 = vector.broadcast %cst_106 : f32 to vector<2x32xf32>
    %242 = arith.addf %241, %240 : vector<2x32xf32>
    %243 = arith.divf %241, %242 : vector<2x32xf32>
    %244 = arith.addf %231, %27 : vector<2x32xf32>
    %245 = arith.mulf %237, %244 : vector<2x32xf32>
    %246 = arith.addf %228, %245 : vector<2x32xf32>
    %247 = math.tanh %246 : vector<2x32xf32>
    %cst_107 = arith.constant 1.000000e+00 : f32
    %248 = vector.broadcast %cst_107 : f32 to vector<2x32xf32>
    %249 = arith.subf %248, %243 : vector<2x32xf32>
    %250 = arith.mulf %249, %247 : vector<2x32xf32>
    %251 = arith.mulf %243, %220 : vector<2x32xf32>
    %252 = arith.addf %250, %251 : vector<2x32xf32>
    %c7 = arith.constant 7 : index
    %c0_108 = arith.constant 0 : index
    %c0_109 = arith.constant 0 : index
    %253 = vector.load %arg1[%c7, %c0_108, %c0_109] : memref<8x2x16xf32, #tpu.memory_space<vmem>>, vector<1x2x16xf32>
    %254 = vector.shape_cast %253 : vector<1x2x16xf32> to vector<2x16xf32>
    %cst_110 = arith.constant dense<0.000000e+00> : vector<2x32xf32>
    %255 = tpu.matmul %254, %1, %cst_110 {dimension_numbers = #tpu.dot_dimension_numbers<[1], [0], [0], [1], [0, 0, 1, 1], [], []>} : vector<2x16xf32>, vector<16x32xf32>, vector<2x32xf32> -> vector<2x32xf32>
    %256 = arith.addf %255, %15 : vector<2x32xf32>
    %cst_111 = arith.constant dense<0.000000e+00> : vector<2x32xf32>
    %257 = tpu.matmul %254, %3, %cst_111 {dimension_numbers = #tpu.dot_dimension_numbers<[1], [0], [0], [1], [0, 0, 1, 1], [], []>} : vector<2x16xf32>, vector<16x32xf32>, vector<2x32xf32> -> vector<2x32xf32>
    %258 = arith.addf %257, %19 : vector<2x32xf32>
    %cst_112 = arith.constant dense<0.000000e+00> : vector<2x32xf32>
    %259 = tpu.matmul %254, %5, %cst_112 {dimension_numbers = #tpu.dot_dimension_numbers<[1], [0], [0], [1], [0, 0, 1, 1], [], []>} : vector<2x16xf32>, vector<16x32xf32>, vector<2x32xf32> -> vector<2x32xf32>
    %260 = arith.addf %259, %23 : vector<2x32xf32>
    %cst_113 = arith.constant dense<0.000000e+00> : vector<2x32xf32>
    %261 = tpu.matmul %252, %7, %cst_113 {dimension_numbers = #tpu.dot_dimension_numbers<[1], [0], [0], [1], [0, 0, 1, 1], [], []>} : vector<2x32xf32>, vector<32x32xf32>, vector<2x32xf32> -> vector<2x32xf32>
    %cst_114 = arith.constant dense<0.000000e+00> : vector<2x32xf32>
    %262 = tpu.matmul %252, %9, %cst_114 {dimension_numbers = #tpu.dot_dimension_numbers<[1], [0], [0], [1], [0, 0, 1, 1], [], []>} : vector<2x32xf32>, vector<32x32xf32>, vector<2x32xf32> -> vector<2x32xf32>
    %cst_115 = arith.constant dense<0.000000e+00> : vector<2x32xf32>
    %263 = tpu.matmul %252, %11, %cst_115 {dimension_numbers = #tpu.dot_dimension_numbers<[1], [0], [0], [1], [0, 0, 1, 1], [], []>} : vector<2x32xf32>, vector<32x32xf32>, vector<2x32xf32> -> vector<2x32xf32>
    %264 = arith.addf %256, %261 : vector<2x32xf32>
    %265 = arith.negf %264 : vector<2x32xf32>
    %266 = math.exp %265 : vector<2x32xf32>
    %cst_116 = arith.constant 1.000000e+00 : f32
    %267 = vector.broadcast %cst_116 : f32 to vector<2x32xf32>
    %268 = arith.addf %267, %266 : vector<2x32xf32>
    %269 = arith.divf %267, %268 : vector<2x32xf32>
    %270 = arith.addf %258, %262 : vector<2x32xf32>
    %271 = arith.negf %270 : vector<2x32xf32>
    %272 = math.exp %271 : vector<2x32xf32>
    %cst_117 = arith.constant 1.000000e+00 : f32
    %273 = vector.broadcast %cst_117 : f32 to vector<2x32xf32>
    %274 = arith.addf %273, %272 : vector<2x32xf32>
    %275 = arith.divf %273, %274 : vector<2x32xf32>
    %276 = arith.addf %263, %27 : vector<2x32xf32>
    %277 = arith.mulf %269, %276 : vector<2x32xf32>
    %278 = arith.addf %260, %277 : vector<2x32xf32>
    %279 = math.tanh %278 : vector<2x32xf32>
    %cst_118 = arith.constant 1.000000e+00 : f32
    %280 = vector.broadcast %cst_118 : f32 to vector<2x32xf32>
    %281 = arith.subf %280, %275 : vector<2x32xf32>
    %282 = arith.mulf %281, %279 : vector<2x32xf32>
    %283 = arith.mulf %275, %252 : vector<2x32xf32>
    %284 = arith.addf %282, %283 : vector<2x32xf32>
    %c0_119 = arith.constant 0 : index
    %c0_120 = arith.constant 0 : index
    %285 = vector.load %arg7[%c0_119, %c0_120] : memref<2x32xf32, #tpu.memory_space<vmem>>, vector<2x32xf32>
    tpu.vector_store %arg7[%c0_119, %c0_120], %284 {strides = array<i32>} : memref<2x32xf32, #tpu.memory_space<vmem>>, vector<2x32xf32>,
    %286 = vector.shape_cast %60 : vector<2x32xf32> to vector<1x2x32xf32>
    %287 = vector.shape_cast %92 : vector<2x32xf32> to vector<1x2x32xf32>
    %288 = vector.shape_cast %124 : vector<2x32xf32> to vector<1x2x32xf32>
    %289 = vector.shape_cast %156 : vector<2x32xf32> to vector<1x2x32xf32>
    %290 = vector.shape_cast %188 : vector<2x32xf32> to vector<1x2x32xf32>
    %291 = vector.shape_cast %220 : vector<2x32xf32> to vector<1x2x32xf32>
    %292 = vector.shape_cast %252 : vector<2x32xf32> to vector<1x2x32xf32>
    %293 = vector.shape_cast %284 : vector<2x32xf32> to vector<1x2x32xf32>
    %294 = tpu.concatenate %286, %287, %288, %289, %290, %291, %292, %293 in 0 : vector<1x2x32xf32>, vector<1x2x32xf32>, vector<1x2x32xf32>, vector<1x2x32xf32>, vector<1x2x32xf32>, vector<1x2x32xf32>, vector<1x2x32xf32>, vector<1x2x32xf32> -> vector<8x2x32xf32>
    %cst_121 = arith.constant dense<0xFF800000> : vector<8x32xf32>
    %295 = vector.multi_reduction <maximumf>, %294, %cst_121 [1] : vector<8x2x32xf32> to vector<8x32xf32>
    %296 = vector.shape_cast %295 : vector<8x32xf32> to vector<8x1x32xf32>
    %297 = vector.broadcast %296 : vector<8x1x32xf32> to vector<8x2x32xf32>
    %298 = arith.subf %294, %297 : vector<8x2x32xf32>
    %299 = math.exp %298 : vector<8x2x32xf32>
    %cst_122 = arith.constant dense<0.000000e+00> : vector<8x32xf32>
    %300 = vector.multi_reduction <add>, %299, %cst_122 [1] : vector<8x2x32xf32> to vector<8x32xf32>
    %301 = vector.shape_cast %300 : vector<8x32xf32> to vector<8x1x32xf32>
    %302 = math.log %301 : vector<8x1x32xf32>
    %303 = arith.addf %302, %296 : vector<8x1x32xf32>
    %304 = vector.broadcast %303 : vector<8x1x32xf32> to vector<8x2x32xf32>
    %305 = arith.subf %294, %304 : vector<8x2x32xf32>
    %c0_123 = arith.constant 0 : index
    %c0_124 = arith.constant 0 : index
    %c0_125 = arith.constant 0 : index
    %306 = vector.load %arg6[%c0_123, %c0_124, %c0_125] : memref<8x2x32xf32, #tpu.memory_space<vmem>>, vector<8x2x32xf32>
    tpu.vector_store %arg6[%c0_123, %c0_124, %c0_125], %305 {strides = array<i32>} : memref<8x2x32xf32, #tpu.memory_space<vmem>>, vector<8x2x32xf32>,
    return
  }
  func.func @transform_0(%arg0: i32) -> (i32, i32, i32) {
    %c0_i32 = arith.constant 0 : i32
    %c0_i32_0 = arith.constant 0 : i32
    %c0_i32_1 = arith.constant 0 : i32
    %c0_i32_2 = arith.constant 0 : i32
    return %c0_i32, %c0_i32_0, %c0_i32_1 : i32, i32, i32
  }
  func.func @transform_1(%arg0: i32) -> (i32, i32, i32) {
    %c0_i32 = arith.constant 0 : i32
    %c0_i32_0 = arith.constant 0 : i32
    %c0_i32_1 = arith.constant 0 : i32
    %c0_i32_2 = arith.constant 0 : i32
    return %c0_i32, %c0_i32_0, %c0_i32_1 : i32, i32, i32
  }
  func.func @transform_2(%arg0: i32) -> (i32, i32, i32) {
    %c0_i32 = arith.constant 0 : i32
    %c0_i32_0 = arith.constant 0 : i32
    %c0_i32_1 = arith.constant 0 : i32
    %c0_i32_2 = arith.constant 0 : i32
    return %c0_i32, %c0_i32_0, %c0_i32_1 : i32, i32, i32
  }
  func.func @transform_3(%arg0: i32) -> (i32, i32, i32) {
    %c0_i32 = arith.constant 0 : i32
    %c0_i32_0 = arith.constant 0 : i32
    %c0_i32_1 = arith.constant 0 : i32
    %c0_i32_2 = arith.constant 0 : i32
    return %c0_i32, %c0_i32_0, %c0_i32_1 : i32, i32, i32
  }
  func.func @transform_4(%arg0: i32) -> (i32, i32) {
    %c0_i32 = arith.constant 0 : i32
    %c0_i32_0 = arith.constant 0 : i32
    %c0_i32_1 = arith.constant 0 : i32
    return %c0_i32, %c0_i32_0 : i32, i32
  }
  func.func @transform_5(%arg0: i32) -> (i32, i32, i32) {
    %c0_i32 = arith.constant 0 : i32
    %c0_i32_0 = arith.constant 0 : i32
    %c0_i32_1 = arith.constant 0 : i32
    %c0_i32_2 = arith.constant 0 : i32
    return %c0_i32, %c0_i32_0, %c0_i32_1 : i32, i32, i32
  }
  func.func @transform_6(%arg0: i32) -> (i32, i32) {
    %c0_i32 = arith.constant 0 : i32
    %c0_i32_0 = arith.constant 0 : i32
    %c0_i32_1 = arith.constant 0 : i32
    return %c0_i32, %c0_i32_0 : i32, i32
  }
}

</mosaic_0001>

<llo_original>
// kernel: tpu_custom_call.1
$region0: #{tpu_custom_call.1}
  #allocation0 [shape = 'u32[]', space=smem, size = 0x4, offset = 0x4, fixed_abs, tag = 'smem constant byte address 0x4 - core index']
  #allocation1 [shape = 'u32[144,128]{1,0:T(1,128)}', space=vmem, size = 0x12000, scoped, tag = 'internal scratch']
  %s0 = inlined_call_operand.hbm [shape: f32[8,2,16], index: 0, kind: input, shape index: {}]
  %s1 = inlined_call_operand.hbm [shape: f32[3,16,32], index: 1, kind: input, shape index: {}]
  %s2 = inlined_call_operand.hbm [shape: f32[3,32,32], index: 2, kind: input, shape index: {}]
  %s3 = inlined_call_operand.vmem [shape: f32[4,1,32], index: 3, kind: input, shape index: {}]
  %s4 = inlined_call_operand.vmem [shape: f32[2,32], index: 4, kind: input, shape index: {}]
  %s5 = inlined_call_operand.hbm [shape: f32[8,2,32], index: 5, kind: output, shape index: {0}]
  %s6 = inlined_call_operand.hbm [shape: f32[2,32], index: 6, kind: output, shape index: {1}]
  %7 = xla_tuple %s5, %s6
  %s8 = sld [smem:[#allocation0]]
  $region50: #{tpu_custom_call.1} parent=0
    _
  %s10 = ssub.s32 1, %s8
  %s11 = scalar_select 0, %s10, %s8
  $region1: #{tpu_custom_call.1} parent=0
    #allocation2 [shape = 'u8[8192]{0}', space=vmem, size = 0x2000, scoped, tag = 'input window, operand 0, single buffered']
    #allocation3 [shape = 's32[1]{0}', space=sflag, size = 0x4, scoped, tag = 'scoped memory for tpu_custom_call.1']
    #allocation4 [shape = 's32[1]{0}', space=sflag, size = 0x4, scoped, tag = 'scoped memory for tpu_custom_call.1']
    #allocation5 [shape = 'u8[24576]{0}', space=vmem, size = 0x6000, scoped, tag = 'input window, operand 1, single buffered']
    #allocation6 [shape = 's32[1]{0}', space=sflag, size = 0x4, scoped, tag = 'scoped memory for tpu_custom_call.1']
    #allocation7 [shape = 'u8[49152]{0}', space=vmem, size = 0xc000, scoped, tag = 'input window, operand 2, single buffered']
    #allocation8 [shape = 'u8[8192]{0}', space=vmem, size = 0x2000, scoped, tag = 'output window, operand 0, single buffered']
    #allocation9 [shape = 'u8[1024]{0}', space=vmem, size = 0x400, scoped, tag = 'output window, operand 1, single buffered']
    #allocation10 [shape = 's32[1]{0}', space=sflag, size = 0x4, scoped, tag = 'scoped memory for tpu_custom_call.1']
    %12 = vsyncpa [#allocation3], 0
    %13 = vsyncpa [#allocation6], 0
    %14 = vsyncpa [#allocation4], 0
    %15 = vsyncpa [#allocation10], 0
    // Predicated region
    $region2: #{tpu_custom_call.1} parent=1 // pred_check
      _
    $region3: #{tpu_custom_call.1} parent=1 // pred_check_branch
      %17 = sbr.rel (0) target = $region5
    $region4: #{tpu_custom_call.1} parent=1 // pred_region
      %s19 = ssub.s32 256, 256
      %20 = vsyncadd [#allocation3], %s19
      %s21 = sshll.u32 [#allocation2], 4
      %s22 = int_to_ptr.vmem [resolvable:$true] %s21
      %27 = dma.hbm_to_vmem [thread:$0]  %s0, 256, %s22, [#allocation3], 32, 32, 2
    $region5: #{tpu_custom_call.1} parent=1 // pred_fallthru
      _
    // Predicated region
    $region6: #{tpu_custom_call.1} parent=1 // pred_check
      _
    $region7: #{tpu_custom_call.1} parent=1 // pred_check_branch
      %29 = sbr.rel (0) target = $region9
    $region8: #{tpu_custom_call.1} parent=1 // pred_region
      %s31 = ssub.s32 768, 768
      %32 = vsyncadd [#allocation6], %s31
      %s33 = sshll.u32 [#allocation5], 4
      %s34 = int_to_ptr.vmem [resolvable:$true] %s33
      %39 = dma.hbm_to_vmem [thread:$0]  %s1, 768, %s34, [#allocation6], 128, 128, 8
    $region9: #{tpu_custom_call.1} parent=1 // pred_fallthru
      _
    // Predicated region
    $region10: #{tpu_custom_call.1} parent=1 // pred_check
      _
    $region11: #{tpu_custom_call.1} parent=1 // pred_check_branch
      %41 = sbr.rel (0) target = $region13
    $region12: #{tpu_custom_call.1} parent=1 // pred_region
      %s43 = ssub.s32 1536, 1536
      %44 = vsyncadd [#allocation6], %s43
      %s45 = sshll.u32 [#allocation7], 4
      %s46 = int_to_ptr.vmem [resolvable:$true] %s45
      %51 = dma.hbm_to_vmem [thread:$0]  %s2, 1536, %s46, [#allocation6], 128, 128, 8
    $region13: #{tpu_custom_call.1} parent=1 // pred_fallthru
      _
    // Predicated region
    $region14: #{tpu_custom_call.1} parent=1 // pred_check
      _
    $region15: #{tpu_custom_call.1} parent=1 // pred_check_branch
      %53 = sbr.rel (0) target = $region17
    $region16: #{tpu_custom_call.1} parent=1 // pred_region
      _
    $region17: #{tpu_custom_call.1} parent=1 // pred_fallthru
      _
    // Predicated region
    $region18: #{tpu_custom_call.1} parent=1 // pred_check
      _
    $region19: #{tpu_custom_call.1} parent=1 // pred_check_branch
      %55 = sbr.rel (0) target = $region21
    $region20: #{tpu_custom_call.1} parent=1 // pred_region
      _
    $region21: #{tpu_custom_call.1} parent=1 // pred_fallthru
      _
    // Predicated region
    $region22: #{tpu_custom_call.1} parent=1 // pred_check
      _
    $region23: #{tpu_custom_call.1} parent=1 // pred_check_branch
      %57 = sbr.rel (0) target = $region25
    $region24: #{tpu_custom_call.1} parent=1 // pred_region
      %58 = dma.done [#allocation3], 256
    $region25: #{tpu_custom_call.1} parent=1 // pred_fallthru
      _
    // Predicated region
    $region26: #{tpu_custom_call.1} parent=1 // pred_check
      _
    $region27: #{tpu_custom_call.1} parent=1 // pred_check_branch
      %60 = sbr.rel (0) target = $region29
    $region28: #{tpu_custom_call.1} parent=1 // pred_region
      %61 = dma.done [#allocation6], 768
    $region29: #{tpu_custom_call.1} parent=1 // pred_fallthru
      _
    // Predicated region
    $region30: #{tpu_custom_call.1} parent=1 // pred_check
      _
    $region31: #{tpu_custom_call.1} parent=1 // pred_check_branch
      %63 = sbr.rel (0) target = $region33
    $region32: #{tpu_custom_call.1} parent=1 // pred_region
      %64 = dma.done [#allocation6], 1536
    $region33: #{tpu_custom_call.1} parent=1 // pred_fallthru
      _
    %v65 = vld [vmem:[#allocation5] sm:$0xff]
    %v66 = vld [vmem:[#allocation5 + $0x8] sm:$0xff]
    %s67 = scalar_lea.vmem [#allocation5], 16
    %v68 = vld [vmem:[%s67] sm:$0xff]
    %v69 = vld [vmem:[%s67 + $0x8] sm:$0xff]
    %s70 = scalar_lea.vmem [#allocation5], 32
    %v71 = vld [vmem:[%s70] sm:$0xff]
    %v72 = vld [vmem:[%s70 + $0x8] sm:$0xff]
    %v73 = vld [vmem:[#allocation7] sm:$0xff]
    %v74 = vld [vmem:[#allocation7 + $0x8] sm:$0xff]
    %v75 = vld [vmem:[#allocation7 + $0x10] sm:$0xff]
    %v76 = vld [vmem:[#allocation7 + $0x18] sm:$0xff]
    %s77 = scalar_lea.vmem [#allocation7], 32
    %v78 = vld [vmem:[%s77] sm:$0xff]
    %v79 = vld [vmem:[%s77 + $0x8] sm:$0xff]
    %v80 = vld [vmem:[%s77 + $0x10] sm:$0xff]
    %v81 = vld [vmem:[%s77 + $0x18] sm:$0xff]
    %s82 = scalar_lea.vmem [#allocation7], 64
    %v83 = vld [vmem:[%s82] sm:$0xff]
    %v84 = vld [vmem:[%s82 + $0x8] sm:$0xff]
    %v85 = vld [vmem:[%s82 + $0x10] sm:$0xff]
    %v86 = vld [vmem:[%s82 + $0x18] sm:$0xff]
    %v87 = vld [vmem:[%s3] sm:$0x1]
    %v89 = vlaneseq
    %v90 = vshrl.u32 %v89, 7
    %v91 = vsub.s32 0, %v90
    %v92 = vrot.slane %v87, %v91
    %s94 = scalar_lea.vmem %s3, 1
    %v95 = vld [vmem:[%s94] sm:$0x1]
    %v97 = vlaneseq
    %v98 = vshrl.u32 %v97, 7
    %v99 = vsub.s32 0, %v98
    %v100 = vrot.slane %v95, %v99
    %s102 = scalar_lea.vmem %s3, 2
    %v103 = vld [vmem:[%s102] sm:$0x1]
    %v105 = vlaneseq
    %v106 = vshrl.u32 %v105, 7
    %v107 = vsub.s32 0, %v106
    %v108 = vrot.slane %v103, %v107
    %s110 = scalar_lea.vmem %s3, 3
    %v111 = vld [vmem:[%s110] sm:$0x1]
    %v113 = vlaneseq
    %v114 = vshrl.u32 %v113, 7
    %v115 = vsub.s32 0, %v114
    %v116 = vrot.slane %v111, %v115
    %v118 = vld [vmem:[%s4] sm:$0x3]
    %v119 = vld [vmem:[#allocation2] sm:$0x3]
    %vm120 = vcmask 130048
    %v122 = vsel %vm120, %v119, 0
    %124 = vmatprep.subr.mxu0 0.0
    %125 = vmatpush1.msra.mxu0 %v65
    %126 = vmatprep.subr.mxu0 0.0
    %127 = vmatpush1.msra.mxu0 %v66
    %128 = vmatprep.subr.mxu0 0.0
    %129 = vmatpush1.msra.mxu0 0.0
    %130 = vmatprep.subr.mxu0 0.0
    %131 = vmatpush1.msra.mxu0 0.0
    %132 = vmatprep.subr.mxu0 0.0
    %133 = vmatpush1.msra.mxu0 0.0
    %134 = vmatprep.subr.mxu0 0.0
    %135 = vmatpush1.msra.mxu0 0.0
    %136 = vmatprep.subr.mxu0 0.0
    %137 = vmatpush1.msra.mxu0 0.0
    %138 = vmatprep.subr.mxu0 0.0
    %139 = vmatpush1.msra.mxu0 0.0
    %140 = vmatprep.subr.mxu0 0.0
    %141 = vmatpush1.msra.mxu0 0.0
    %142 = vmatprep.subr.mxu0 0.0
    %143 = vmatpush1.msra.mxu0 0.0
    %144 = vmatprep.subr.mxu0 0.0
    %145 = vmatpush1.msra.mxu0 0.0
    %146 = vmatprep.subr.mxu0 0.0
    %147 = vmatpush1.msra.mxu0 0.0
    %148 = vmatprep.subr.mxu0 0.0
    %149 = vmatpush1.msra.mxu0 0.0
    %150 = vmatprep.subr.mxu0 0.0
    %151 = vmatpush1.msra.mxu0 0.0
    %152 = vmatprep.subr.mxu0 0.0
    %153 = vmatpush1.msra.mxu0 0.0
    %154 = vmatprep.subr.mxu0 0.0
    %155 = vmatpush1.msra.mxu0 0.0
    %156 = vmatprep.subr.mxu0 0.0
    %157 = vmatpush1.msra.mxu0 0.0
    %158 = vmatprep.subr.mxu0 0.0
    %159 = vmatpush1.msra.mxu0 0.0
    %160 = vmatprep.subr.mxu0 0.0
    %161 = vmatpush1.msra.mxu0 0.0
    %162 = vmatprep.subr.mxu0 0.0
    %163 = vmatpush1.msra.mxu0 0.0
    %164 = vmatprep.subr.mxu0 0.0
    %165 = vmatpush1.msra.mxu0 0.0
    %166 = vmatprep.subr.mxu0 0.0
    %167 = vmatpush1.msra.mxu0 0.0
    %168 = vmatprep.subr.mxu0 0.0
    %169 = vmatpush1.msra.mxu0 0.0
    %170 = vmatprep.subr.mxu0 0.0
    %171 = vmatpush1.msra.mxu0 0.0
    %172 = vmatprep.subr.mxu0 0.0
    %173 = vmatpush1.msra.mxu0 0.0
    %174 = vmatprep.subr.mxu0 0.0
    %175 = vmatpush1.msra.mxu0 0.0
    %176 = vmatprep.subr.mxu0 0.0
    %177 = vmatpush1.msra.mxu0 0.0
    %178 = vmatprep.subr.mxu0 0.0
    %179 = vmatpush1.msra.mxu0 0.0
    %180 = vmatprep.subr.mxu0 0.0
    %181 = vmatpush1.msra.mxu0 0.0
    %182 = vmatprep.subr.mxu0 0.0
    %183 = vmatpush1.msra.mxu0 0.0
    %184 = vmatprep.subr.mxu0 0.0
    %185 = vmatpush1.msra.mxu0 0.0
    %186 = vmatprep.subr.mxu0 0.0
    %187 = vmatpush1.msra.mxu0 0.0
    %188 = vmatprep.mubr.f32.mxu0 0.0
    %189 = vmatmul.mubr.f32.gmra.mrb[0].mxu0 %v122
    %v190 = vpop.f32.mrb[0].mxu0
    %v191 = vadd.f32 %v92, %v190
    %v192 = vpop.f32.mrb[0].mxu0
    %193 = vdwg.mxu0
    %194 = vmatprep.subr.mxu0 0.0
    %195 = vmatpush1.msra.mxu0 %v68
    %196 = vmatprep.subr.mxu0 0.0
    %197 = vmatpush1.msra.mxu0 %v69
    %198 = vmatprep.subr.mxu0 0.0
    %199 = vmatpush1.msra.mxu0 0.0
    %200 = vmatprep.subr.mxu0 0.0
    %201 = vmatpush1.msra.mxu0 0.0
    %202 = vmatprep.subr.mxu0 0.0
    %203 = vmatpush1.msra.mxu0 0.0
    %204 = vmatprep.subr.mxu0 0.0
    %205 = vmatpush1.msra.mxu0 0.0
    %206 = vmatprep.subr.mxu0 0.0
    %207 = vmatpush1.msra.mxu0 0.0
    %208 = vmatprep.subr.mxu0 0.0
    %209 = vmatpush1.msra.mxu0 0.0
    %210 = vmatprep.subr.mxu0 0.0
    %211 = vmatpush1.msra.mxu0 0.0
    %212 = vmatprep.subr.mxu0 0.0
    %213 = vmatpush1.msra.mxu0 0.0
    %214 = vmatprep.subr.mxu0 0.0
    %215 = vmatpush1.msra.mxu0 0.0
    %216 = vmatprep.subr.mxu0 0.0
    %217 = vmatpush1.msra.mxu0 0.0
    %218 = vmatprep.subr.mxu0 0.0
    %219 = vmatpush1.msra.mxu0 0.0
    %220 = vmatprep.subr.mxu0 0.0
    %221 = vmatpush1.msra.mxu0 0.0
    %222 = vmatprep.subr.mxu0 0.0
    %223 = vmatpush1.msra.mxu0 0.0
    %224 = vmatprep.subr.mxu0 0.0
    %225 = vmatpush1.msra.mxu0 0.0
    %226 = vmatprep.subr.mxu0 0.0
    %227 = vmatpush1.msra.mxu0 0.0
    %228 = vmatprep.subr.mxu0 0.0
    %229 = vmatpush1.msra.mxu0 0.0
    %230 = vmatprep.subr.mxu0 0.0
    %231 = vmatpush1.msra.mxu0 0.0
    %232 = vmatprep.subr.mxu0 0.0
    %233 = vmatpush1.msra.mxu0 0.0
    %234 = vmatprep.subr.mxu0 0.0
    %235 = vmatpush1.msra.mxu0 0.0
    %236 = vmatprep.subr.mxu0 0.0
    %237 = vmatpush1.msra.mxu0 0.0
    %238 = vmatprep.subr.mxu0 0.0
    %239 = vmatpush1.msra.mxu0 0.0
    %240 = vmatprep.subr.mxu0 0.0
    %241 = vmatpush1.msra.mxu0 0.0
    %242 = vmatprep.subr.mxu0 0.0
    %243 = vmatpush1.msra.mxu0 0.0
    %244 = vmatprep.subr.mxu0 0.0
    %245 = vmatpush1.msra.mxu0 0.0
    %246 = vmatprep.subr.mxu0 0.0
    %247 = vmatpush1.msra.mxu0 0.0
    %248 = vmatprep.subr.mxu0 0.0
    %249 = vmatpush1.msra.mxu0 0.0
    %250 = vmatprep.subr.mxu0 0.0
    %251 = vmatpush1.msra.mxu0 0.0
    %252 = vmatprep.subr.mxu0 0.0
    %253 = vmatpush1.msra.mxu0 0.0
    %254 = vmatprep.subr.mxu0 0.0
    %255 = vmatpush1.msra.mxu0 0.0
    %256 = vmatprep.subr.mxu0 0.0
    %257 = vmatpush1.msra.mxu0 0.0
    %258 = vmatprep.mubr.f32.mxu0 0.0
    %259 = vmatmul.mubr.f32.gmra.mrb[0].mxu0 %v122
    %v260 = vpop.f32.mrb[0].mxu0
    %v261 = vadd.f32 %v100, %v260
    %v262 = vpop.f32.mrb[0].mxu0
    %263 = vdwg.mxu0
    %264 = vmatprep.subr.mxu0 0.0
    %265 = vmatpush1.msra.mxu0 %v71
    %266 = vmatprep.subr.mxu0 0.0
    %267 = vmatpush1.msra.mxu0 %v72
    %268 = vmatprep.subr.mxu0 0.0
    %269 = vmatpush1.msra.mxu0 0.0
    %270 = vmatprep.subr.mxu0 0.0
    %271 = vmatpush1.msra.mxu0 0.0
    %272 = vmatprep.subr.mxu0 0.0
    %273 = vmatpush1.msra.mxu0 0.0
    %274 = vmatprep.subr.mxu0 0.0
    %275 = vmatpush1.msra.mxu0 0.0
    %276 = vmatprep.subr.mxu0 0.0
    %277 = vmatpush1.msra.mxu0 0.0
    %278 = vmatprep.subr.mxu0 0.0
    %279 = vmatpush1.msra.mxu0 0.0
    %280 = vmatprep.subr.mxu0 0.0
    %281 = vmatpush1.msra.mxu0 0.0
    %282 = vmatprep.subr.mxu0 0.0
    %283 = vmatpush1.msra.mxu0 0.0
    %284 = vmatprep.subr.mxu0 0.0
    %285 = vmatpush1.msra.mxu0 0.0
    %286 = vmatprep.subr.mxu0 0.0
    %287 = vmatpush1.msra.mxu0 0.0
    %288 = vmatprep.subr.mxu0 0.0
    %289 = vmatpush1.msra.mxu0 0.0
    %290 = vmatprep.subr.mxu0 0.0
    %291 = vmatpush1.msra.mxu0 0.0
    %292 = vmatprep.subr.mxu0 0.0
    %293 = vmatpush1.msra.mxu0 0.0
    %294 = vmatprep.subr.mxu0 0.0
    %295 = vmatpush1.msra.mxu0 0.0
    %296 = vmatprep.subr.mxu0 0.0
    %297 = vmatpush1.msra.mxu0 0.0
    %298 = vmatprep.subr.mxu0 0.0
    %299 = vmatpush1.msra.mxu0 0.0
    %300 = vmatprep.subr.mxu0 0.0
    %301 = vmatpush1.msra.mxu0 0.0
    %302 = vmatprep.subr.mxu0 0.0
    %303 = vmatpush1.msra.mxu0 0.0
    %304 = vmatprep.subr.mxu0 0.0
    %305 = vmatpush1.msra.mxu0 0.0
    %306 = vmatprep.subr.mxu0 0.0
    %307 = vmatpush1.msra.mxu0 0.0
    %308 = vmatprep.subr.mxu0 0.0
    %309 = vmatpush1.msra.mxu0 0.0
    %310 = vmatprep.subr.mxu0 0.0
    %311 = vmatpush1.msra.mxu0 0.0
    %312 = vmatprep.subr.mxu0 0.0
    %313 = vmatpush1.msra.mxu0 0.0
    %314 = vmatprep.subr.mxu0 0.0
    %315 = vmatpush1.msra.mxu0 0.0
    %316 = vmatprep.subr.mxu0 0.0
    %317 = vmatpush1.msra.mxu0 0.0
    %318 = vmatprep.subr.mxu0 0.0
    %319 = vmatpush1.msra.mxu0 0.0
    %320 = vmatprep.subr.mxu0 0.0
    %321 = vmatpush1.msra.mxu0 0.0
    %322 = vmatprep.subr.mxu0 0.0
    %323 = vmatpush1.msra.mxu0 0.0
    %324 = vmatprep.subr.mxu0 0.0
    %325 = vmatpush1.msra.mxu0 0.0
    %326 = vmatprep.subr.mxu0 0.0
    %327 = vmatpush1.msra.mxu0 0.0
    %328 = vmatprep.mubr.f32.mxu0 0.0
    %329 = vmatmul.mubr.f32.gmra.mrb[0].mxu0 %v122
    %v330 = vpop.f32.mrb[0].mxu0
    %v331 = vadd.f32 %v108, %v330
    %v332 = vpop.f32.mrb[0].mxu0
    %333 = vdwg.mxu0
    %vm334 = vcmask 261120
    %v336 = vsel %vm334, %v118, 0
    %338 = vmatprep.subr.mxu0 0.0
    %339 = vmatpush1.msra.mxu0 %v73
    %340 = vmatprep.subr.mxu0 0.0
    %341 = vmatpush1.msra.mxu0 %v74
    %342 = vmatprep.subr.mxu0 0.0
    %343 = vmatpush1.msra.mxu0 %v75
    %344 = vmatprep.subr.mxu0 0.0
    %345 = vmatpush1.msra.mxu0 %v76
    %346 = vmatprep.subr.mxu0 0.0
    %347 = vmatpush1.msra.mxu0 0.0
    %348 = vmatprep.subr.mxu0 0.0
    %349 = vmatpush1.msra.mxu0 0.0
    %350 = vmatprep.subr.mxu0 0.0
    %351 = vmatpush1.msra.mxu0 0.0
    %352 = vmatprep.subr.mxu0 0.0
    %353 = vmatpush1.msra.mxu0 0.0
    %354 = vmatprep.subr.mxu0 0.0
    %355 = vmatpush1.msra.mxu0 0.0
    %356 = vmatprep.subr.mxu0 0.0
    %357 = vmatpush1.msra.mxu0 0.0
    %358 = vmatprep.subr.mxu0 0.0
    %359 = vmatpush1.msra.mxu0 0.0
    %360 = vmatprep.subr.mxu0 0.0
    %361 = vmatpush1.msra.mxu0 0.0
    %362 = vmatprep.subr.mxu0 0.0
    %363 = vmatpush1.msra.mxu0 0.0
    %364 = vmatprep.subr.mxu0 0.0
    %365 = vmatpush1.msra.mxu0 0.0
    %366 = vmatprep.subr.mxu0 0.0
    %367 = vmatpush1.msra.mxu0 0.0
    %368 = vmatprep.subr.mxu0 0.0
    %369 = vmatpush1.msra.mxu0 0.0
    %370 = vmatprep.subr.mxu0 0.0
    %371 = vmatpush1.msra.mxu0 0.0
    %372 = vmatprep.subr.mxu0 0.0
    %373 = vmatpush1.msra.mxu0 0.0
    %374 = vmatprep.subr.mxu0 0.0
    %375 = vmatpush1.msra.mxu0 0.0
    %376 = vmatprep.subr.mxu0 0.0
    %377 = vmatpush1.msra.mxu0 0.0
    %378 = vmatprep.subr.mxu0 0.0
    %379 = vmatpush1.msra.mxu0 0.0
    %380 = vmatprep.subr.mxu0 0.0
    %381 = vmatpush1.msra.mxu0 0.0
    %382 = vmatprep.subr.mxu0 0.0
    %383 = vmatpush1.msra.mxu0 0.0
    %384 = vmatprep.subr.mxu0 0.0
    %385 = vmatpush1.msra.mxu0 0.0
    %386 = vmatprep.subr.mxu0 0.0
    %387 = vmatpush1.msra.mxu0 0.0
    %388 = vmatprep.subr.mxu0 0.0
    %389 = vmatpush1.msra.mxu0 0.0
    %390 = vmatprep.subr.mxu0 0.0
    %391 = vmatpush1.msra.mxu0 0.0
    %392 = vmatprep.subr.mxu0 0.0
    %393 = vmatpush1.msra.mxu0 0.0
    %394 = vmatprep.subr.mxu0 0.0
    %395 = vmatpush1.msra.mxu0 0.0
    %396 = vmatprep.subr.mxu0 0.0
    %397 = vmatpush1.msra.mxu0 0.0
    %398 = vmatprep.subr.mxu0 0.0
    %399 = vmatpush1.msra.mxu0 0.0
    %400 = vmatprep.subr.mxu0 0.0
    %401 = vmatpush1.msra.mxu0 0.0
    %402 = vmatprep.mubr.f32.mxu0 0.0
    %403 = vmatmul.mubr.f32.gmra.mrb[0].mxu0 %v336
    %v404 = vpop.f32.mrb[0].mxu0
    %v405 = vadd.f32 0.0, %v404
    %v406 = vpop.f32.mrb[0].mxu0
    %407 = vdwg.mxu0
    %408 = vmatprep.subr.mxu0 0.0
    %409 = vmatpush1.msra.mxu0 %v78
    %410 = vmatprep.subr.mxu0 0.0
    %411 = vmatpush1.msra.mxu0 %v79
    %412 = vmatprep.subr.mxu0 0.0
    %413 = vmatpush1.msra.mxu0 %v80
    %414 = vmatprep.subr.mxu0 0.0
    %415 = vmatpush1.msra.mxu0 %v81
    %416 = vmatprep.subr.mxu0 0.0
    %417 = vmatpush1.msra.mxu0 0.0
    %418 = vmatprep.subr.mxu0 0.0
    %419 = vmatpush1.msra.mxu0 0.0
    %420 = vmatprep.subr.mxu0 0.0
    %421 = vmatpush1.msra.mxu0 0.0
    %422 = vmatprep.subr.mxu0 0.0
    %423 = vmatpush1.msra.mxu0 0.0
    %424 = vmatprep.subr.mxu0 0.0
    %425 = vmatpush1.msra.mxu0 0.0
    %426 = vmatprep.subr.mxu0 0.0
    %427 = vmatpush1.msra.mxu0 0.0
    %428 = vmatprep.subr.mxu0 0.0
    %429 = vmatpush1.msra.mxu0 0.0
    %430 = vmatprep.subr.mxu0 0.0
    %431 = vmatpush1.msra.mxu0 0.0
    %432 = vmatprep.subr.mxu0 0.0
    %433 = vmatpush1.msra.mxu0 0.0
    %434 = vmatprep.subr.mxu0 0.0
    %435 = vmatpush1.msra.mxu0 0.0
    %436 = vmatprep.subr.mxu0 0.0
    %437 = vmatpush1.msra.mxu0 0.0
    %438 = vmatprep.subr.mxu0 0.0
    %439 = vmatpush1.msra.mxu0 0.0
    %440 = vmatprep.subr.mxu0 0.0
    %441 = vmatpush1.msra.mxu0 0.0
    %442 = vmatprep.subr.mxu0 0.0
    %443 = vmatpush1.msra.mxu0 0.0
    %444 = vmatprep.subr.mxu0 0.0
    %445 = vmatpush1.msra.mxu0 0.0
    %446 = vmatprep.subr.mxu0 0.0
    %447 = vmatpush1.msra.mxu0 0.0
    %448 = vmatprep.subr.mxu0 0.0
    %449 = vmatpush1.msra.mxu0 0.0
    %450 = vmatprep.subr.mxu0 0.0
    %451 = vmatpush1.msra.mxu0 0.0
    %452 = vmatprep.subr.mxu0 0.0
    %453 = vmatpush1.msra.mxu0 0.0
    %454 = vmatprep.subr.mxu0 0.0
    %455 = vmatpush1.msra.mxu0 0.0
    %456 = vmatprep.subr.mxu0 0.0
    %457 = vmatpush1.msra.mxu0 0.0
    %458 = vmatprep.subr.mxu0 0.0
    %459 = vmatpush1.msra.mxu0 0.0
    %460 = vmatprep.subr.mxu0 0.0
    %461 = vmatpush1.msra.mxu0 0.0
    %462 = vmatprep.subr.mxu0 0.0
    %463 = vmatpush1.msra.mxu0 0.0
    %464 = vmatprep.subr.mxu0 0.0
    %465 = vmatpush1.msra.mxu0 0.0
    %466 = vmatprep.subr.mxu0 0.0
    %467 = vmatpush1.msra.mxu0 0.0
    %468 = vmatprep.subr.mxu0 0.0
    %469 = vmatpush1.msra.mxu0 0.0
    %470 = vmatprep.subr.mxu0 0.0
    %471 = vmatpush1.msra.mxu0 0.0
    %472 = vmatprep.mubr.f32.mxu0 0.0
    %473 = vmatmul.mubr.f32.gmra.mrb[0].mxu0 %v336
    %v474 = vpop.f32.mrb[0].mxu0
    %v475 = vadd.f32 0.0, %v474
    %v476 = vpop.f32.mrb[0].mxu0
    %477 = vdwg.mxu0
    %v478 = vadd.f32 %v191, %v405
    %v479 = vxor.u32 %v478, 2147483648
    %v480 = vmul.f32 %v479, 1.442695
    %v481 = vpow.pop %v480
    %v482 = vadd.f32 %v481, 1.0
    %v483 = vrcp.pop %v482
    %v484 = vmul.f32 1.0, %v483
    %v485 = vadd.f32 %v261, %v475
    %v486 = vxor.u32 %v485, 2147483648
    %v487 = vmul.f32 %v486, 1.442695
    %v488 = vpow.pop %v487
    %v489 = vadd.f32 %v488, 1.0
    %v490 = vrcp.pop %v489
    %v491 = vmul.f32 1.0, %v490
    %492 = vmatprep.subr.mxu0 0.0
    %493 = vmatpush1.msra.mxu0 %v83
    %494 = vmatprep.subr.mxu0 0.0
    %495 = vmatpush1.msra.mxu0 %v84
    %496 = vmatprep.subr.mxu0 0.0
    %497 = vmatpush1.msra.mxu0 %v85
    %498 = vmatprep.subr.mxu0 0.0
    %499 = vmatpush1.msra.mxu0 %v86
    %500 = vmatprep.subr.mxu0 0.0
    %501 = vmatpush1.msra.mxu0 0.0
    %502 = vmatprep.subr.mxu0 0.0
    %503 = vmatpush1.msra.mxu0 0.0
    %504 = vmatprep.subr.mxu0 0.0
    %505 = vmatpush1.msra.mxu0 0.0
    %506 = vmatprep.subr.mxu0 0.0
    %507 = vmatpush1.msra.mxu0 0.0
    %508 = vmatprep.subr.mxu0 0.0
    %509 = vmatpush1.msra.mxu0 0.0
    %510 = vmatprep.subr.mxu0 0.0
    %511 = vmatpush1.msra.mxu0 0.0
    %512 = vmatprep.subr.mxu0 0.0
    %513 = vmatpush1.msra.mxu0 0.0
    %514 = vmatprep.subr.mxu0 0.0
    %515 = vmatpush1.msra.mxu0 0.0
    %516 = vmatprep.subr.mxu0 0.0
    %517 = vmatpush1.msra.mxu0 0.0
    %518 = vmatprep.subr.mxu0 0.0
    %519 = vmatpush1.msra.mxu0 0.0
    %520 = vmatprep.subr.mxu0 0.0
    %521 = vmatpush1.msra.mxu0 0.0
    %522 = vmatprep.subr.mxu0 0.0
    %523 = vmatpush1.msra.mxu0 0.0
    %524 = vmatprep.subr.mxu0 0.0
    %525 = vmatpush1.msra.mxu0 0.0
    %526 = vmatprep.subr.mxu0 0.0
    %527 = vmatpush1.msra.mxu0 0.0
    %528 = vmatprep.subr.mxu0 0.0
    %529 = vmatpush1.msra.mxu0 0.0
    %530 = vmatprep.subr.mxu0 0.0
    %531 = vmatpush1.msra.mxu0 0.0
    %532 = vmatprep.subr.mxu0 0.0
    %533 = vmatpush1.msra.mxu0 0.0
    %534 = vmatprep.subr.mxu0 0.0
    %535 = vmatpush1.msra.mxu0 0.0
    %536 = vmatprep.subr.mxu0 0.0
    %537 = vmatpush1.msra.mxu0 0.0
    %538 = vmatprep.subr.mxu0 0.0
    %539 = vmatpush1.msra.mxu0 0.0
    %540 = vmatprep.subr.mxu0 0.0
    %541 = vmatpush1.msra.mxu0 0.0
    %542 = vmatprep.subr.mxu0 0.0
    %543 = vmatpush1.msra.mxu0 0.0
    %544 = vmatprep.subr.mxu0 0.0
    %545 = vmatpush1.msra.mxu0 0.0
    %546 = vmatprep.subr.mxu0 0.0
    %547 = vmatpush1.msra.mxu0 0.0
    %548 = vmatprep.subr.mxu0 0.0
    %549 = vmatpush1.msra.mxu0 0.0
    %550 = vmatprep.subr.mxu0 0.0
    %551 = vmatpush1.msra.mxu0 0.0
    %552 = vmatprep.subr.mxu0 0.0
    %553 = vmatpush1.msra.mxu0 0.0
    %554 = vmatprep.subr.mxu0 0.0
    %555 = vmatpush1.msra.mxu0 0.0
    %556 = vmatprep.mubr.f32.mxu0 0.0
    %557 = vmatmul.mubr.f32.gmra.mrb[0].mxu0 %v336
    %v558 = vpop.f32.mrb[0].mxu0
    %v559 = vadd.f32 %v116, %v558
    %v560 = vpop.f32.mrb[0].mxu0
    %561 = vdwg.mxu0
    %v562 = vmul.f32 %v484, %v559
    %v563 = vadd.f32 %v331, %v562
    %v564 = vtanh.pop %v563
    %v565 = vsub.f32 1.0, %v491
    %v566 = vmul.f32 %v565, %v564
    %v567 = vmul.f32 %v491, %v118
    %v568 = vadd.f32 %v566, %v567
    %s569 = scalar_lea.vmem [#allocation2], 2
    %v570 = vld [vmem:[%s569] sm:$0x3]
    %v572 = vsel %vm120, %v570, 0
    %574 = vmatprep.subr.mxu0 0.0
    %575 = vmatpush1.msra.mxu0 %v65
    %576 = vmatprep.subr.mxu0 0.0
    %577 = vmatpush1.msra.mxu0 %v66
    %578 = vmatprep.subr.mxu0 0.0
    %579 = vmatpush1.msra.mxu0 0.0
    %580 = vmatprep.subr.mxu0 0.0
    %581 = vmatpush1.msra.mxu0 0.0
    %582 = vmatprep.subr.mxu0 0.0
    %583 = vmatpush1.msra.mxu0 0.0
    %584 = vmatprep.subr.mxu0 0.0
    %585 = vmatpush1.msra.mxu0 0.0
    %586 = vmatprep.subr.mxu0 0.0
    %587 = vmatpush1.msra.mxu0 0.0
    %588 = vmatprep.subr.mxu0 0.0
    %589 = vmatpush1.msra.mxu0 0.0
    %590 = vmatprep.subr.mxu0 0.0
    %591 = vmatpush1.msra.mxu0 0.0
    %592 = vmatprep.subr.mxu0 0.0
    %593 = vmatpush1.msra.mxu0 0.0
    %594 = vmatprep.subr.mxu0 0.0
    %595 = vmatpush1.msra.mxu0 0.0
    %596 = vmatprep.subr.mxu0 0.0
    %597 = vmatpush1.msra.mxu0 0.0
    %598 = vmatprep.subr.mxu0 0.0
    %599 = vmatpush1.msra.mxu0 0.0
    %600 = vmatprep.subr.mxu0 0.0
    %601 = vmatpush1.msra.mxu0 0.0
    %602 = vmatprep.subr.mxu0 0.0
    %603 = vmatpush1.msra.mxu0 0.0
    %604 = vmatprep.subr.mxu0 0.0
    %605 = vmatpush1.msra.mxu0 0.0
    %606 = vmatprep.subr.mxu0 0.0
    %607 = vmatpush1.msra.mxu0 0.0
    %608 = vmatprep.subr.mxu0 0.0
    %609 = vmatpush1.msra.mxu0 0.0
    %610 = vmatprep.subr.mxu0 0.0
    %611 = vmatpush1.msra.mxu0 0.0
    %612 = vmatprep.subr.mxu0 0.0
    %613 = vmatpush1.msra.mxu0 0.0
    %614 = vmatprep.subr.mxu0 0.0
    %615 = vmatpush1.msra.mxu0 0.0
    %616 = vmatprep.subr.mxu0 0.0
    %617 = vmatpush1.msra.mxu0 0.0
    %618 = vmatprep.subr.mxu0 0.0
    %619 = vmatpush1.msra.mxu0 0.0
    %620 = vmatprep.subr.mxu0 0.0
    %621 = vmatpush1.msra.mxu0 0.0
    %622 = vmatprep.subr.mxu0 0.0
    %623 = vmatpush1.msra.mxu0 0.0
    %624 = vmatprep.subr.mxu0 0.0
    %625 = vmatpush1.msra.mxu0 0.0
    %626 = vmatprep.subr.mxu0 0.0
    %627 = vmatpush1.msra.mxu0 0.0
    %628 = vmatprep.subr.mxu0 0.0
    %629 = vmatpush1.msra.mxu0 0.0
    %630 = vmatprep.subr.mxu0 0.0
    %631 = vmatpush1.msra.mxu0 0.0
    %632 = vmatprep.subr.mxu0 0.0
    %633 = vmatpush1.msra.mxu0 0.0
    %634 = vmatprep.subr.mxu0 0.0
    %635 = vmatpush1.msra.mxu0 0.0
    %636 = vmatprep.subr.mxu0 0.0
    %637 = vmatpush1.msra.mxu0 0.0
    %638 = vmatprep.mubr.f32.mxu0 0.0
    %639 = vmatmul.mubr.f32.gmra.mrb[0].mxu0 %v572
    %v640 = vpop.f32.mrb[0].mxu0
    %v641 = vadd.f32 %v92, %v640
    %v642 = vpop.f32.mrb[0].mxu0
    %643 = vdwg.mxu0
    %644 = vmatprep.subr.mxu0 0.0
    %645 = vmatpush1.msra.mxu0 %v68
    %646 = vmatprep.subr.mxu0 0.0
    %647 = vmatpush1.msra.mxu0 %v69
    %648 = vmatprep.subr.mxu0 0.0
    %649 = vmatpush1.msra.mxu0 0.0
    %650 = vmatprep.subr.mxu0 0.0
    %651 = vmatpush1.msra.mxu0 0.0
    %652 = vmatprep.subr.mxu0 0.0
    %653 = vmatpush1.msra.mxu0 0.0
    %654 = vmatprep.subr.mxu0 0.0
    %655 = vmatpush1.msra.mxu0 0.0
    %656 = vmatprep.subr.mxu0 0.0
    %657 = vmatpush1.msra.mxu0 0.0
    %658 = vmatprep.subr.mxu0 0.0
    %659 = vmatpush1.msra.mxu0 0.0
    %660 = vmatprep.subr.mxu0 0.0
    %661 = vmatpush1.msra.mxu0 0.0
    %662 = vmatprep.subr.mxu0 0.0
    %663 = vmatpush1.msra.mxu0 0.0
    %664 = vmatprep.subr.mxu0 0.0
    %665 = vmatpush1.msra.mxu0 0.0
    %666 = vmatprep.subr.mxu0 0.0
    %667 = vmatpush1.msra.mxu0 0.0
    %668 = vmatprep.subr.mxu0 0.0
    %669 = vmatpush1.msra.mxu0 0.0
    %670 = vmatprep.subr.mxu0 0.0
    %671 = vmatpush1.msra.mxu0 0.0
    %672 = vmatprep.subr.mxu0 0.0
    %673 = vmatpush1.msra.mxu0 0.0
    %674 = vmatprep.subr.mxu0 0.0
    %675 = vmatpush1.msra.mxu0 0.0
    %676 = vmatprep.subr.mxu0 0.0
    %677 = vmatpush1.msra.mxu0 0.0
    %678 = vmatprep.subr.mxu0 0.0
    %679 = vmatpush1.msra.mxu0 0.0
    %680 = vmatprep.subr.mxu0 0.0
    %681 = vmatpush1.msra.mxu0 0.0
    %682 = vmatprep.subr.mxu0 0.0
    %683 = vmatpush1.msra.mxu0 0.0
    %684 = vmatprep.subr.mxu0 0.0
    %685 = vmatpush1.msra.mxu0 0.0
    %686 = vmatprep.subr.mxu0 0.0
    %687 = vmatpush1.msra.mxu0 0.0
    %688 = vmatprep.subr.mxu0 0.0
    %689 = vmatpush1.msra.mxu0 0.0
    %690 = vmatprep.subr.mxu0 0.0
    %691 = vmatpush1.msra.mxu0 0.0
    %692 = vmatprep.subr.mxu0 0.0
    %693 = vmatpush1.msra.mxu0 0.0
    %694 = vmatprep.subr.mxu0 0.0
    %695 = vmatpush1.msra.mxu0 0.0
    %696 = vmatprep.subr.mxu0 0.0
    %697 = vmatpush1.msra.mxu0 0.0
    %698 = vmatprep.subr.mxu0 0.0
    %699 = vmatpush1.msra.mxu0 0.0
    %700 = vmatprep.subr.mxu0 0.0
    %701 = vmatpush1.msra.mxu0 0.0
    %702 = vmatprep.subr.mxu0 0.0
    %703 = vmatpush1.msra.mxu0 0.0
    %704 = vmatprep.subr.mxu0 0.0
    %705 = vmatpush1.msra.mxu0 0.0
    %706 = vmatprep.subr.mxu0 0.0
    %707 = vmatpush1.msra.mxu0 0.0
    %708 = vmatprep.mubr.f32.mxu0 0.0
    %709 = vmatmul.mubr.f32.gmra.mrb[0].mxu0 %v572
    %v710 = vpop.f32.mrb[0].mxu0
    %v711 = vadd.f32 %v100, %v710
    %v712 = vpop.f32.mrb[0].mxu0
    %713 = vdwg.mxu0
    %714 = vmatprep.subr.mxu0 0.0
    %715 = vmatpush1.msra.mxu0 %v71
    %716 = vmatprep.subr.mxu0 0.0
    %717 = vmatpush1.msra.mxu0 %v72
    %718 = vmatprep.subr.mxu0 0.0
    %719 = vmatpush1.msra.mxu0 0.0
    %720 = vmatprep.subr.mxu0 0.0
    %721 = vmatpush1.msra.mxu0 0.0
    %722 = vmatprep.subr.mxu0 0.0
    %723 = vmatpush1.msra.mxu0 0.0
    %724 = vmatprep.subr.mxu0 0.0
    %725 = vmatpush1.msra.mxu0 0.0
    %726 = vmatprep.subr.mxu0 0.0
    %727 = vmatpush1.msra.mxu0 0.0
    %728 = vmatprep.subr.mxu0 0.0
    %729 = vmatpush1.msra.mxu0 0.0
    %730 = vmatprep.subr.mxu0 0.0
    %731 = vmatpush1.msra.mxu0 0.0
    %732 = vmatprep.subr.mxu0 0.0
    %733 = vmatpush1.msra.mxu0 0.0
    %734 = vmatprep.subr.mxu0 0.0
    %735 = vmatpush1.msra.mxu0 0.0
    %736 = vmatprep.subr.mxu0 0.0
    %737 = vmatpush1.msra.mxu0 0.0
    %738 = vmatprep.subr.mxu0 0.0
    %739 = vmatpush1.msra.mxu0 0.0
    %740 = vmatprep.subr.mxu0 0.0
    %741 = vmatpush1.msra.mxu0 0.0
    %742 = vmatprep.subr.mxu0 0.0
    %743 = vmatpush1.msra.mxu0 0.0
    %744 = vmatprep.subr.mxu0 0.0
    %745 = vmatpush1.msra.mxu0 0.0
    %746 = vmatprep.subr.mxu0 0.0
    %747 = vmatpush1.msra.mxu0 0.0
    %748 = vmatprep.subr.mxu0 0.0
    %749 = vmatpush1.msra.mxu0 0.0
    %750 = vmatprep.subr.mxu0 0.0
    %751 = vmatpush1.msra.mxu0 0.0
    %752 = vmatprep.subr.mxu0 0.0
    %753 = vmatpush1.msra.mxu0 0.0
    %754 = vmatprep.subr.mxu0 0.0
    %755 = vmatpush1.msra.mxu0 0.0
    %756 = vmatprep.subr.mxu0 0.0
    %757 = vmatpush1.msra.mxu0 0.0
    %758 = vmatprep.subr.mxu0 0.0
    %759 = vmatpush1.msra.mxu0 0.0
    %760 = vmatprep.subr.mxu0 0.0
    %761 = vmatpush1.msra.mxu0 0.0
    %762 = vmatprep.subr.mxu0 0.0
    %763 = vmatpush1.msra.mxu0 0.0
    %764 = vmatprep.subr.mxu0 0.0
    %765 = vmatpush1.msra.mxu0 0.0
    %766 = vmatprep.subr.mxu0 0.0
    %767 = vmatpush1.msra.mxu0 0.0
    %768 = vmatprep.subr.mxu0 0.0
    %769 = vmatpush1.msra.mxu0 0.0
    %770 = vmatprep.subr.mxu0 0.0
    %771 = vmatpush1.msra.mxu0 0.0
    %772 = vmatprep.subr.mxu0 0.0
    %773 = vmatpush1.msra.mxu0 0.0
    %774 = vmatprep.subr.mxu0 0.0
    %775 = vmatpush1.msra.mxu0 0.0
    %776 = vmatprep.subr.mxu0 0.0
    %777 = vmatpush1.msra.mxu0 0.0
    %778 = vmatprep.mubr.f32.mxu0 0.0
    %779 = vmatmul.mubr.f32.gmra.mrb[0].mxu0 %v572
    %v780 = vpop.f32.mrb[0].mxu0
    %v781 = vadd.f32 %v108, %v780
    %v782 = vpop.f32.mrb[0].mxu0
    %783 = vdwg.mxu0
    %v785 = vsel %vm334, %v568, 0
    %787 = vmatprep.subr.mxu0 0.0
    %788 = vmatpush1.msra.mxu0 %v73
    %789 = vmatprep.subr.mxu0 0.0
    %790 = vmatpush1.msra.mxu0 %v74
    %791 = vmatprep.subr.mxu0 0.0
    %792 = vmatpush1.msra.mxu0 %v75
    %793 = vmatprep.subr.mxu0 0.0
    %794 = vmatpush1.msra.mxu0 %v76
    %795 = vmatprep.subr.mxu0 0.0
    %796 = vmatpush1.msra.mxu0 0.0
    %797 = vmatprep.subr.mxu0 0.0
    %798 = vmatpush1.msra.mxu0 0.0
    %799 = vmatprep.subr.mxu0 0.0
    %800 = vmatpush1.msra.mxu0 0.0
    %801 = vmatprep.subr.mxu0 0.0
    %802 = vmatpush1.msra.mxu0 0.0
    %803 = vmatprep.subr.mxu0 0.0
    %804 = vmatpush1.msra.mxu0 0.0
    %805 = vmatprep.subr.mxu0 0.0
    %806 = vmatpush1.msra.mxu0 0.0
    %807 = vmatprep.subr.mxu0 0.0
    %808 = vmatpush1.msra.mxu0 0.0
    %809 = vmatprep.subr.mxu0 0.0
    %810 = vmatpush1.msra.mxu0 0.0
    %811 = vmatprep.subr.mxu0 0.0
    %812 = vmatpush1.msra.mxu0 0.0
    %813 = vmatprep.subr.mxu0 0.0
    %814 = vmatpush1.msra.mxu0 0.0
    %815 = vmatprep.subr.mxu0 0.0
    %816 = vmatpush1.msra.mxu0 0.0
    %817 = vmatprep.subr.mxu0 0.0
    %818 = vmatpush1.msra.mxu0 0.0
    %819 = vmatprep.subr.mxu0 0.0
    %820 = vmatpush1.msra.mxu0 0.0
    %821 = vmatprep.subr.mxu0 0.0
    %822 = vmatpush1.msra.mxu0 0.0
    %823 = vmatprep.subr.mxu0 0.0
    %824 = vmatpush1.msra.mxu0 0.0
    %825 = vmatprep.subr.mxu0 0.0
    %826 = vmatpush1.msra.mxu0 0.0
    %827 = vmatprep.subr.mxu0 0.0
    %828 = vmatpush1.msra.mxu0 0.0
    %829 = vmatprep.subr.mxu0 0.0
    %830 = vmatpush1.msra.mxu0 0.0
    %831 = vmatprep.subr.mxu0 0.0
    %832 = vmatpush1.msra.mxu0 0.0
    %833 = vmatprep.subr.mxu0 0.0
    %834 = vmatpush1.msra.mxu0 0.0
    %835 = vmatprep.subr.mxu0 0.0
    %836 = vmatpush1.msra.mxu0 0.0
    %837 = vmatprep.subr.mxu0 0.0
    %838 = vmatpush1.msra.mxu0 0.0
    %839 = vmatprep.subr.mxu0 0.0
    %840 = vmatpush1.msra.mxu0 0.0
    %841 = vmatprep.subr.mxu0 0.0
    %842 = vmatpush1.msra.mxu0 0.0
    %843 = vmatprep.subr.mxu0 0.0
    %844 = vmatpush1.msra.mxu0 0.0
    %845 = vmatprep.subr.mxu0 0.0
    %846 = vmatpush1.msra.mxu0 0.0
    %847 = vmatprep.subr.mxu0 0.0
    %848 = vmatpush1.msra.mxu0 0.0
    %849 = vmatprep.subr.mxu0 0.0
    %850 = vmatpush1.msra.mxu0 0.0
    %851 = vmatprep.mubr.f32.mxu0 0.0
    %852 = vmatmul.mubr.f32.gmra.mrb[0].mxu0 %v785
    %v853 = vpop.f32.mrb[0].mxu0
    %v854 = vadd.f32 0.0, %v853
    %v855 = vpop.f32.mrb[0].mxu0
    %856 = vdwg.mxu0
    %857 = vmatprep.subr.mxu0 0.0
    %858 = vmatpush1.msra.mxu0 %v78
    %859 = vmatprep.subr.mxu0 0.0
    %860 = vmatpush1.msra.mxu0 %v79
    %861 = vmatprep.subr.mxu0 0.0
    %862 = vmatpush1.msra.mxu0 %v80
    %863 = vmatprep.subr.mxu0 0.0
    %864 = vmatpush1.msra.mxu0 %v81
    %865 = vmatprep.subr.mxu0 0.0
    %866 = vmatpush1.msra.mxu0 0.0
    %867 = vmatprep.subr.mxu0 0.0
    %868 = vmatpush1.msra.mxu0 0.0
    %869 = vmatprep.subr.mxu0 0.0
    %870 = vmatpush1.msra.mxu0 0.0
    %871 = vmatprep.subr.mxu0 0.0
    %872 = vmatpush1.msra.mxu0 0.0
    %873 = vmatprep.subr.mxu0 0.0
    %874 = vmatpush1.msra.mxu0 0.0
    %875 = vmatprep.subr.mxu0 0.0
    %876 = vmatpush1.msra.mxu0 0.0
    %877 = vmatprep.subr.mxu0 0.0
    %878 = vmatpush1.msra.mxu0 0.0
    %879 = vmatprep.subr.mxu0 0.0
    %880 = vmatpush1.msra.mxu0 0.0
    %881 = vmatprep.subr.mxu0 0.0
    %882 = vmatpush1.msra.mxu0 0.0
    %883 = vmatprep.subr.mxu0 0.0
    %884 = vmatpush1.msra.mxu0 0.0
    %885 = vmatprep.subr.mxu0 0.0
    %886 = vmatpush1.msra.mxu0 0.0
    %887 = vmatprep.subr.mxu0 0.0
    %888 = vmatpush1.msra.mxu0 0.0
    %889 = vmatprep.subr.mxu0 0.0
    %890 = vmatpush1.msra.mxu0 0.0
    %891 = vmatprep.subr.mxu0 0.0
    %892 = vmatpush1.msra.mxu0 0.0
    %893 = vmatprep.subr.mxu0 0.0
    %894 = vmatpush1.msra.mxu0 0.0
    %895 = vmatprep.subr.mxu0 0.0
    %896 = vmatpush1.msra.mxu0 0.0
    %897 = vmatprep.subr.mxu0 0.0
    %898 = vmatpush1.msra.mxu0 0.0
    %899 = vmatprep.subr.mxu0 0.0
    %900 = vmatpush1.msra.mxu0 0.0
    %901 = vmatprep.subr.mxu0 0.0
    %902 = vmatpush1.msra.mxu0 0.0
    %903 = vmatprep.subr.mxu0 0.0
    %904 = vmatpush1.msra.mxu0 0.0
    %905 = vmatprep.subr.mxu0 0.0
    %906 = vmatpush1.msra.mxu0 0.0
    %907 = vmatprep.subr.mxu0 0.0
    %908 = vmatpush1.msra.mxu0 0.0
    %909 = vmatprep.subr.mxu0 0.0
    %910 = vmatpush1.msra.mxu0 0.0
    %911 = vmatprep.subr.mxu0 0.0
    %912 = vmatpush1.msra.mxu0 0.0
    %913 = vmatprep.subr.mxu0 0.0
    %914 = vmatpush1.msra.mxu0 0.0
    %915 = vmatprep.subr.mxu0 0.0
    %916 = vmatpush1.msra.mxu0 0.0
    %917 = vmatprep.subr.mxu0 0.0
    %918 = vmatpush1.msra.mxu0 0.0
    %919 = vmatprep.subr.mxu0 0.0
    %920 = vmatpush1.msra.mxu0 0.0
    %921 = vmatprep.mubr.f32.mxu0 0.0
    %922 = vmatmul.mubr.f32.gmra.mrb[0].mxu0 %v785
    %v923 = vpop.f32.mrb[0].mxu0
    %v924 = vadd.f32 0.0, %v923
    %v925 = vpop.f32.mrb[0].mxu0
    %926 = vdwg.mxu0
    %v927 = vadd.f32 %v641, %v854
    %v928 = vxor.u32 %v927, 2147483648
    %v929 = vmul.f32 %v928, 1.442695
    %v930 = vpow.pop %v929
    %v931 = vadd.f32 %v930, 1.0
    %v932 = vrcp.pop %v931
    %v933 = vmul.f32 1.0, %v932
    %v934 = vadd.f32 %v711, %v924
    %v935 = vxor.u32 %v934, 2147483648
    %v936 = vmul.f32 %v935, 1.442695
    %v937 = vpow.pop %v936
    %v938 = vadd.f32 %v937, 1.0
    %v939 = vrcp.pop %v938
    %v940 = vmul.f32 1.0, %v939
    %941 = vmatprep.subr.mxu0 0.0
    %942 = vmatpush1.msra.mxu0 %v83
    %943 = vmatprep.subr.mxu0 0.0
    %944 = vmatpush1.msra.mxu0 %v84
    %945 = vmatprep.subr.mxu0 0.0
    %946 = vmatpush1.msra.mxu0 %v85
    %947 = vmatprep.subr.mxu0 0.0
    %948 = vmatpush1.msra.mxu0 %v86
    %949 = vmatprep.subr.mxu0 0.0
    %950 = vmatpush1.msra.mxu0 0.0
    %951 = vmatprep.subr.mxu0 0.0
    %952 = vmatpush1.msra.mxu0 0.0
    %953 = vmatprep.subr.mxu0 0.0
    %954 = vmatpush1.msra.mxu0 0.0
    %955 = vmatprep.subr.mxu0 0.0
    %956 = vmatpush1.msra.mxu0 0.0
    %957 = vmatprep.subr.mxu0 0.0
    %958 = vmatpush1.msra.mxu0 0.0
    %959 = vmatprep.subr.mxu0 0.0
    %960 = vmatpush1.msra.mxu0 0.0
    %961 = vmatprep.subr.mxu0 0.0
    %962 = vmatpush1.msra.mxu0 0.0
    %963 = vmatprep.subr.mxu0 0.0
    %964 = vmatpush1.msra.mxu0 0.0
    %965 = vmatprep.subr.mxu0 0.0
    %966 = vmatpush1.msra.mxu0 0.0
    %967 = vmatprep.subr.mxu0 0.0
    %968 = vmatpush1.msra.mxu0 0.0
    %969 = vmatprep.subr.mxu0 0.0
    %970 = vmatpush1.msra.mxu0 0.0
    %971 = vmatprep.subr.mxu0 0.0
    %972 = vmatpush1.msra.mxu0 0.0
    %973 = vmatprep.subr.mxu0 0.0
    %974 = vmatpush1.msra.mxu0 0.0
    %975 = vmatprep.subr.mxu0 0.0
    %976 = vmatpush1.msra.mxu0 0.0
    %977 = vmatprep.subr.mxu0 0.0
    %978 = vmatpush1.msra.mxu0 0.0
    %979 = vmatprep.subr.mxu0 0.0
    %980 = vmatpush1.msra.mxu0 0.0
    %981 = vmatprep.subr.mxu0 0.0
    %982 = vmatpush1.msra.mxu0 0.0
    %983 = vmatprep.subr.mxu0 0.0
    %984 = vmatpush1.msra.mxu0 0.0
    %985 = vmatprep.subr.mxu0 0.0
    %986 = vmatpush1.msra.mxu0 0.0
    %987 = vmatprep.subr.mxu0 0.0
    %988 = vmatpush1.msra.mxu0 0.0
    %989 = vmatprep.subr.mxu0 0.0
    %990 = vmatpush1.msra.mxu0 0.0
    %991 = vmatprep.subr.mxu0 0.0
    %992 = vmatpush1.msra.mxu0 0.0
    %993 = vmatprep.subr.mxu0 0.0
    %994 = vmatpush1.msra.mxu0 0.0
    %995 = vmatprep.subr.mxu0 0.0
    %996 = vmatpush1.msra.mxu0 0.0
    %997 = vmatprep.subr.mxu0 0.0
    %998 = vmatpush1.msra.mxu0 0.0
    %999 = vmatprep.subr.mxu0 0.0
    %1000 = vmatpush1.msra.mxu0 0.0
    %1001 = vmatprep.subr.mxu0 0.0
    %1002 = vmatpush1.msra.mxu0 0.0
    %1003 = vmatprep.subr.mxu0 0.0
    %1004 = vmatpush1.msra.mxu0 0.0
    %1005 = vmatprep.mubr.f32.mxu0 0.0
    %1006 = vmatmul.mubr.f32.gmra.mrb[0].mxu0 %v785
    %v1007 = vpop.f32.mrb[0].mxu0
    %v1008 = vadd.f32 %v116, %v1007
    %v1009 = vpop.f32.mrb[0].mxu0
    %1010 = vdwg.mxu0
    %v1011 = vmul.f32 %v933, %v1008
    %v1012 = vadd.f32 %v781, %v1011
    %v1013 = vtanh.pop %v1012
    %v1014 = vsub.f32 1.0, %v940
    %v1015 = vmul.f32 %v1014, %v1013
    %v1016 = vmul.f32 %v940, %v568
    %v1017 = vadd.f32 %v1015, %v1016
    %s1018 = scalar_lea.vmem [#allocation2], 4
    %v1019 = vld [vmem:[%s1018] sm:$0x3]
    %v1021 = vsel %vm120, %v1019, 0
    %1023 = vmatprep.subr.mxu0 0.0
    %1024 = vmatpush1.msra.mxu0 %v65
    %1025 = vmatprep.subr.mxu0 0.0
    %1026 = vmatpush1.msra.mxu0 %v66
    %1027 = vmatprep.subr.mxu0 0.0
    %1028 = vmatpush1.msra.mxu0 0.0
    %1029 = vmatprep.subr.mxu0 0.0
    %1030 = vmatpush1.msra.mxu0 0.0
    %1031 = vmatprep.subr.mxu0 0.0
    %1032 = vmatpush1.msra.mxu0 0.0
    %1033 = vmatprep.subr.mxu0 0.0
    %1034 = vmatpush1.msra.mxu0 0.0
    %1035 = vmatprep.subr.mxu0 0.0
    %1036 = vmatpush1.msra.mxu0 0.0
    %1037 = vmatprep.subr.mxu0 0.0
    %1038 = vmatpush1.msra.mxu0 0.0
    %1039 = vmatprep.subr.mxu0 0.0
    %1040 = vmatpush1.msra.mxu0 0.0
    %1041 = vmatprep.subr.mxu0 0.0
    %1042 = vmatpush1.msra.mxu0 0.0
    %1043 = vmatprep.subr.mxu0 0.0
    %1044 = vmatpush1.msra.mxu0 0.0
    %1045 = vmatprep.subr.mxu0 0.0
    %1046 = vmatpush1.msra.mxu0 0.0
    %1047 = vmatprep.subr.mxu0 0.0
    %1048 = vmatpush1.msra.mxu0 0.0
    %1049 = vmatprep.subr.mxu0 0.0
    %1050 = vmatpush1.msra.mxu0 0.0
    %1051 = vmatprep.subr.mxu0 0.0
    %1052 = vmatpush1.msra.mxu0 0.0
    %1053 = vmatprep.subr.mxu0 0.0
    %1054 = vmatpush1.msra.mxu0 0.0
    %1055 = vmatprep.subr.mxu0 0.0
    %1056 = vmatpush1.msra.mxu0 0.0
    %1057 = vmatprep.subr.mxu0 0.0
    %1058 = vmatpush1.msra.mxu0 0.0
    %1059 = vmatprep.subr.mxu0 0.0
    %1060 = vmatpush1.msra.mxu0 0.0
    %1061 = vmatprep.subr.mxu0 0.0
    %1062 = vmatpush1.msra.mxu0 0.0
    %1063 = vmatprep.subr.mxu0 0.0
    %1064 = vmatpush1.msra.mxu0 0.0
    %1065 = vmatprep.subr.mxu0 0.0
    %1066 = vmatpush1.msra.mxu0 0.0
    %1067 = vmatprep.subr.mxu0 0.0
    %1068 = vmatpush1.msra.mxu0 0.0
    %1069 = vmatprep.subr.mxu0 0.0
    %1070 = vmatpush1.msra.mxu0 0.0
    %1071 = vmatprep.subr.mxu0 0.0
    %1072 = vmatpush1.msra.mxu0 0.0
    %1073 = vmatprep.subr.mxu0 0.0
    %1074 = vmatpush1.msra.mxu0 0.0
    %1075 = vmatprep.subr.mxu0 0.0
    %1076 = vmatpush1.msra.mxu0 0.0
    %1077 = vmatprep.subr.mxu0 0.0
    %1078 = vmatpush1.msra.mxu0 0.0
    %1079 = vmatprep.subr.mxu0 0.0
    %1080 = vmatpush1.msra.mxu0 0.0
    %1081 = vmatprep.subr.mxu0 0.0
    %1082 = vmatpush1.msra.mxu0 0.0
    %1083 = vmatprep.subr.mxu0 0.0
    %1084 = vmatpush1.msra.mxu0 0.0
    %1085 = vmatprep.subr.mxu0 0.0
    %1086 = vmatpush1.msra.mxu0 0.0
    %1087 = vmatprep.mubr.f32.mxu0 0.0
    %1088 = vmatmul.mubr.f32.gmra.mrb[0].mxu0 %v1021
    %v1089 = vpop.f32.mrb[0].mxu0
    %v1090 = vadd.f32 %v92, %v1089
    %v1091 = vpop.f32.mrb[0].mxu0
    %1092 = vdwg.mxu0
    %1093 = vmatprep.subr.mxu0 0.0
    %1094 = vmatpush1.msra.mxu0 %v68
    %1095 = vmatprep.subr.mxu0 0.0
    %1096 = vmatpush1.msra.mxu0 %v69
    %1097 = vmatprep.subr.mxu0 0.0
    %1098 = vmatpush1.msra.mxu0 0.0
    %1099 = vmatprep.subr.mxu0 0.0
    %1100 = vmatpush1.msra.mxu0 0.0
    %1101 = vmatprep.subr.mxu0 0.0
    %1102 = vmatpush1.msra.mxu0 0.0
    %1103 = vmatprep.subr.mxu0 0.0
    %1104 = vmatpush1.msra.mxu0 0.0
    %1105 = vmatprep.subr.mxu0 0.0
    %1106 = vmatpush1.msra.mxu0 0.0
    %1107 = vmatprep.subr.mxu0 0.0
    %1108 = vmatpush1.msra.mxu0 0.0
    %1109 = vmatprep.subr.mxu0 0.0
    %1110 = vmatpush1.msra.mxu0 0.0
    %1111 = vmatprep.subr.mxu0 0.0
    %1112 = vmatpush1.msra.mxu0 0.0
    %1113 = vmatprep.subr.mxu0 0.0
    %1114 = vmatpush1.msra.mxu0 0.0
    %1115 = vmatprep.subr.mxu0 0.0
    %1116 = vmatpush1.msra.mxu0 0.0
    %1117 = vmatprep.subr.mxu0 0.0
    %1118 = vmatpush1.msra.mxu0 0.0
    %1119 = vmatprep.subr.mxu0 0.0
    %1120 = vmatpush1.msra.mxu0 0.0
    %1121 = vmatprep.subr.mxu0 0.0
    %1122 = vmatpush1.msra.mxu0 0.0
    %1123 = vmatprep.subr.mxu0 0.0
    %1124 = vmatpush1.msra.mxu0 0.0
    %1125 = vmatprep.subr.mxu0 0.0
    %1126 = vmatpush1.msra.mxu0 0.0
    %1127 = vmatprep.subr.mxu0 0.0
    %1128 = vmatpush1.msra.mxu0 0.0
    %1129 = vmatprep.subr.mxu0 0.0
    %1130 = vmatpush1.msra.mxu0 0.0
    %1131 = vmatprep.subr.mxu0 0.0
    %1132 = vmatpush1.msra.mxu0 0.0
    %1133 = vmatprep.subr.mxu0 0.0
    %1134 = vmatpush1.msra.mxu0 0.0
    %1135 = vmatprep.subr.mxu0 0.0
    %1136 = vmatpush1.msra.mxu0 0.0
    %1137 = vmatprep.subr.mxu0 0.0
    %1138 = vmatpush1.msra.mxu0 0.0
    %1139 = vmatprep.subr.mxu0 0.0
    %1140 = vmatpush1.msra.mxu0 0.0
    %1141 = vmatprep.subr.mxu0 0.0
    %1142 = vmatpush1.msra.mxu0 0.0
    %1143 = vmatprep.subr.mxu0 0.0
    %1144 = vmatpush1.msra.mxu0 0.0
    %1145 = vmatprep.subr.mxu0 0.0
    %1146 = vmatpush1.msra.mxu0 0.0
    %1147 = vmatprep.subr.mxu0 0.0
    %1148 = vmatpush1.msra.mxu0 0.0
    %1149 = vmatprep.subr.mxu0 0.0
    %1150 = vmatpush1.msra.mxu0 0.0
    %1151 = vmatprep.subr.mxu0 0.0
    %1152 = vmatpush1.msra.mxu0 0.0
    %1153 = vmatprep.subr.mxu0 0.0
    %1154 = vmatpush1.msra.mxu0 0.0
    %1155 = vmatprep.subr.mxu0 0.0
    %1156 = vmatpush1.msra.mxu0 0.0
    %1157 = vmatprep.mubr.f32.mxu0 0.0
    %1158 = vmatmul.mubr.f32.gmra.mrb[0].mxu0 %v1021
    %v1159 = vpop.f32.mrb[0].mxu0
    %v1160 = vadd.f32 %v100, %v1159
    %v1161 = vpop.f32.mrb[0].mxu0
    %1162 = vdwg.mxu0
    %1163 = vmatprep.subr.mxu0 0.0
    %1164 = vmatpush1.msra.mxu0 %v71
    %1165 = vmatprep.subr.mxu0 0.0
    %1166 = vmatpush1.msra.mxu0 %v72
    %1167 = vmatprep.subr.mxu0 0.0
    %1168 = vmatpush1.msra.mxu0 0.0
    %1169 = vmatprep.subr.mxu0 0.0
    %1170 = vmatpush1.msra.mxu0 0.0
    %1171 = vmatprep.subr.mxu0 0.0
    %1172 = vmatpush1.msra.mxu0 0.0
    %1173 = vmatprep.subr.mxu0 0.0
    %1174 = vmatpush1.msra.mxu0 0.0
    %1175 = vmatprep.subr.mxu0 0.0
    %1176 = vmatpush1.msra.mxu0 0.0
    %1177 = vmatprep.subr.mxu0 0.0
    %1178 = vmatpush1.msra.mxu0 0.0
    %1179 = vmatprep.subr.mxu0 0.0
    %1180 = vmatpush1.msra.mxu0 0.0
    %1181 = vmatprep.subr.mxu0 0.0
    %1182 = vmatpush1.msra.mxu0 0.0
    %1183 = vmatprep.subr.mxu0 0.0
    %1184 = vmatpush1.msra.mxu0 0.0
    %1185 = vmatprep.subr.mxu0 0.0
    %1186 = vmatpush1.msra.mxu0 0.0
    %1187 = vmatprep.subr.mxu0 0.0
    %1188 = vmatpush1.msra.mxu0 0.0
    %1189 = vmatprep.subr.mxu0 0.0
    %1190 = vmatpush1.msra.mxu0 0.0
    %1191 = vmatprep.subr.mxu0 0.0
    %1192 = vmatpush1.msra.mxu0 0.0
    %1193 = vmatprep.subr.mxu0 0.0
    %1194 = vmatpush1.msra.mxu0 0.0
    %1195 = vmatprep.subr.mxu0 0.0
    %1196 = vmatpush1.msra.mxu0 0.0
    %1197 = vmatprep.subr.mxu0 0.0
    %1198 = vmatpush1.msra.mxu0 0.0
    %1199 = vmatprep.subr.mxu0 0.0
    %1200 = vmatpush1.msra.mxu0 0.0
    %1201 = vmatprep.subr.mxu0 0.0
    %1202 = vmatpush1.msra.mxu0 0.0
    %1203 = vmatprep.subr.mxu0 0.0
    %1204 = vmatpush1.msra.mxu0 0.0
    %1205 = vmatprep.subr.mxu0 0.0
    %1206 = vmatpush1.msra.mxu0 0.0
    %1207 = vmatprep.subr.mxu0 0.0
    %1208 = vmatpush1.msra.mxu0 0.0
    %1209 = vmatprep.subr.mxu0 0.0
    %1210 = vmatpush1.msra.mxu0 0.0
    %1211 = vmatprep.subr.mxu0 0.0
    %1212 = vmatpush1.msra.mxu0 0.0
    %1213 = vmatprep.subr.mxu0 0.0
    %1214 = vmatpush1.msra.mxu0 0.0
    %1215 = vmatprep.subr.mxu0 0.0
    %1216 = vmatpush1.msra.mxu0 0.0
    %1217 = vmatprep.subr.mxu0 0.0
    %1218 = vmatpush1.msra.mxu0 0.0
    %1219 = vmatprep.subr.mxu0 0.0
    %1220 = vmatpush1.msra.mxu0 0.0
    %1221 = vmatprep.subr.mxu0 0.0
    %1222 = vmatpush1.msra.mxu0 0.0
    %1223 = vmatprep.subr.mxu0 0.0
    %1224 = vmatpush1.msra.mxu0 0.0
    %1225 = vmatprep.subr.mxu0 0.0
    %1226 = vmatpush1.msra.mxu0 0.0
    %1227 = vmatprep.mubr.f32.mxu0 0.0
    %1228 = vmatmul.mubr.f32.gmra.mrb[0].mxu0 %v1021
    %v1229 = vpop.f32.mrb[0].mxu0
    %v1230 = vadd.f32 %v108, %v1229
    %v1231 = vpop.f32.mrb[0].mxu0
    %1232 = vdwg.mxu0
    %v1234 = vsel %vm334, %v1017, 0
    %1236 = vmatprep.subr.mxu0 0.0
    %1237 = vmatpush1.msra.mxu0 %v73
    %1238 = vmatprep.subr.mxu0 0.0
    %1239 = vmatpush1.msra.mxu0 %v74
    %1240 = vmatprep.subr.mxu0 0.0
    %1241 = vmatpush1.msra.mxu0 %v75
    %1242 = vmatprep.subr.mxu0 0.0
    %1243 = vmatpush1.msra.mxu0 %v76
    %1244 = vmatprep.subr.mxu0 0.0
    %1245 = vmatpush1.msra.mxu0 0.0
    %1246 = vmatprep.subr.mxu0 0.0
    %1247 = vmatpush1.msra.mxu0 0.0
    %1248 = vmatprep.subr.mxu0 0.0
    %1249 = vmatpush1.msra.mxu0 0.0
    %1250 = vmatprep.subr.mxu0 0.0
    %1251 = vmatpush1.msra.mxu0 0.0
    %1252 = vmatprep.subr.mxu0 0.0
    %1253 = vmatpush1.msra.mxu0 0.0
    %1254 = vmatprep.subr.mxu0 0.0
    %1255 = vmatpush1.msra.mxu0 0.0
    %1256 = vmatprep.subr.mxu0 0.0
    %1257 = vmatpush1.msra.mxu0 0.0
    %1258 = vmatprep.subr.mxu0 0.0
    %1259 = vmatpush1.msra.mxu0 0.0
    %1260 = vmatprep.subr.mxu0 0.0
    %1261 = vmatpush1.msra.mxu0 0.0
    %1262 = vmatprep.subr.mxu0 0.0
    %1263 = vmatpush1.msra.mxu0 0.0
    %1264 = vmatprep.subr.mxu0 0.0
    %1265 = vmatpush1.msra.mxu0 0.0
    %1266 = vmatprep.subr.mxu0 0.0
    %1267 = vmatpush1.msra.mxu0 0.0
    %1268 = vmatprep.subr.mxu0 0.0
    %1269 = vmatpush1.msra.mxu0 0.0
    %1270 = vmatprep.subr.mxu0 0.0
    %1271 = vmatpush1.msra.mxu0 0.0
    %1272 = vmatprep.subr.mxu0 0.0
    %1273 = vmatpush1.msra.mxu0 0.0
    %1274 = vmatprep.subr.mxu0 0.0
    %1275 = vmatpush1.msra.mxu0 0.0
    %1276 = vmatprep.subr.mxu0 0.0
    %1277 = vmatpush1.msra.mxu0 0.0
    %1278 = vmatprep.subr.mxu0 0.0
    %1279 = vmatpush1.msra.mxu0 0.0
    %1280 = vmatprep.subr.mxu0 0.0
    %1281 = vmatpush1.msra.mxu0 0.0
    %1282 = vmatprep.subr.mxu0 0.0
    %1283 = vmatpush1.msra.mxu0 0.0
    %1284 = vmatprep.subr.mxu0 0.0
    %1285 = vmatpush1.msra.mxu0 0.0
    %1286 = vmatprep.subr.mxu0 0.0
    %1287 = vmatpush1.msra.mxu0 0.0
    %1288 = vmatprep.subr.mxu0 0.0
    %1289 = vmatpush1.msra.mxu0 0.0
    %1290 = vmatprep.subr.mxu0 0.0
    %1291 = vmatpush1.msra.mxu0 0.0
    %1292 = vmatprep.subr.mxu0 0.0
    %1293 = vmatpush1.msra.mxu0 0.0
    %1294 = vmatprep.subr.mxu0 0.0
    %1295 = vmatpush1.msra.mxu0 0.0
    %1296 = vmatprep.subr.mxu0 0.0
    %1297 = vmatpush1.msra.mxu0 0.0
    %1298 = vmatprep.subr.mxu0 0.0
    %1299 = vmatpush1.msra.mxu0 0.0
    %1300 = vmatprep.mubr.f32.mxu0 0.0
    %1301 = vmatmul.mubr.f32.gmra.mrb[0].mxu0 %v1234
    %v1302 = vpop.f32.mrb[0].mxu0
    %v1303 = vadd.f32 0.0, %v1302
    %v1304 = vpop.f32.mrb[0].mxu0
    %1305 = vdwg.mxu0
    %1306 = vmatprep.subr.mxu0 0.0
    %1307 = vmatpush1.msra.mxu0 %v78
    %1308 = vmatprep.subr.mxu0 0.0
    %1309 = vmatpush1.msra.mxu0 %v79
    %1310 = vmatprep.subr.mxu0 0.0
    %1311 = vmatpush1.msra.mxu0 %v80
    %1312 = vmatprep.subr.mxu0 0.0
    %1313 = vmatpush1.msra.mxu0 %v81
    %1314 = vmatprep.subr.mxu0 0.0
    %1315 = vmatpush1.msra.mxu0 0.0
    %1316 = vmatprep.subr.mxu0 0.0
    %1317 = vmatpush1.msra.mxu0 0.0
    %1318 = vmatprep.subr.mxu0 0.0
    %1319 = vmatpush1.msra.mxu0 0.0
    %1320 = vmatprep.subr.mxu0 0.0
    %1321 = vmatpush1.msra.mxu0 0.0
    %1322 = vmatprep.subr.mxu0 0.0
    %1323 = vmatpush1.msra.mxu0 0.0
    %1324 = vmatprep.subr.mxu0 0.0
    %1325 = vmatpush1.msra.mxu0 0.0
    %1326 = vmatprep.subr.mxu0 0.0
    %1327 = vmatpush1.msra.mxu0 0.0
    %1328 = vmatprep.subr.mxu0 0.0
    %1329 = vmatpush1.msra.mxu0 0.0
    %1330 = vmatprep.subr.mxu0 0.0
    %1331 = vmatpush1.msra.mxu0 0.0
    %1332 = vmatprep.subr.mxu0 0.0
    %1333 = vmatpush1.msra.mxu0 0.0
    %1334 = vmatprep.subr.mxu0 0.0
    %1335 = vmatpush1.msra.mxu0 0.0
    %1336 = vmatprep.subr.mxu0 0.0
    %1337 = vmatpush1.msra.mxu0 0.0
    %1338 = vmatprep.subr.mxu0 0.0
    %1339 = vmatpush1.msra.mxu0 0.0
    %1340 = vmatprep.subr.mxu0 0.0
    %1341 = vmatpush1.msra.mxu0 0.0
    %1342 = vmatprep.subr.mxu0 0.0
    %1343 = vmatpush1.msra.mxu0 0.0
    %1344 = vmatprep.subr.mxu0 0.0
    %1345 = vmatpush1.msra.mxu0 0.0
    %1346 = vmatprep.subr.mxu0 0.0
    %1347 = vmatpush1.msra.mxu0 0.0
    %1348 = vmatprep.subr.mxu0 0.0
    %1349 = vmatpush1.msra.mxu0 0.0
    %1350 = vmatprep.subr.mxu0 0.0
    %1351 = vmatpush1.msra.mxu0 0.0
    %1352 = vmatprep.subr.mxu0 0.0
    %1353 = vmatpush1.msra.mxu0 0.0
    %1354 = vmatprep.subr.mxu0 0.0
    %1355 = vmatpush1.msra.mxu0 0.0
    %1356 = vmatprep.subr.mxu0 0.0
    %1357 = vmatpush1.msra.mxu0 0.0
    %1358 = vmatprep.subr.mxu0 0.0
    %1359 = vmatpush1.msra.mxu0 0.0
    %1360 = vmatprep.subr.mxu0 0.0
    %1361 = vmatpush1.msra.mxu0 0.0
    %1362 = vmatprep.subr.mxu0 0.0
    %1363 = vmatpush1.msra.mxu0 0.0
    %1364 = vmatprep.subr.mxu0 0.0
    %1365 = vmatpush1.msra.mxu0 0.0
    %1366 = vmatprep.subr.mxu0 0.0
    %1367 = vmatpush1.msra.mxu0 0.0
    %1368 = vmatprep.subr.mxu0 0.0
    %1369 = vmatpush1.msra.mxu0 0.0
    %1370 = vmatprep.mubr.f32.mxu0 0.0
    %1371 = vmatmul.mubr.f32.gmra.mrb[0].mxu0 %v1234
    %v1372 = vpop.f32.mrb[0].mxu0
    %v1373 = vadd.f32 0.0, %v1372
    %v1374 = vpop.f32.mrb[0].mxu0
    %1375 = vdwg.mxu0
    %v1376 = vadd.f32 %v1090, %v1303
    %v1377 = vxor.u32 %v1376, 2147483648
    %v1378 = vmul.f32 %v1377, 1.442695
    %v1379 = vpow.pop %v1378
    %v1380 = vadd.f32 %v1379, 1.0
    %v1381 = vrcp.pop %v1380
    %v1382 = vmul.f32 1.0, %v1381
    %v1383 = vadd.f32 %v1160, %v1373
    %v1384 = vxor.u32 %v1383, 2147483648
    %v1385 = vmul.f32 %v1384, 1.442695
    %v1386 = vpow.pop %v1385
    %v1387 = vadd.f32 %v1386, 1.0
    %v1388 = vrcp.pop %v1387
    %v1389 = vmul.f32 1.0, %v1388
    %1390 = vmatprep.subr.mxu0 0.0
    %1391 = vmatpush1.msra.mxu0 %v83
    %1392 = vmatprep.subr.mxu0 0.0
    %1393 = vmatpush1.msra.mxu0 %v84
    %1394 = vmatprep.subr.mxu0 0.0
    %1395 = vmatpush1.msra.mxu0 %v85
    %1396 = vmatprep.subr.mxu0 0.0
    %1397 = vmatpush1.msra.mxu0 %v86
    %1398 = vmatprep.subr.mxu0 0.0
    %1399 = vmatpush1.msra.mxu0 0.0
    %1400 = vmatprep.subr.mxu0 0.0
    %1401 = vmatpush1.msra.mxu0 0.0
    %1402 = vmatprep.subr.mxu0 0.0
    %1403 = vmatpush1.msra.mxu0 0.0
    %1404 = vmatprep.subr.mxu0 0.0
    %1405 = vmatpush1.msra.mxu0 0.0
    %1406 = vmatprep.subr.mxu0 0.0
    %1407 = vmatpush1.msra.mxu0 0.0
    %1408 = vmatprep.subr.mxu0 0.0
    %1409 = vmatpush1.msra.mxu0 0.0
    %1410 = vmatprep.subr.mxu0 0.0
    %1411 = vmatpush1.msra.mxu0 0.0
    %1412 = vmatprep.subr.mxu0 0.0
    %1413 = vmatpush1.msra.mxu0 0.0
    %1414 = vmatprep.subr.mxu0 0.0
    %1415 = vmatpush1.msra.mxu0 0.0
    %1416 = vmatprep.subr.mxu0 0.0
    %1417 = vmatpush1.msra.mxu0 0.0
    %1418 = vmatprep.subr.mxu0 0.0
    %1419 = vmatpush1.msra.mxu0 0.0
    %1420 = vmatprep.subr.mxu0 0.0
    %1421 = vmatpush1.msra.mxu0 0.0
    %1422 = vmatprep.subr.mxu0 0.0
    %1423 = vmatpush1.msra.mxu0 0.0
    %1424 = vmatprep.subr.mxu0 0.0
    %1425 = vmatpush1.msra.mxu0 0.0
    %1426 = vmatprep.subr.mxu0 0.0
    %1427 = vmatpush1.msra.mxu0 0.0
    %1428 = vmatprep.subr.mxu0 0.0
    %1429 = vmatpush1.msra.mxu0 0.0
    %1430 = vmatprep.subr.mxu0 0.0
    %1431 = vmatpush1.msra.mxu0 0.0
    %1432 = vmatprep.subr.mxu0 0.0
    %1433 = vmatpush1.msra.mxu0 0.0
    %1434 = vmatprep.subr.mxu0 0.0
    %1435 = vmatpush1.msra.mxu0 0.0
    %1436 = vmatprep.subr.mxu0 0.0
    %1437 = vmatpush1.msra.mxu0 0.0
    %1438 = vmatprep.subr.mxu0 0.0
    %1439 = vmatpush1.msra.mxu0 0.0
    %1440 = vmatprep.subr.mxu0 0.0
    %1441 = vmatpush1.msra.mxu0 0.0
    %1442 = vmatprep.subr.mxu0 0.0
    %1443 = vmatpush1.msra.mxu0 0.0
    %1444 = vmatprep.subr.mxu0 0.0
    %1445 = vmatpush1.msra.mxu0 0.0
    %1446 = vmatprep.subr.mxu0 0.0
    %1447 = vmatpush1.msra.mxu0 0.0
    %1448 = vmatprep.subr.mxu0 0.0
    %1449 = vmatpush1.msra.mxu0 0.0
    %1450 = vmatprep.subr.mxu0 0.0
    %1451 = vmatpush1.msra.mxu0 0.0
    %1452 = vmatprep.subr.mxu0 0.0
    %1453 = vmatpush1.msra.mxu0 0.0
    %1454 = vmatprep.mubr.f32.mxu0 0.0
    %1455 = vmatmul.mubr.f32.gmra.mrb[0].mxu0 %v1234
    %v1456 = vpop.f32.mrb[0].mxu0
    %v1457 = vadd.f32 %v116, %v1456
    %v1458 = vpop.f32.mrb[0].mxu0
    %1459 = vdwg.mxu0
    %v1460 = vmul.f32 %v1382, %v1457
    %v1461 = vadd.f32 %v1230, %v1460
    %v1462 = vtanh.pop %v1461
    %v1463 = vsub.f32 1.0, %v1389
    %v1464 = vmul.f32 %v1463, %v1462
    %v1465 = vmul.f32 %v1389, %v1017
    %v1466 = vadd.f32 %v1464, %v1465
    %s1467 = scalar_lea.vmem [#allocation2], 6
    %v1468 = vld [vmem:[%s1467] sm:$0x3]
    %v1470 = vsel %vm120, %v1468, 0
    %1472 = vmatprep.subr.mxu0 0.0
    %1473 = vmatpush1.msra.mxu0 %v65
    %1474 = vmatprep.subr.mxu0 0.0
    %1475 = vmatpush1.msra.mxu0 %v66
    %1476 = vmatprep.subr.mxu0 0.0
    %1477 = vmatpush1.msra.mxu0 0.0
    %1478 = vmatprep.subr.mxu0 0.0
    %1479 = vmatpush1.msra.mxu0 0.0
    %1480 = vmatprep.subr.mxu0 0.0
    %1481 = vmatpush1.msra.mxu0 0.0
    %1482 = vmatprep.subr.mxu0 0.0
    %1483 = vmatpush1.msra.mxu0 0.0
    %1484 = vmatprep.subr.mxu0 0.0
    %1485 = vmatpush1.msra.mxu0 0.0
    %1486 = vmatprep.subr.mxu0 0.0
    %1487 = vmatpush1.msra.mxu0 0.0
    %1488 = vmatprep.subr.mxu0 0.0
    %1489 = vmatpush1.msra.mxu0 0.0
    %1490 = vmatprep.subr.mxu0 0.0
    %1491 = vmatpush1.msra.mxu0 0.0
    %1492 = vmatprep.subr.mxu0 0.0
    %1493 = vmatpush1.msra.mxu0 0.0
    %1494 = vmatprep.subr.mxu0 0.0
    %1495 = vmatpush1.msra.mxu0 0.0
    %1496 = vmatprep.subr.mxu0 0.0
    %1497 = vmatpush1.msra.mxu0 0.0
    %1498 = vmatprep.subr.mxu0 0.0
    %1499 = vmatpush1.msra.mxu0 0.0
    %1500 = vmatprep.subr.mxu0 0.0
    %1501 = vmatpush1.msra.mxu0 0.0
    %1502 = vmatprep.subr.mxu0 0.0
    %1503 = vmatpush1.msra.mxu0 0.0
    %1504 = vmatprep.subr.mxu0 0.0
    %1505 = vmatpush1.msra.mxu0 0.0
    %1506 = vmatprep.subr.mxu0 0.0
    %1507 = vmatpush1.msra.mxu0 0.0
    %1508 = vmatprep.subr.mxu0 0.0
    %1509 = vmatpush1.msra.mxu0 0.0
    %1510 = vmatprep.subr.mxu0 0.0
    %1511 = vmatpush1.msra.mxu0 0.0
    %1512 = vmatprep.subr.mxu0 0.0
    %1513 = vmatpush1.msra.mxu0 0.0
    %1514 = vmatprep.subr.mxu0 0.0
    %1515 = vmatpush1.msra.mxu0 0.0
    %1516 = vmatprep.subr.mxu0 0.0
    %1517 = vmatpush1.msra.mxu0 0.0
    %1518 = vmatprep.subr.mxu0 0.0
    %1519 = vmatpush1.msra.mxu0 0.0
    %1520 = vmatprep.subr.mxu0 0.0
    %1521 = vmatpush1.msra.mxu0 0.0
    %1522 = vmatprep.subr.mxu0 0.0
    %1523 = vmatpush1.msra.mxu0 0.0
    %1524 = vmatprep.subr.mxu0 0.0
    %1525 = vmatpush1.msra.mxu0 0.0
    %1526 = vmatprep.subr.mxu0 0.0
    %1527 = vmatpush1.msra.mxu0 0.0
    %1528 = vmatprep.subr.mxu0 0.0
    %1529 = vmatpush1.msra.mxu0 0.0
    %1530 = vmatprep.subr.mxu0 0.0
    %1531 = vmatpush1.msra.mxu0 0.0
    %1532 = vmatprep.subr.mxu0 0.0
    %1533 = vmatpush1.msra.mxu0 0.0
    %1534 = vmatprep.subr.mxu0 0.0
    %1535 = vmatpush1.msra.mxu0 0.0
    %1536 = vmatprep.mubr.f32.mxu0 0.0
    %1537 = vmatmul.mubr.f32.gmra.mrb[0].mxu0 %v1470
    %v1538 = vpop.f32.mrb[0].mxu0
    %v1539 = vadd.f32 %v92, %v1538
    %v1540 = vpop.f32.mrb[0].mxu0
    %1541 = vdwg.mxu0
    %1542 = vmatprep.subr.mxu0 0.0
    %1543 = vmatpush1.msra.mxu0 %v68
    %1544 = vmatprep.subr.mxu0 0.0
    %1545 = vmatpush1.msra.mxu0 %v69
    %1546 = vmatprep.subr.mxu0 0.0
    %1547 = vmatpush1.msra.mxu0 0.0
    %1548 = vmatprep.subr.mxu0 0.0
    %1549 = vmatpush1.msra.mxu0 0.0
    %1550 = vmatprep.subr.mxu0 0.0
    %1551 = vmatpush1.msra.mxu0 0.0
    %1552 = vmatprep.subr.mxu0 0.0
    %1553 = vmatpush1.msra.mxu0 0.0
    %1554 = vmatprep.subr.mxu0 0.0
    %1555 = vmatpush1.msra.mxu0 0.0
    %1556 = vmatprep.subr.mxu0 0.0
    %1557 = vmatpush1.msra.mxu0 0.0
    %1558 = vmatprep.subr.mxu0 0.0
    %1559 = vmatpush1.msra.mxu0 0.0
    %1560 = vmatprep.subr.mxu0 0.0
    %1561 = vmatpush1.msra.mxu0 0.0
    %1562 = vmatprep.subr.mxu0 0.0
    %1563 = vmatpush1.msra.mxu0 0.0
    %1564 = vmatprep.subr.mxu0 0.0
    %1565 = vmatpush1.msra.mxu0 0.0
    %1566 = vmatprep.subr.mxu0 0.0
    %1567 = vmatpush1.msra.mxu0 0.0
    %1568 = vmatprep.subr.mxu0 0.0
    %1569 = vmatpush1.msra.mxu0 0.0
    %1570 = vmatprep.subr.mxu0 0.0
    %1571 = vmatpush1.msra.mxu0 0.0
    %1572 = vmatprep.subr.mxu0 0.0
    %1573 = vmatpush1.msra.mxu0 0.0
    %1574 = vmatprep.subr.mxu0 0.0
    %1575 = vmatpush1.msra.mxu0 0.0
    %1576 = vmatprep.subr.mxu0 0.0
    %1577 = vmatpush1.msra.mxu0 0.0
    %1578 = vmatprep.subr.mxu0 0.0
    %1579 = vmatpush1.msra.mxu0 0.0
    %1580 = vmatprep.subr.mxu0 0.0
    %1581 = vmatpush1.msra.mxu0 0.0
    %1582 = vmatprep.subr.mxu0 0.0
    %1583 = vmatpush1.msra.mxu0 0.0
    %1584 = vmatprep.subr.mxu0 0.0
    %1585 = vmatpush1.msra.mxu0 0.0
    %1586 = vmatprep.subr.mxu0 0.0
    %1587 = vmatpush1.msra.mxu0 0.0
    %1588 = vmatprep.subr.mxu0 0.0
    %1589 = vmatpush1.msra.mxu0 0.0
    %1590 = vmatprep.subr.mxu0 0.0
    %1591 = vmatpush1.msra.mxu0 0.0
    %1592 = vmatprep.subr.mxu0 0.0
    %1593 = vmatpush1.msra.mxu0 0.0
    %1594 = vmatprep.subr.mxu0 0.0
    %1595 = vmatpush1.msra.mxu0 0.0
    %1596 = vmatprep.subr.mxu0 0.0
    %1597 = vmatpush1.msra.mxu0 0.0
    %1598 = vmatprep.subr.mxu0 0.0
    %1599 = vmatpush1.msra.mxu0 0.0
    %1600 = vmatprep.subr.mxu0 0.0
    %1601 = vmatpush1.msra.mxu0 0.0
    %1602 = vmatprep.subr.mxu0 0.0
    %1603 = vmatpush1.msra.mxu0 0.0
    %1604 = vmatprep.subr.mxu0 0.0
    %1605 = vmatpush1.msra.mxu0 0.0
    %1606 = vmatprep.mubr.f32.mxu0 0.0
    %1607 = vmatmul.mubr.f32.gmra.mrb[0].mxu0 %v1470
    %v1608 = vpop.f32.mrb[0].mxu0
    %v1609 = vadd.f32 %v100, %v1608
    %v1610 = vpop.f32.mrb[0].mxu0
    %1611 = vdwg.mxu0
    %1612 = vmatprep.subr.mxu0 0.0
    %1613 = vmatpush1.msra.mxu0 %v71
    %1614 = vmatprep.subr.mxu0 0.0
    %1615 = vmatpush1.msra.mxu0 %v72
    %1616 = vmatprep.subr.mxu0 0.0
    %1617 = vmatpush1.msra.mxu0 0.0
    %1618 = vmatprep.subr.mxu0 0.0
    %1619 = vmatpush1.msra.mxu0 0.0
    %1620 = vmatprep.subr.mxu0 0.0
    %1621 = vmatpush1.msra.mxu0 0.0
    %1622 = vmatprep.subr.mxu0 0.0
    %1623 = vmatpush1.msra.mxu0 0.0
    %1624 = vmatprep.subr.mxu0 0.0
    %1625 = vmatpush1.msra.mxu0 0.0
    %1626 = vmatprep.subr.mxu0 0.0
    %1627 = vmatpush1.msra.mxu0 0.0
    %1628 = vmatprep.subr.mxu0 0.0
    %1629 = vmatpush1.msra.mxu0 0.0
    %1630 = vmatprep.subr.mxu0 0.0
    %1631 = vmatpush1.msra.mxu0 0.0
    %1632 = vmatprep.subr.mxu0 0.0
    %1633 = vmatpush1.msra.mxu0 0.0
    %1634 = vmatprep.subr.mxu0 0.0
    %1635 = vmatpush1.msra.mxu0 0.0
    %1636 = vmatprep.subr.mxu0 0.0
    %1637 = vmatpush1.msra.mxu0 0.0
    %1638 = vmatprep.subr.mxu0 0.0
    %1639 = vmatpush1.msra.mxu0 0.0
    %1640 = vmatprep.subr.mxu0 0.0
    %1641 = vmatpush1.msra.mxu0 0.0
    %1642 = vmatprep.subr.mxu0 0.0
    %1643 = vmatpush1.msra.mxu0 0.0
    %1644 = vmatprep.subr.mxu0 0.0
    %1645 = vmatpush1.msra.mxu0 0.0
    %1646 = vmatprep.subr.mxu0 0.0
    %1647 = vmatpush1.msra.mxu0 0.0
    %1648 = vmatprep.subr.mxu0 0.0
    %1649 = vmatpush1.msra.mxu0 0.0
    %1650 = vmatprep.subr.mxu0 0.0
    %1651 = vmatpush1.msra.mxu0 0.0
    %1652 = vmatprep.subr.mxu0 0.0
    %1653 = vmatpush1.msra.mxu0 0.0
    %1654 = vmatprep.subr.mxu0 0.0
    %1655 = vmatpush1.msra.mxu0 0.0
    %1656 = vmatprep.subr.mxu0 0.0
    %1657 = vmatpush1.msra.mxu0 0.0
    %1658 = vmatprep.subr.mxu0 0.0
    %1659 = vmatpush1.msra.mxu0 0.0
    %1660 = vmatprep.subr.mxu0 0.0
    %1661 = vmatpush1.msra.mxu0 0.0
    %1662 = vmatprep.subr.mxu0 0.0
    %1663 = vmatpush1.msra.mxu0 0.0
    %1664 = vmatprep.subr.mxu0 0.0
    %1665 = vmatpush1.msra.mxu0 0.0
    %1666 = vmatprep.subr.mxu0 0.0
    %1667 = vmatpush1.msra.mxu0 0.0
    %1668 = vmatprep.subr.mxu0 0.0
    %1669 = vmatpush1.msra.mxu0 0.0
    %1670 = vmatprep.subr.mxu0 0.0
    %1671 = vmatpush1.msra.mxu0 0.0
    %1672 = vmatprep.subr.mxu0 0.0
    %1673 = vmatpush1.msra.mxu0 0.0
    %1674 = vmatprep.subr.mxu0 0.0
    %1675 = vmatpush1.msra.mxu0 0.0
    %1676 = vmatprep.mubr.f32.mxu0 0.0
    %1677 = vmatmul.mubr.f32.gmra.mrb[0].mxu0 %v1470
    %v1678 = vpop.f32.mrb[0].mxu0
    %v1679 = vadd.f32 %v108, %v1678
    %v1680 = vpop.f32.mrb[0].mxu0
    %1681 = vdwg.mxu0
    %v1683 = vsel %vm334, %v1466, 0
    %1685 = vmatprep.subr.mxu0 0.0
    %1686 = vmatpush1.msra.mxu0 %v73
    %1687 = vmatprep.subr.mxu0 0.0
    %1688 = vmatpush1.msra.mxu0 %v74
    %1689 = vmatprep.subr.mxu0 0.0
    %1690 = vmatpush1.msra.mxu0 %v75
    %1691 = vmatprep.subr.mxu0 0.0
    %1692 = vmatpush1.msra.mxu0 %v76
    %1693 = vmatprep.subr.mxu0 0.0
    %1694 = vmatpush1.msra.mxu0 0.0
    %1695 = vmatprep.subr.mxu0 0.0
    %1696 = vmatpush1.msra.mxu0 0.0
    %1697 = vmatprep.subr.mxu0 0.0
    %1698 = vmatpush1.msra.mxu0 0.0
    %1699 = vmatprep.subr.mxu0 0.0
    %1700 = vmatpush1.msra.mxu0 0.0
    %1701 = vmatprep.subr.mxu0 0.0
    %1702 = vmatpush1.msra.mxu0 0.0
    %1703 = vmatprep.subr.mxu0 0.0
    %1704 = vmatpush1.msra.mxu0 0.0
    %1705 = vmatprep.subr.mxu0 0.0
    %1706 = vmatpush1.msra.mxu0 0.0
    %1707 = vmatprep.subr.mxu0 0.0
    %1708 = vmatpush1.msra.mxu0 0.0
    %1709 = vmatprep.subr.mxu0 0.0
    %1710 = vmatpush1.msra.mxu0 0.0
    %1711 = vmatprep.subr.mxu0 0.0
    %1712 = vmatpush1.msra.mxu0 0.0
    %1713 = vmatprep.subr.mxu0 0.0
    %1714 = vmatpush1.msra.mxu0 0.0
    %1715 = vmatprep.subr.mxu0 0.0
    %1716 = vmatpush1.msra.mxu0 0.0
    %1717 = vmatprep.subr.mxu0 0.0
    %1718 = vmatpush1.msra.mxu0 0.0
    %1719 = vmatprep.subr.mxu0 0.0
    %1720 = vmatpush1.msra.mxu0 0.0
    %1721 = vmatprep.subr.mxu0 0.0
    %1722 = vmatpush1.msra.mxu0 0.0
    %1723 = vmatprep.subr.mxu0 0.0
    %1724 = vmatpush1.msra.mxu0 0.0
    %1725 = vmatprep.subr.mxu0 0.0
    %1726 = vmatpush1.msra.mxu0 0.0
    %1727 = vmatprep.subr.mxu0 0.0
    %1728 = vmatpush1.msra.mxu0 0.0
    %1729 = vmatprep.subr.mxu0 0.0
    %1730 = vmatpush1.msra.mxu0 0.0
    %1731 = vmatprep.subr.mxu0 0.0
    %1732 = vmatpush1.msra.mxu0 0.0
    %1733 = vmatprep.subr.mxu0 0.0
    %1734 = vmatpush1.msra.mxu0 0.0
    %1735 = vmatprep.subr.mxu0 0.0
    %1736 = vmatpush1.msra.mxu0 0.0
    %1737 = vmatprep.subr.mxu0 0.0
    %1738 = vmatpush1.msra.mxu0 0.0
    %1739 = vmatprep.subr.mxu0 0.0
    %1740 = vmatpush1.msra.mxu0 0.0
    %1741 = vmatprep.subr.mxu0 0.0
    %1742 = vmatpush1.msra.mxu0 0.0
    %1743 = vmatprep.subr.mxu0 0.0
    %1744 = vmatpush1.msra.mxu0 0.0
    %1745 = vmatprep.subr.mxu0 0.0
    %1746 = vmatpush1.msra.mxu0 0.0
    %1747 = vmatprep.subr.mxu0 0.0
    %1748 = vmatpush1.msra.mxu0 0.0
    %1749 = vmatprep.mubr.f32.mxu0 0.0
    %1750 = vmatmul.mubr.f32.gmra.mrb[0].mxu0 %v1683
    %v1751 = vpop.f32.mrb[0].mxu0
    %v1752 = vadd.f32 0.0, %v1751
    %v1753 = vpop.f32.mrb[0].mxu0
    %1754 = vdwg.mxu0
    %1755 = vmatprep.subr.mxu0 0.0
    %1756 = vmatpush1.msra.mxu0 %v78
    %1757 = vmatprep.subr.mxu0 0.0
    %1758 = vmatpush1.msra.mxu0 %v79
    %1759 = vmatprep.subr.mxu0 0.0
    %1760 = vmatpush1.msra.mxu0 %v80
    %1761 = vmatprep.subr.mxu0 0.0
    %1762 = vmatpush1.msra.mxu0 %v81
    %1763 = vmatprep.subr.mxu0 0.0
    %1764 = vmatpush1.msra.mxu0 0.0
    %1765 = vmatprep.subr.mxu0 0.0
    %1766 = vmatpush1.msra.mxu0 0.0
    %1767 = vmatprep.subr.mxu0 0.0
    %1768 = vmatpush1.msra.mxu0 0.0
    %1769 = vmatprep.subr.mxu0 0.0
    %1770 = vmatpush1.msra.mxu0 0.0
    %1771 = vmatprep.subr.mxu0 0.0
    %1772 = vmatpush1.msra.mxu0 0.0
    %1773 = vmatprep.subr.mxu0 0.0
    %1774 = vmatpush1.msra.mxu0 0.0
    %1775 = vmatprep.subr.mxu0 0.0
    %1776 = vmatpush1.msra.mxu0 0.0
    %1777 = vmatprep.subr.mxu0 0.0
    %1778 = vmatpush1.msra.mxu0 0.0
    %1779 = vmatprep.subr.mxu0 0.0
    %1780 = vmatpush1.msra.mxu0 0.0
    %1781 = vmatprep.subr.mxu0 0.0
    %1782 = vmatpush1.msra.mxu0 0.0
    %1783 = vmatprep.subr.mxu0 0.0
    %1784 = vmatpush1.msra.mxu0 0.0
    %1785 = vmatprep.subr.mxu0 0.0
    %1786 = vmatpush1.msra.mxu0 0.0
    %1787 = vmatprep.subr.mxu0 0.0
    %1788 = vmatpush1.msra.mxu0 0.0
    %1789 = vmatprep.subr.mxu0 0.0
    %1790 = vmatpush1.msra.mxu0 0.0
    %1791 = vmatprep.subr.mxu0 0.0
    %1792 = vmatpush1.msra.mxu0 0.0
    %1793 = vmatprep.subr.mxu0 0.0
    %1794 = vmatpush1.msra.mxu0 0.0
    %1795 = vmatprep.subr.mxu0 0.0
    %1796 = vmatpush1.msra.mxu0 0.0
    %1797 = vmatprep.subr.mxu0 0.0
    %1798 = vmatpush1.msra.mxu0 0.0
    %1799 = vmatprep.subr.mxu0 0.0
    %1800 = vmatpush1.msra.mxu0 0.0
    %1801 = vmatprep.subr.mxu0 0.0
    %1802 = vmatpush1.msra.mxu0 0.0
    %1803 = vmatprep.subr.mxu0 0.0
    %1804 = vmatpush1.msra.mxu0 0.0
    %1805 = vmatprep.subr.mxu0 0.0
    %1806 = vmatpush1.msra.mxu0 0.0
    %1807 = vmatprep.subr.mxu0 0.0
    %1808 = vmatpush1.msra.mxu0 0.0
    %1809 = vmatprep.subr.mxu0 0.0
    %1810 = vmatpush1.msra.mxu0 0.0
    %1811 = vmatprep.subr.mxu0 0.0
    %1812 = vmatpush1.msra.mxu0 0.0
    %1813 = vmatprep.subr.mxu0 0.0
    %1814 = vmatpush1.msra.mxu0 0.0
    %1815 = vmatprep.subr.mxu0 0.0
    %1816 = vmatpush1.msra.mxu0 0.0
    %1817 = vmatprep.subr.mxu0 0.0
    %1818 = vmatpush1.msra.mxu0 0.0
    %1819 = vmatprep.mubr.f32.mxu0 0.0
    %1820 = vmatmul.mubr.f32.gmra.mrb[0].mxu0 %v1683
    %v1821 = vpop.f32.mrb[0].mxu0
    %v1822 = vadd.f32 0.0, %v1821
    %v1823 = vpop.f32.mrb[0].mxu0
    %1824 = vdwg.mxu0
    %v1825 = vadd.f32 %v1539, %v1752
    %v1826 = vxor.u32 %v1825, 2147483648
    %v1827 = vmul.f32 %v1826, 1.442695
    %v1828 = vpow.pop %v1827
    %v1829 = vadd.f32 %v1828, 1.0
    %v1830 = vrcp.pop %v1829
    %v1831 = vmul.f32 1.0, %v1830
    %v1832 = vadd.f32 %v1609, %v1822
    %v1833 = vxor.u32 %v1832, 2147483648
    %v1834 = vmul.f32 %v1833, 1.442695
    %v1835 = vpow.pop %v1834
    %v1836 = vadd.f32 %v1835, 1.0
    %v1837 = vrcp.pop %v1836
    %v1838 = vmul.f32 1.0, %v1837
    %1839 = vmatprep.subr.mxu0 0.0
    %1840 = vmatpush1.msra.mxu0 %v83
    %1841 = vmatprep.subr.mxu0 0.0
    %1842 = vmatpush1.msra.mxu0 %v84
    %1843 = vmatprep.subr.mxu0 0.0
    %1844 = vmatpush1.msra.mxu0 %v85
    %1845 = vmatprep.subr.mxu0 0.0
    %1846 = vmatpush1.msra.mxu0 %v86
    %1847 = vmatprep.subr.mxu0 0.0
    %1848 = vmatpush1.msra.mxu0 0.0
    %1849 = vmatprep.subr.mxu0 0.0
    %1850 = vmatpush1.msra.mxu0 0.0
    %1851 = vmatprep.subr.mxu0 0.0
    %1852 = vmatpush1.msra.mxu0 0.0
    %1853 = vmatprep.subr.mxu0 0.0
    %1854 = vmatpush1.msra.mxu0 0.0
    %1855 = vmatprep.subr.mxu0 0.0
    %1856 = vmatpush1.msra.mxu0 0.0
    %1857 = vmatprep.subr.mxu0 0.0
    %1858 = vmatpush1.msra.mxu0 0.0
    %1859 = vmatprep.subr.mxu0 0.0
    %1860 = vmatpush1.msra.mxu0 0.0
    %1861 = vmatprep.subr.mxu0 0.0
    %1862 = vmatpush1.msra.mxu0 0.0
    %1863 = vmatprep.subr.mxu0 0.0
    %1864 = vmatpush1.msra.mxu0 0.0
    %1865 = vmatprep.subr.mxu0 0.0
    %1866 = vmatpush1.msra.mxu0 0.0
    %1867 = vmatprep.subr.mxu0 0.0
    %1868 = vmatpush1.msra.mxu0 0.0
    %1869 = vmatprep.subr.mxu0 0.0
    %1870 = vmatpush1.msra.mxu0 0.0
    %1871 = vmatprep.subr.mxu0 0.0
    %1872 = vmatpush1.msra.mxu0 0.0
    %1873 = vmatprep.subr.mxu0 0.0
    %1874 = vmatpush1.msra.mxu0 0.0
    %1875 = vmatprep.subr.mxu0 0.0
    %1876 = vmatpush1.msra.mxu0 0.0
    %1877 = vmatprep.subr.mxu0 0.0
    %1878 = vmatpush1.msra.mxu0 0.0
    %1879 = vmatprep.subr.mxu0 0.0
    %1880 = vmatpush1.msra.mxu0 0.0
    %1881 = vmatprep.subr.mxu0 0.0
    %1882 = vmatpush1.msra.mxu0 0.0
    %1883 = vmatprep.subr.mxu0 0.0
    %1884 = vmatpush1.msra.mxu0 0.0
    %1885 = vmatprep.subr.mxu0 0.0
    %1886 = vmatpush1.msra.mxu0 0.0
    %1887 = vmatprep.subr.mxu0 0.0
    %1888 = vmatpush1.msra.mxu0 0.0
    %1889 = vmatprep.subr.mxu0 0.0
    %1890 = vmatpush1.msra.mxu0 0.0
    %1891 = vmatprep.subr.mxu0 0.0
    %1892 = vmatpush1.msra.mxu0 0.0
    %1893 = vmatprep.subr.mxu0 0.0
    %1894 = vmatpush1.msra.mxu0 0.0
    %1895 = vmatprep.subr.mxu0 0.0
    %1896 = vmatpush1.msra.mxu0 0.0
    %1897 = vmatprep.subr.mxu0 0.0
    %1898 = vmatpush1.msra.mxu0 0.0
    %1899 = vmatprep.subr.mxu0 0.0
    %1900 = vmatpush1.msra.mxu0 0.0
    %1901 = vmatprep.subr.mxu0 0.0
    %1902 = vmatpush1.msra.mxu0 0.0
    %1903 = vmatprep.mubr.f32.mxu0 0.0
    %1904 = vmatmul.mubr.f32.gmra.mrb[0].mxu0 %v1683
    %v1905 = vpop.f32.mrb[0].mxu0
    %v1906 = vadd.f32 %v116, %v1905
    %v1907 = vpop.f32.mrb[0].mxu0
    %1908 = vdwg.mxu0
    %v1909 = vmul.f32 %v1831, %v1906
    %v1910 = vadd.f32 %v1679, %v1909
    %v1911 = vtanh.pop %v1910
    %v1912 = vsub.f32 1.0, %v1838
    %v1913 = vmul.f32 %v1912, %v1911
    %v1914 = vmul.f32 %v1838, %v1466
    %v1915 = vadd.f32 %v1913, %v1914
    %s1916 = scalar_lea.vmem [#allocation2], 8
    %v1917 = vld [vmem:[%s1916] sm:$0x3]
    %v1919 = vsel %vm120, %v1917, 0
    %1921 = vmatprep.subr.mxu0 0.0
    %1922 = vmatpush1.msra.mxu0 %v65
    %1923 = vmatprep.subr.mxu0 0.0
    %1924 = vmatpush1.msra.mxu0 %v66
    %1925 = vmatprep.subr.mxu0 0.0
    %1926 = vmatpush1.msra.mxu0 0.0
    %1927 = vmatprep.subr.mxu0 0.0
    %1928 = vmatpush1.msra.mxu0 0.0
    %1929 = vmatprep.subr.mxu0 0.0
    %1930 = vmatpush1.msra.mxu0 0.0
    %1931 = vmatprep.subr.mxu0 0.0
    %1932 = vmatpush1.msra.mxu0 0.0
    %1933 = vmatprep.subr.mxu0 0.0
    %1934 = vmatpush1.msra.mxu0 0.0
    %1935 = vmatprep.subr.mxu0 0.0
    %1936 = vmatpush1.msra.mxu0 0.0
    %1937 = vmatprep.subr.mxu0 0.0
    %1938 = vmatpush1.msra.mxu0 0.0
    %1939 = vmatprep.subr.mxu0 0.0
    %1940 = vmatpush1.msra.mxu0 0.0
    %1941 = vmatprep.subr.mxu0 0.0
    %1942 = vmatpush1.msra.mxu0 0.0
    %1943 = vmatprep.subr.mxu0 0.0
    %1944 = vmatpush1.msra.mxu0 0.0
    %1945 = vmatprep.subr.mxu0 0.0
    %1946 = vmatpush1.msra.mxu0 0.0
    %1947 = vmatprep.subr.mxu0 0.0
    %1948 = vmatpush1.msra.mxu0 0.0
    %1949 = vmatprep.subr.mxu0 0.0
    %1950 = vmatpush1.msra.mxu0 0.0
    %1951 = vmatprep.subr.mxu0 0.0
    %1952 = vmatpush1.msra.mxu0 0.0
    %1953 = vmatprep.subr.mxu0 0.0
    %1954 = vmatpush1.msra.mxu0 0.0
    %1955 = vmatprep.subr.mxu0 0.0
    %1956 = vmatpush1.msra.mxu0 0.0
    %1957 = vmatprep.subr.mxu0 0.0
    %1958 = vmatpush1.msra.mxu0 0.0
    %1959 = vmatprep.subr.mxu0 0.0
    %1960 = vmatpush1.msra.mxu0 0.0
    %1961 = vmatprep.subr.mxu0 0.0
    %1962 = vmatpush1.msra.mxu0 0.0
    %1963 = vmatprep.subr.mxu0 0.0
    %1964 = vmatpush1.msra.mxu0 0.0
    %1965 = vmatprep.subr.mxu0 0.0
    %1966 = vmatpush1.msra.mxu0 0.0
    %1967 = vmatprep.subr.mxu0 0.0
    %1968 = vmatpush1.msra.mxu0 0.0
    %1969 = vmatprep.subr.mxu0 0.0
    %1970 = vmatpush1.msra.mxu0 0.0
    %1971 = vmatprep.subr.mxu0 0.0
    %1972 = vmatpush1.msra.mxu0 0.0
    %1973 = vmatprep.subr.mxu0 0.0
    %1974 = vmatpush1.msra.mxu0 0.0
    %1975 = vmatprep.subr.mxu0 0.0
    %1976 = vmatpush1.msra.mxu0 0.0
    %1977 = vmatprep.subr.mxu0 0.0
    %1978 = vmatpush1.msra.mxu0 0.0
    %1979 = vmatprep.subr.mxu0 0.0
    %1980 = vmatpush1.msra.mxu0 0.0
    %1981 = vmatprep.subr.mxu0 0.0
    %1982 = vmatpush1.msra.mxu0 0.0
    %1983 = vmatprep.subr.mxu0 0.0
    %1984 = vmatpush1.msra.mxu0 0.0
    %1985 = vmatprep.mubr.f32.mxu0 0.0
    %1986 = vmatmul.mubr.f32.gmra.mrb[0].mxu0 %v1919
    %v1987 = vpop.f32.mrb[0].mxu0
    %v1988 = vadd.f32 %v92, %v1987
    %v1989 = vpop.f32.mrb[0].mxu0
    %1990 = vdwg.mxu0
    %1991 = vmatprep.subr.mxu0 0.0
    %1992 = vmatpush1.msra.mxu0 %v68
    %1993 = vmatprep.subr.mxu0 0.0
    %1994 = vmatpush1.msra.mxu0 %v69
    %1995 = vmatprep.subr.mxu0 0.0
    %1996 = vmatpush1.msra.mxu0 0.0
    %1997 = vmatprep.subr.mxu0 0.0
    %1998 = vmatpush1.msra.mxu0 0.0
    %1999 = vmatprep.subr.mxu0 0.0
    %2000 = vmatpush1.msra.mxu0 0.0
    %2001 = vmatprep.subr.mxu0 0.0
    %2002 = vmatpush1.msra.mxu0 0.0
    %2003 = vmatprep.subr.mxu0 0.0
    %2004 = vmatpush1.msra.mxu0 0.0
    %2005 = vmatprep.subr.mxu0 0.0
    %2006 = vmatpush1.msra.mxu0 0.0
    %2007 = vmatprep.subr.mxu0 0.0
    %2008 = vmatpush1.msra.mxu0 0.0
    %2009 = vmatprep.subr.mxu0 0.0
    %2010 = vmatpush1.msra.mxu0 0.0
    %2011 = vmatprep.subr.mxu0 0.0
    %2012 = vmatpush1.msra.mxu0 0.0
    %2013 = vmatprep.subr.mxu0 0.0
    %2014 = vmatpush1.msra.mxu0 0.0
    %2015 = vmatprep.subr.mxu0 0.0
    %2016 = vmatpush1.msra.mxu0 0.0
    %2017 = vmatprep.subr.mxu0 0.0
    %2018 = vmatpush1.msra.mxu0 0.0
    %2019 = vmatprep.subr.mxu0 0.0
    %2020 = vmatpush1.msra.mxu0 0.0
    %2021 = vmatprep.subr.mxu0 0.0
    %2022 = vmatpush1.msra.mxu0 0.0
    %2023 = vmatprep.subr.mxu0 0.0
    %2024 = vmatpush1.msra.mxu0 0.0
    %2025 = vmatprep.subr.mxu0 0.0
    %2026 = vmatpush1.msra.mxu0 0.0
    %2027 = vmatprep.subr.mxu0 0.0
    %2028 = vmatpush1.msra.mxu0 0.0
    %2029 = vmatprep.subr.mxu0 0.0
    %2030 = vmatpush1.msra.mxu0 0.0
    %2031 = vmatprep.subr.mxu0 0.0
    %2032 = vmatpush1.msra.mxu0 0.0
    %2033 = vmatprep.subr.mxu0 0.0
    %2034 = vmatpush1.msra.mxu0 0.0
    %2035 = vmatprep.subr.mxu0 0.0
    %2036 = vmatpush1.msra.mxu0 0.0
    %2037 = vmatprep.subr.mxu0 0.0
    %2038 = vmatpush1.msra.mxu0 0.0
    %2039 = vmatprep.subr.mxu0 0.0
    %2040 = vmatpush1.msra.mxu0 0.0
    %2041 = vmatprep.subr.mxu0 0.0
    %2042 = vmatpush1.msra.mxu0 0.0
    %2043 = vmatprep.subr.mxu0 0.0
    %2044 = vmatpush1.msra.mxu0 0.0
    %2045 = vmatprep.subr.mxu0 0.0
    %2046 = vmatpush1.msra.mxu0 0.0
    %2047 = vmatprep.subr.mxu0 0.0
    %2048 = vmatpush1.msra.mxu0 0.0
    %2049 = vmatprep.subr.mxu0 0.0
    %2050 = vmatpush1.msra.mxu0 0.0
    %2051 = vmatprep.subr.mxu0 0.0
    %2052 = vmatpush1.msra.mxu0 0.0
    %2053 = vmatprep.subr.mxu0 0.0
    %2054 = vmatpush1.msra.mxu0 0.0
    %2055 = vmatprep.mubr.f32.mxu0 0.0
    %2056 = vmatmul.mubr.f32.gmra.mrb[0].mxu0 %v1919
    %v2057 = vpop.f32.mrb[0].mxu0
    %v2058 = vadd.f32 %v100, %v2057
    %v2059 = vpop.f32.mrb[0].mxu0
    %2060 = vdwg.mxu0
    %2061 = vmatprep.subr.mxu0 0.0
    %2062 = vmatpush1.msra.mxu0 %v71
    %2063 = vmatprep.subr.mxu0 0.0
    %2064 = vmatpush1.msra.mxu0 %v72
    %2065 = vmatprep.subr.mxu0 0.0
    %2066 = vmatpush1.msra.mxu0 0.0
    %2067 = vmatprep.subr.mxu0 0.0
    %2068 = vmatpush1.msra.mxu0 0.0
    %2069 = vmatprep.subr.mxu0 0.0
    %2070 = vmatpush1.msra.mxu0 0.0
    %2071 = vmatprep.subr.mxu0 0.0
    %2072 = vmatpush1.msra.mxu0 0.0
    %2073 = vmatprep.subr.mxu0 0.0
    %2074 = vmatpush1.msra.mxu0 0.0
    %2075 = vmatprep.subr.mxu0 0.0
    %2076 = vmatpush1.msra.mxu0 0.0
    %2077 = vmatprep.subr.mxu0 0.0
    %2078 = vmatpush1.msra.mxu0 0.0
    %2079 = vmatprep.subr.mxu0 0.0
    %2080 = vmatpush1.msra.mxu0 0.0
    %2081 = vmatprep.subr.mxu0 0.0
    %2082 = vmatpush1.msra.mxu0 0.0
    %2083 = vmatprep.subr.mxu0 0.0
    %2084 = vmatpush1.msra.mxu0 0.0
    %2085 = vmatprep.subr.mxu0 0.0
    %2086 = vmatpush1.msra.mxu0 0.0
    %2087 = vmatprep.subr.mxu0 0.0
    %2088 = vmatpush1.msra.mxu0 0.0
    %2089 = vmatprep.subr.mxu0 0.0
    %2090 = vmatpush1.msra.mxu0 0.0
    %2091 = vmatprep.subr.mxu0 0.0
    %2092 = vmatpush1.msra.mxu0 0.0
    %2093 = vmatprep.subr.mxu0 0.0
    %2094 = vmatpush1.msra.mxu0 0.0
    %2095 = vmatprep.subr.mxu0 0.0
    %2096 = vmatpush1.msra.mxu0 0.0
    %2097 = vmatprep.subr.mxu0 0.0
    %2098 = vmatpush1.msra.mxu0 0.0
    %2099 = vmatprep.subr.mxu0 0.0
    %2100 = vmatpush1.msra.mxu0 0.0
    %2101 = vmatprep.subr.mxu0 0.0
    %2102 = vmatpush1.msra.mxu0 0.0
    %2103 = vmatprep.subr.mxu0 0.0
    %2104 = vmatpush1.msra.mxu0 0.0
    %2105 = vmatprep.subr.mxu0 0.0
    %2106 = vmatpush1.msra.mxu0 0.0
    %2107 = vmatprep.subr.mxu0 0.0
    %2108 = vmatpush1.msra.mxu0 0.0
    %2109 = vmatprep.subr.mxu0 0.0
    %2110 = vmatpush1.msra.mxu0 0.0
    %2111 = vmatprep.subr.mxu0 0.0
    %2112 = vmatpush1.msra.mxu0 0.0
    %2113 = vmatprep.subr.mxu0 0.0
    %2114 = vmatpush1.msra.mxu0 0.0
    %2115 = vmatprep.subr.mxu0 0.0
    %2116 = vmatpush1.msra.mxu0 0.0
    %2117 = vmatprep.subr.mxu0 0.0
    %2118 = vmatpush1.msra.mxu0 0.0
    %2119 = vmatprep.subr.mxu0 0.0
    %2120 = vmatpush1.msra.mxu0 0.0
    %2121 = vmatprep.subr.mxu0 0.0
    %2122 = vmatpush1.msra.mxu0 0.0
    %2123 = vmatprep.subr.mxu0 0.0
    %2124 = vmatpush1.msra.mxu0 0.0
    %2125 = vmatprep.mubr.f32.mxu0 0.0
    %2126 = vmatmul.mubr.f32.gmra.mrb[0].mxu0 %v1919
    %v2127 = vpop.f32.mrb[0].mxu0
    %v2128 = vadd.f32 %v108, %v2127
    %v2129 = vpop.f32.mrb[0].mxu0
    %2130 = vdwg.mxu0
    %v2132 = vsel %vm334, %v1915, 0
    %2134 = vmatprep.subr.mxu0 0.0
    %2135 = vmatpush1.msra.mxu0 %v73
    %2136 = vmatprep.subr.mxu0 0.0
    %2137 = vmatpush1.msra.mxu0 %v74
    %2138 = vmatprep.subr.mxu0 0.0
    %2139 = vmatpush1.msra.mxu0 %v75
    %2140 = vmatprep.subr.mxu0 0.0
    %2141 = vmatpush1.msra.mxu0 %v76
    %2142 = vmatprep.subr.mxu0 0.0
    %2143 = vmatpush1.msra.mxu0 0.0
    %2144 = vmatprep.subr.mxu0 0.0
    %2145 = vmatpush1.msra.mxu0 0.0
    %2146 = vmatprep.subr.mxu0 0.0
    %2147 = vmatpush1.msra.mxu0 0.0
    %2148 = vmatprep.subr.mxu0 0.0
    %2149 = vmatpush1.msra.mxu0 0.0
    %2150 = vmatprep.subr.mxu0 0.0
    %2151 = vmatpush1.msra.mxu0 0.0
    %2152 = vmatprep.subr.mxu0 0.0
    %2153 = vmatpush1.msra.mxu0 0.0
    %2154 = vmatprep.subr.mxu0 0.0
    %2155 = vmatpush1.msra.mxu0 0.0
    %2156 = vmatprep.subr.mxu0 0.0
    %2157 = vmatpush1.msra.mxu0 0.0
    %2158 = vmatprep.subr.mxu0 0.0
    %2159 = vmatpush1.msra.mxu0 0.0
    %2160 = vmatprep.subr.mxu0 0.0
    %2161 = vmatpush1.msra.mxu0 0.0
    %2162 = vmatprep.subr.mxu0 0.0
    %2163 = vmatpush1.msra.mxu0 0.0
    %2164 = vmatprep.subr.mxu0 0.0
    %2165 = vmatpush1.msra.mxu0 0.0
    %2166 = vmatprep.subr.mxu0 0.0
    %2167 = vmatpush1.msra.mxu0 0.0
    %2168 = vmatprep.subr.mxu0 0.0
    %2169 = vmatpush1.msra.mxu0 0.0
    %2170 = vmatprep.subr.mxu0 0.0
    %2171 = vmatpush1.msra.mxu0 0.0
    %2172 = vmatprep.subr.mxu0 0.0
    %2173 = vmatpush1.msra.mxu0 0.0
    %2174 = vmatprep.subr.mxu0 0.0
    %2175 = vmatpush1.msra.mxu0 0.0
    %2176 = vmatprep.subr.mxu0 0.0
    %2177 = vmatpush1.msra.mxu0 0.0
    %2178 = vmatprep.subr.mxu0 0.0
    %2179 = vmatpush1.msra.mxu0 0.0
    %2180 = vmatprep.subr.mxu0 0.0
    %2181 = vmatpush1.msra.mxu0 0.0
    %2182 = vmatprep.subr.mxu0 0.0
    %2183 = vmatpush1.msra.mxu0 0.0
    %2184 = vmatprep.subr.mxu0 0.0
    %2185 = vmatpush1.msra.mxu0 0.0
    %2186 = vmatprep.subr.mxu0 0.0
    %2187 = vmatpush1.msra.mxu0 0.0
    %2188 = vmatprep.subr.mxu0 0.0
    %2189 = vmatpush1.msra.mxu0 0.0
    %2190 = vmatprep.subr.mxu0 0.0
    %2191 = vmatpush1.msra.mxu0 0.0
    %2192 = vmatprep.subr.mxu0 0.0
    %2193 = vmatpush1.msra.mxu0 0.0
    %2194 = vmatprep.subr.mxu0 0.0
    %2195 = vmatpush1.msra.mxu0 0.0
    %2196 = vmatprep.subr.mxu0 0.0
    %2197 = vmatpush1.msra.mxu0 0.0
    %2198 = vmatprep.mubr.f32.mxu0 0.0
    %2199 = vmatmul.mubr.f32.gmra.mrb[0].mxu0 %v2132
    %v2200 = vpop.f32.mrb[0].mxu0
    %v2201 = vadd.f32 0.0, %v2200
    %v2202 = vpop.f32.mrb[0].mxu0
    %2203 = vdwg.mxu0
    %2204 = vmatprep.subr.mxu0 0.0
    %2205 = vmatpush1.msra.mxu0 %v78
    %2206 = vmatprep.subr.mxu0 0.0
    %2207 = vmatpush1.msra.mxu0 %v79
    %2208 = vmatprep.subr.mxu0 0.0
    %2209 = vmatpush1.msra.mxu0 %v80
    %2210 = vmatprep.subr.mxu0 0.0
    %2211 = vmatpush1.msra.mxu0 %v81
    %2212 = vmatprep.subr.mxu0 0.0
    %2213 = vmatpush1.msra.mxu0 0.0
    %2214 = vmatprep.subr.mxu0 0.0
    %2215 = vmatpush1.msra.mxu0 0.0
    %2216 = vmatprep.subr.mxu0 0.0
    %2217 = vmatpush1.msra.mxu0 0.0
    %2218 = vmatprep.subr.mxu0 0.0
    %2219 = vmatpush1.msra.mxu0 0.0
    %2220 = vmatprep.subr.mxu0 0.0
    %2221 = vmatpush1.msra.mxu0 0.0
    %2222 = vmatprep.subr.mxu0 0.0
    %2223 = vmatpush1.msra.mxu0 0.0
    %2224 = vmatprep.subr.mxu0 0.0
    %2225 = vmatpush1.msra.mxu0 0.0
    %2226 = vmatprep.subr.mxu0 0.0
    %2227 = vmatpush1.msra.mxu0 0.0
    %2228 = vmatprep.subr.mxu0 0.0
    %2229 = vmatpush1.msra.mxu0 0.0
    %2230 = vmatprep.subr.mxu0 0.0
    %2231 = vmatpush1.msra.mxu0 0.0
    %2232 = vmatprep.subr.mxu0 0.0
    %2233 = vmatpush1.msra.mxu0 0.0
    %2234 = vmatprep.subr.mxu0 0.0
    %2235 = vmatpush1.msra.mxu0 0.0
    %2236 = vmatprep.subr.mxu0 0.0
    %2237 = vmatpush1.msra.mxu0 0.0
    %2238 = vmatprep.subr.mxu0 0.0
    %2239 = vmatpush1.msra.mxu0 0.0
    %2240 = vmatprep.subr.mxu0 0.0
    %2241 = vmatpush1.msra.mxu0 0.0
    %2242 = vmatprep.subr.mxu0 0.0
    %2243 = vmatpush1.msra.mxu0 0.0
    %2244 = vmatprep.subr.mxu0 0.0
    %2245 = vmatpush1.msra.mxu0 0.0
    %2246 = vmatprep.subr.mxu0 0.0
    %2247 = vmatpush1.msra.mxu0 0.0
    %2248 = vmatprep.subr.mxu0 0.0
    %2249 = vmatpush1.msra.mxu0 0.0
    %2250 = vmatprep.subr.mxu0 0.0
    %2251 = vmatpush1.msra.mxu0 0.0
    %2252 = vmatprep.subr.mxu0 0.0
    %2253 = vmatpush1.msra.mxu0 0.0
    %2254 = vmatprep.subr.mxu0 0.0
    %2255 = vmatpush1.msra.mxu0 0.0
    %2256 = vmatprep.subr.mxu0 0.0
    %2257 = vmatpush1.msra.mxu0 0.0
    %2258 = vmatprep.subr.mxu0 0.0
    %2259 = vmatpush1.msra.mxu0 0.0
    %2260 = vmatprep.subr.mxu0 0.0
    %2261 = vmatpush1.msra.mxu0 0.0
    %2262 = vmatprep.subr.mxu0 0.0
    %2263 = vmatpush1.msra.mxu0 0.0
    %2264 = vmatprep.subr.mxu0 0.0
    %2265 = vmatpush1.msra.mxu0 0.0
    %2266 = vmatprep.subr.mxu0 0.0
    %2267 = vmatpush1.msra.mxu0 0.0
    %2268 = vmatprep.mubr.f32.mxu0 0.0
    %2269 = vmatmul.mubr.f32.gmra.mrb[0].mxu0 %v2132
    %v2270 = vpop.f32.mrb[0].mxu0
    %v2271 = vadd.f32 0.0, %v2270
    %v2272 = vpop.f32.mrb[0].mxu0
    %2273 = vdwg.mxu0
    %v2274 = vadd.f32 %v1988, %v2201
    %v2275 = vxor.u32 %v2274, 2147483648
    %v2276 = vmul.f32 %v2275, 1.442695
    %v2277 = vpow.pop %v2276
    %v2278 = vadd.f32 %v2277, 1.0
    %v2279 = vrcp.pop %v2278
    %v2280 = vmul.f32 1.0, %v2279
    %v2281 = vadd.f32 %v2058, %v2271
    %v2282 = vxor.u32 %v2281, 2147483648
    %v2283 = vmul.f32 %v2282, 1.442695
    %v2284 = vpow.pop %v2283
    %v2285 = vadd.f32 %v2284, 1.0
    %v2286 = vrcp.pop %v2285
    %v2287 = vmul.f32 1.0, %v2286
    %2288 = vmatprep.subr.mxu0 0.0
    %2289 = vmatpush1.msra.mxu0 %v83
    %2290 = vmatprep.subr.mxu0 0.0
    %2291 = vmatpush1.msra.mxu0 %v84
    %2292 = vmatprep.subr.mxu0 0.0
    %2293 = vmatpush1.msra.mxu0 %v85
    %2294 = vmatprep.subr.mxu0 0.0
    %2295 = vmatpush1.msra.mxu0 %v86
    %2296 = vmatprep.subr.mxu0 0.0
    %2297 = vmatpush1.msra.mxu0 0.0
    %2298 = vmatprep.subr.mxu0 0.0
    %2299 = vmatpush1.msra.mxu0 0.0
    %2300 = vmatprep.subr.mxu0 0.0
    %2301 = vmatpush1.msra.mxu0 0.0
    %2302 = vmatprep.subr.mxu0 0.0
    %2303 = vmatpush1.msra.mxu0 0.0
    %2304 = vmatprep.subr.mxu0 0.0
    %2305 = vmatpush1.msra.mxu0 0.0
    %2306 = vmatprep.subr.mxu0 0.0
    %2307 = vmatpush1.msra.mxu0 0.0
    %2308 = vmatprep.subr.mxu0 0.0
    %2309 = vmatpush1.msra.mxu0 0.0
    %2310 = vmatprep.subr.mxu0 0.0
    %2311 = vmatpush1.msra.mxu0 0.0
    %2312 = vmatprep.subr.mxu0 0.0
    %2313 = vmatpush1.msra.mxu0 0.0
    %2314 = vmatprep.subr.mxu0 0.0
    %2315 = vmatpush1.msra.mxu0 0.0
    %2316 = vmatprep.subr.mxu0 0.0
    %2317 = vmatpush1.msra.mxu0 0.0
    %2318 = vmatprep.subr.mxu0 0.0
    %2319 = vmatpush1.msra.mxu0 0.0
    %2320 = vmatprep.subr.mxu0 0.0
    %2321 = vmatpush1.msra.mxu0 0.0
    %2322 = vmatprep.subr.mxu0 0.0
    %2323 = vmatpush1.msra.mxu0 0.0
    %2324 = vmatprep.subr.mxu0 0.0
    %2325 = vmatpush1.msra.mxu0 0.0
    %2326 = vmatprep.subr.mxu0 0.0
    %2327 = vmatpush1.msra.mxu0 0.0
    %2328 = vmatprep.subr.mxu0 0.0
    %2329 = vmatpush1.msra.mxu0 0.0
    %2330 = vmatprep.subr.mxu0 0.0
    %2331 = vmatpush1.msra.mxu0 0.0
    %2332 = vmatprep.subr.mxu0 0.0
    %2333 = vmatpush1.msra.mxu0 0.0
    %2334 = vmatprep.subr.mxu0 0.0
    %2335 = vmatpush1.msra.mxu0 0.0
    %2336 = vmatprep.subr.mxu0 0.0
    %2337 = vmatpush1.msra.mxu0 0.0
    %2338 = vmatprep.subr.mxu0 0.0
    %2339 = vmatpush1.msra.mxu0 0.0
    %2340 = vmatprep.subr.mxu0 0.0
    %2341 = vmatpush1.msra.mxu0 0.0
    %2342 = vmatprep.subr.mxu0 0.0
    %2343 = vmatpush1.msra.mxu0 0.0
    %2344 = vmatprep.subr.mxu0 0.0
    %2345 = vmatpush1.msra.mxu0 0.0
    %2346 = vmatprep.subr.mxu0 0.0
    %2347 = vmatpush1.msra.mxu0 0.0
    %2348 = vmatprep.subr.mxu0 0.0
    %2349 = vmatpush1.msra.mxu0 0.0
    %2350 = vmatprep.subr.mxu0 0.0
    %2351 = vmatpush1.msra.mxu0 0.0
    %2352 = vmatprep.mubr.f32.mxu0 0.0
    %2353 = vmatmul.mubr.f32.gmra.mrb[0].mxu0 %v2132
    %v2354 = vpop.f32.mrb[0].mxu0
    %v2355 = vadd.f32 %v116, %v2354
    %v2356 = vpop.f32.mrb[0].mxu0
    %2357 = vdwg.mxu0
    %v2358 = vmul.f32 %v2280, %v2355
    %v2359 = vadd.f32 %v2128, %v2358
    %v2360 = vtanh.pop %v2359
    %v2361 = vsub.f32 1.0, %v2287
    %v2362 = vmul.f32 %v2361, %v2360
    %v2363 = vmul.f32 %v2287, %v1915
    %v2364 = vadd.f32 %v2362, %v2363
    %s2365 = scalar_lea.vmem [#allocation2], 10
    %v2366 = vld [vmem:[%s2365] sm:$0x3]
    %v2368 = vsel %vm120, %v2366, 0
    %2370 = vmatprep.subr.mxu0 0.0
    %2371 = vmatpush1.msra.mxu0 %v65
    %2372 = vmatprep.subr.mxu0 0.0
    %2373 = vmatpush1.msra.mxu0 %v66
    %2374 = vmatprep.subr.mxu0 0.0
    %2375 = vmatpush1.msra.mxu0 0.0
    %2376 = vmatprep.subr.mxu0 0.0
    %2377 = vmatpush1.msra.mxu0 0.0
    %2378 = vmatprep.subr.mxu0 0.0
    %2379 = vmatpush1.msra.mxu0 0.0
    %2380 = vmatprep.subr.mxu0 0.0
    %2381 = vmatpush1.msra.mxu0 0.0
    %2382 = vmatprep.subr.mxu0 0.0
    %2383 = vmatpush1.msra.mxu0 0.0
    %2384 = vmatprep.subr.mxu0 0.0
    %2385 = vmatpush1.msra.mxu0 0.0
    %2386 = vmatprep.subr.mxu0 0.0
    %2387 = vmatpush1.msra.mxu0 0.0
    %2388 = vmatprep.subr.mxu0 0.0
    %2389 = vmatpush1.msra.mxu0 0.0
    %2390 = vmatprep.subr.mxu0 0.0
    %2391 = vmatpush1.msra.mxu0 0.0
    %2392 = vmatprep.subr.mxu0 0.0
    %2393 = vmatpush1.msra.mxu0 0.0
    %2394 = vmatprep.subr.mxu0 0.0
    %2395 = vmatpush1.msra.mxu0 0.0
    %2396 = vmatprep.subr.mxu0 0.0
    %2397 = vmatpush1.msra.mxu0 0.0
    %2398 = vmatprep.subr.mxu0 0.0
    %2399 = vmatpush1.msra.mxu0 0.0
    %2400 = vmatprep.subr.mxu0 0.0
    %2401 = vmatpush1.msra.mxu0 0.0
    %2402 = vmatprep.subr.mxu0 0.0
    %2403 = vmatpush1.msra.mxu0 0.0
    %2404 = vmatprep.subr.mxu0 0.0
    %2405 = vmatpush1.msra.mxu0 0.0
    %2406 = vmatprep.subr.mxu0 0.0
    %2407 = vmatpush1.msra.mxu0 0.0
    %2408 = vmatprep.subr.mxu0 0.0
    %2409 = vmatpush1.msra.mxu0 0.0
    %2410 = vmatprep.subr.mxu0 0.0
    %2411 = vmatpush1.msra.mxu0 0.0
    %2412 = vmatprep.subr.mxu0 0.0
    %2413 = vmatpush1.msra.mxu0 0.0
    %2414 = vmatprep.subr.mxu0 0.0
    %2415 = vmatpush1.msra.mxu0 0.0
    %2416 = vmatprep.subr.mxu0 0.0
    %2417 = vmatpush1.msra.mxu0 0.0
    %2418 = vmatprep.subr.mxu0 0.0
    %2419 = vmatpush1.msra.mxu0 0.0
    %2420 = vmatprep.subr.mxu0 0.0
    %2421 = vmatpush1.msra.mxu0 0.0
    %2422 = vmatprep.subr.mxu0 0.0
    %2423 = vmatpush1.msra.mxu0 0.0
    %2424 = vmatprep.subr.mxu0 0.0
    %2425 = vmatpush1.msra.mxu0 0.0
    %2426 = vmatprep.subr.mxu0 0.0
    %2427 = vmatpush1.msra.mxu0 0.0
    %2428 = vmatprep.subr.mxu0 0.0
    %2429 = vmatpush1.msra.mxu0 0.0
    %2430 = vmatprep.subr.mxu0 0.0
    %2431 = vmatpush1.msra.mxu0 0.0
    %2432 = vmatprep.subr.mxu0 0.0
    %2433 = vmatpush1.msra.mxu0 0.0
    %2434 = vmatprep.mubr.f32.mxu0 0.0
    %2435 = vmatmul.mubr.f32.gmra.mrb[0].mxu0 %v2368
    %v2436 = vpop.f32.mrb[0].mxu0
    %v2437 = vadd.f32 %v92, %v2436
    %v2438 = vpop.f32.mrb[0].mxu0
    %2439 = vdwg.mxu0
    %2440 = vmatprep.subr.mxu0 0.0
    %2441 = vmatpush1.msra.mxu0 %v68
    %2442 = vmatprep.subr.mxu0 0.0
    %2443 = vmatpush1.msra.mxu0 %v69
    %2444 = vmatprep.subr.mxu0 0.0
    %2445 = vmatpush1.msra.mxu0 0.0
    %2446 = vmatprep.subr.mxu0 0.0
    %2447 = vmatpush1.msra.mxu0 0.0
    %2448 = vmatprep.subr.mxu0 0.0
    %2449 = vmatpush1.msra.mxu0 0.0
    %2450 = vmatprep.subr.mxu0 0.0
    %2451 = vmatpush1.msra.mxu0 0.0
    %2452 = vmatprep.subr.mxu0 0.0
    %2453 = vmatpush1.msra.mxu0 0.0
    %2454 = vmatprep.subr.mxu0 0.0
    %2455 = vmatpush1.msra.mxu0 0.0
    %2456 = vmatprep.subr.mxu0 0.0
    %2457 = vmatpush1.msra.mxu0 0.0
    %2458 = vmatprep.subr.mxu0 0.0
    %2459 = vmatpush1.msra.mxu0 0.0
    %2460 = vmatprep.subr.mxu0 0.0
    %2461 = vmatpush1.msra.mxu0 0.0
    %2462 = vmatprep.subr.mxu0 0.0
    %2463 = vmatpush1.msra.mxu0 0.0
    %2464 = vmatprep.subr.mxu0 0.0
    %2465 = vmatpush1.msra.mxu0 0.0
    %2466 = vmatprep.subr.mxu0 0.0
    %2467 = vmatpush1.msra.mxu0 0.0
    %2468 = vmatprep.subr.mxu0 0.0
    %2469 = vmatpush1.msra.mxu0 0.0
    %2470 = vmatprep.subr.mxu0 0.0
    %2471 = vmatpush1.msra.mxu0 0.0
    %2472 = vmatprep.subr.mxu0 0.0
    %2473 = vmatpush1.msra.mxu0 0.0
    %2474 = vmatprep.subr.mxu0 0.0
    %2475 = vmatpush1.msra.mxu0 0.0
    %2476 = vmatprep.subr.mxu0 0.0
    %2477 = vmatpush1.msra.mxu0 0.0
    %2478 = vmatprep.subr.mxu0 0.0
    %2479 = vmatpush1.msra.mxu0 0.0
    %2480 = vmatprep.subr.mxu0 0.0
    %2481 = vmatpush1.msra.mxu0 0.0
    %2482 = vmatprep.subr.mxu0 0.0
    %2483 = vmatpush1.msra.mxu0 0.0
    %2484 = vmatprep.subr.mxu0 0.0
    %2485 = vmatpush1.msra.mxu0 0.0
    %2486 = vmatprep.subr.mxu0 0.0
    %2487 = vmatpush1.msra.mxu0 0.0
    %2488 = vmatprep.subr.mxu0 0.0
    %2489 = vmatpush1.msra.mxu0 0.0
    %2490 = vmatprep.subr.mxu0 0.0
    %2491 = vmatpush1.msra.mxu0 0.0
    %2492 = vmatprep.subr.mxu0 0.0
    %2493 = vmatpush1.msra.mxu0 0.0
    %2494 = vmatprep.subr.mxu0 0.0
    %2495 = vmatpush1.msra.mxu0 0.0
    %2496 = vmatprep.subr.mxu0 0.0
    %2497 = vmatpush1.msra.mxu0 0.0
    %2498 = vmatprep.subr.mxu0 0.0
    %2499 = vmatpush1.msra.mxu0 0.0
    %2500 = vmatprep.subr.mxu0 0.0
    %2501 = vmatpush1.msra.mxu0 0.0
    %2502 = vmatprep.subr.mxu0 0.0
    %2503 = vmatpush1.msra.mxu0 0.0
    %2504 = vmatprep.mubr.f32.mxu0 0.0
    %2505 = vmatmul.mubr.f32.gmra.mrb[0].mxu0 %v2368
    %v2506 = vpop.f32.mrb[0].mxu0
    %v2507 = vadd.f32 %v100, %v2506
    %v2508 = vpop.f32.mrb[0].mxu0
    %2509 = vdwg.mxu0
    %2510 = vmatprep.subr.mxu0 0.0
    %2511 = vmatpush1.msra.mxu0 %v71
    %2512 = vmatprep.subr.mxu0 0.0
    %2513 = vmatpush1.msra.mxu0 %v72
    %2514 = vmatprep.subr.mxu0 0.0
    %2515 = vmatpush1.msra.mxu0 0.0
    %2516 = vmatprep.subr.mxu0 0.0
    %2517 = vmatpush1.msra.mxu0 0.0
    %2518 = vmatprep.subr.mxu0 0.0
    %2519 = vmatpush1.msra.mxu0 0.0
    %2520 = vmatprep.subr.mxu0 0.0
    %2521 = vmatpush1.msra.mxu0 0.0
    %2522 = vmatprep.subr.mxu0 0.0
    %2523 = vmatpush1.msra.mxu0 0.0
    %2524 = vmatprep.subr.mxu0 0.0
    %2525 = vmatpush1.msra.mxu0 0.0
    %2526 = vmatprep.subr.mxu0 0.0
    %2527 = vmatpush1.msra.mxu0 0.0
    %2528 = vmatprep.subr.mxu0 0.0
    %2529 = vmatpush1.msra.mxu0 0.0
    %2530 = vmatprep.subr.mxu0 0.0
    %2531 = vmatpush1.msra.mxu0 0.0
    %2532 = vmatprep.subr.mxu0 0.0
    %2533 = vmatpush1.msra.mxu0 0.0
    %2534 = vmatprep.subr.mxu0 0.0
    %2535 = vmatpush1.msra.mxu0 0.0
    %2536 = vmatprep.subr.mxu0 0.0
    %2537 = vmatpush1.msra.mxu0 0.0
    %2538 = vmatprep.subr.mxu0 0.0
    %2539 = vmatpush1.msra.mxu0 0.0
    %2540 = vmatprep.subr.mxu0 0.0
    %2541 = vmatpush1.msra.mxu0 0.0
    %2542 = vmatprep.subr.mxu0 0.0
    %2543 = vmatpush1.msra.mxu0 0.0
    %2544 = vmatprep.subr.mxu0 0.0
    %2545 = vmatpush1.msra.mxu0 0.0
    %2546 = vmatprep.subr.mxu0 0.0
    %2547 = vmatpush1.msra.mxu0 0.0
    %2548 = vmatprep.subr.mxu0 0.0
    %2549 = vmatpush1.msra.mxu0 0.0
    %2550 = vmatprep.subr.mxu0 0.0
    %2551 = vmatpush1.msra.mxu0 0.0
    %2552 = vmatprep.subr.mxu0 0.0
    %2553 = vmatpush1.msra.mxu0 0.0
    %2554 = vmatprep.subr.mxu0 0.0
    %2555 = vmatpush1.msra.mxu0 0.0
    %2556 = vmatprep.subr.mxu0 0.0
    %2557 = vmatpush1.msra.mxu0 0.0
    %2558 = vmatprep.subr.mxu0 0.0
    %2559 = vmatpush1.msra.mxu0 0.0
    %2560 = vmatprep.subr.mxu0 0.0
    %2561 = vmatpush1.msra.mxu0 0.0
    %2562 = vmatprep.subr.mxu0 0.0
    %2563 = vmatpush1.msra.mxu0 0.0
    %2564 = vmatprep.subr.mxu0 0.0
    %2565 = vmatpush1.msra.mxu0 0.0
    %2566 = vmatprep.subr.mxu0 0.0
    %2567 = vmatpush1.msra.mxu0 0.0
    %2568 = vmatprep.subr.mxu0 0.0
    %2569 = vmatpush1.msra.mxu0 0.0
    %2570 = vmatprep.subr.mxu0 0.0
    %2571 = vmatpush1.msra.mxu0 0.0
    %2572 = vmatprep.subr.mxu0 0.0
    %2573 = vmatpush1.msra.mxu0 0.0
    %2574 = vmatprep.mubr.f32.mxu0 0.0
    %2575 = vmatmul.mubr.f32.gmra.mrb[0].mxu0 %v2368
    %v2576 = vpop.f32.mrb[0].mxu0
    %v2577 = vadd.f32 %v108, %v2576
    %v2578 = vpop.f32.mrb[0].mxu0
    %2579 = vdwg.mxu0
    %v2581 = vsel %vm334, %v2364, 0
    %2583 = vmatprep.subr.mxu0 0.0
    %2584 = vmatpush1.msra.mxu0 %v73
    %2585 = vmatprep.subr.mxu0 0.0
    %2586 = vmatpush1.msra.mxu0 %v74
    %2587 = vmatprep.subr.mxu0 0.0
    %2588 = vmatpush1.msra.mxu0 %v75
    %2589 = vmatprep.subr.mxu0 0.0
    %2590 = vmatpush1.msra.mxu0 %v76
    %2591 = vmatprep.subr.mxu0 0.0
    %2592 = vmatpush1.msra.mxu0 0.0
    %2593 = vmatprep.subr.mxu0 0.0
    %2594 = vmatpush1.msra.mxu0 0.0
    %2595 = vmatprep.subr.mxu0 0.0
    %2596 = vmatpush1.msra.mxu0 0.0
    %2597 = vmatprep.subr.mxu0 0.0
    %2598 = vmatpush1.msra.mxu0 0.0
    %2599 = vmatprep.subr.mxu0 0.0
    %2600 = vmatpush1.msra.mxu0 0.0
    %2601 = vmatprep.subr.mxu0 0.0
    %2602 = vmatpush1.msra.mxu0 0.0
    %2603 = vmatprep.subr.mxu0 0.0
    %2604 = vmatpush1.msra.mxu0 0.0
    %2605 = vmatprep.subr.mxu0 0.0
    %2606 = vmatpush1.msra.mxu0 0.0
    %2607 = vmatprep.subr.mxu0 0.0
    %2608 = vmatpush1.msra.mxu0 0.0
    %2609 = vmatprep.subr.mxu0 0.0
    %2610 = vmatpush1.msra.mxu0 0.0
    %2611 = vmatprep.subr.mxu0 0.0
    %2612 = vmatpush1.msra.mxu0 0.0
    %2613 = vmatprep.subr.mxu0 0.0
    %2614 = vmatpush1.msra.mxu0 0.0
    %2615 = vmatprep.subr.mxu0 0.0
    %2616 = vmatpush1.msra.mxu0 0.0
    %2617 = vmatprep.subr.mxu0 0.0
    %2618 = vmatpush1.msra.mxu0 0.0
    %2619 = vmatprep.subr.mxu0 0.0
    %2620 = vmatpush1.msra.mxu0 0.0
    %2621 = vmatprep.subr.mxu0 0.0
    %2622 = vmatpush1.msra.mxu0 0.0
    %2623 = vmatprep.subr.mxu0 0.0
    %2624 = vmatpush1.msra.mxu0 0.0
    %2625 = vmatprep.subr.mxu0 0.0
    %2626 = vmatpush1.msra.mxu0 0.0
    %2627 = vmatprep.subr.mxu0 0.0
    %2628 = vmatpush1.msra.mxu0 0.0
    %2629 = vmatprep.subr.mxu0 0.0
    %2630 = vmatpush1.msra.mxu0 0.0
    %2631 = vmatprep.subr.mxu0 0.0
    %2632 = vmatpush1.msra.mxu0 0.0
    %2633 = vmatprep.subr.mxu0 0.0
    %2634 = vmatpush1.msra.mxu0 0.0
    %2635 = vmatprep.subr.mxu0 0.0
    %2636 = vmatpush1.msra.mxu0 0.0
    %2637 = vmatprep.subr.mxu0 0.0
    %2638 = vmatpush1.msra.mxu0 0.0
    %2639 = vmatprep.subr.mxu0 0.0
    %2640 = vmatpush1.msra.mxu0 0.0
    %2641 = vmatprep.subr.mxu0 0.0
    %2642 = vmatpush1.msra.mxu0 0.0
    %2643 = vmatprep.subr.mxu0 0.0
    %2644 = vmatpush1.msra.mxu0 0.0
    %2645 = vmatprep.subr.mxu0 0.0
    %2646 = vmatpush1.msra.mxu0 0.0
    %2647 = vmatprep.mubr.f32.mxu0 0.0
    %2648 = vmatmul.mubr.f32.gmra.mrb[0].mxu0 %v2581
    %v2649 = vpop.f32.mrb[0].mxu0
    %v2650 = vadd.f32 0.0, %v2649
    %v2651 = vpop.f32.mrb[0].mxu0
    %2652 = vdwg.mxu0
    %2653 = vmatprep.subr.mxu0 0.0
    %2654 = vmatpush1.msra.mxu0 %v78
    %2655 = vmatprep.subr.mxu0 0.0
    %2656 = vmatpush1.msra.mxu0 %v79
    %2657 = vmatprep.subr.mxu0 0.0
    %2658 = vmatpush1.msra.mxu0 %v80
    %2659 = vmatprep.subr.mxu0 0.0
    %2660 = vmatpush1.msra.mxu0 %v81
    %2661 = vmatprep.subr.mxu0 0.0
    %2662 = vmatpush1.msra.mxu0 0.0
    %2663 = vmatprep.subr.mxu0 0.0
    %2664 = vmatpush1.msra.mxu0 0.0
    %2665 = vmatprep.subr.mxu0 0.0
    %2666 = vmatpush1.msra.mxu0 0.0
    %2667 = vmatprep.subr.mxu0 0.0
    %2668 = vmatpush1.msra.mxu0 0.0
    %2669 = vmatprep.subr.mxu0 0.0
    %2670 = vmatpush1.msra.mxu0 0.0
    %2671 = vmatprep.subr.mxu0 0.0
    %2672 = vmatpush1.msra.mxu0 0.0
    %2673 = vmatprep.subr.mxu0 0.0
    %2674 = vmatpush1.msra.mxu0 0.0
    %2675 = vmatprep.subr.mxu0 0.0
    %2676 = vmatpush1.msra.mxu0 0.0
    %2677 = vmatprep.subr.mxu0 0.0
    %2678 = vmatpush1.msra.mxu0 0.0
    %2679 = vmatprep.subr.mxu0 0.0
    %2680 = vmatpush1.msra.mxu0 0.0
    %2681 = vmatprep.subr.mxu0 0.0
    %2682 = vmatpush1.msra.mxu0 0.0
    %2683 = vmatprep.subr.mxu0 0.0
    %2684 = vmatpush1.msra.mxu0 0.0
    %2685 = vmatprep.subr.mxu0 0.0
    %2686 = vmatpush1.msra.mxu0 0.0
    %2687 = vmatprep.subr.mxu0 0.0
    %2688 = vmatpush1.msra.mxu0 0.0
    %2689 = vmatprep.subr.mxu0 0.0
    %2690 = vmatpush1.msra.mxu0 0.0
    %2691 = vmatprep.subr.mxu0 0.0
    %2692 = vmatpush1.msra.mxu0 0.0
    %2693 = vmatprep.subr.mxu0 0.0
    %2694 = vmatpush1.msra.mxu0 0.0
    %2695 = vmatprep.subr.mxu0 0.0
    %2696 = vmatpush1.msra.mxu0 0.0
    %2697 = vmatprep.subr.mxu0 0.0
    %2698 = vmatpush1.msra.mxu0 0.0
    %2699 = vmatprep.subr.mxu0 0.0
    %2700 = vmatpush1.msra.mxu0 0.0
    %2701 = vmatprep.subr.mxu0 0.0
    %2702 = vmatpush1.msra.mxu0 0.0
    %2703 = vmatprep.subr.mxu0 0.0
    %2704 = vmatpush1.msra.mxu0 0.0
    %2705 = vmatprep.subr.mxu0 0.0
    %2706 = vmatpush1.msra.mxu0 0.0
    %2707 = vmatprep.subr.mxu0 0.0
    %2708 = vmatpush1.msra.mxu0 0.0
    %2709 = vmatprep.subr.mxu0 0.0
    %2710 = vmatpush1.msra.mxu0 0.0
    %2711 = vmatprep.subr.mxu0 0.0
    %2712 = vmatpush1.msra.mxu0 0.0
    %2713 = vmatprep.subr.mxu0 0.0
    %2714 = vmatpush1.msra.mxu0 0.0
    %2715 = vmatprep.subr.mxu0 0.0
    %2716 = vmatpush1.msra.mxu0 0.0
    %2717 = vmatprep.mubr.f32.mxu0 0.0
    %2718 = vmatmul.mubr.f32.gmra.mrb[0].mxu0 %v2581
    %v2719 = vpop.f32.mrb[0].mxu0
    %v2720 = vadd.f32 0.0, %v2719
    %v2721 = vpop.f32.mrb[0].mxu0
    %2722 = vdwg.mxu0
    %v2723 = vadd.f32 %v2437, %v2650
    %v2724 = vxor.u32 %v2723, 2147483648
    %v2725 = vmul.f32 %v2724, 1.442695
    %v2726 = vpow.pop %v2725
    %v2727 = vadd.f32 %v2726, 1.0
    %v2728 = vrcp.pop %v2727
    %v2729 = vmul.f32 1.0, %v2728
    %v2730 = vadd.f32 %v2507, %v2720
    %v2731 = vxor.u32 %v2730, 2147483648
    %v2732 = vmul.f32 %v2731, 1.442695
    %v2733 = vpow.pop %v2732
    %v2734 = vadd.f32 %v2733, 1.0
    %v2735 = vrcp.pop %v2734
    %v2736 = vmul.f32 1.0, %v2735
    %2737 = vmatprep.subr.mxu0 0.0
    %2738 = vmatpush1.msra.mxu0 %v83
    %2739 = vmatprep.subr.mxu0 0.0
    %2740 = vmatpush1.msra.mxu0 %v84
    %2741 = vmatprep.subr.mxu0 0.0
    %2742 = vmatpush1.msra.mxu0 %v85
    %2743 = vmatprep.subr.mxu0 0.0
    %2744 = vmatpush1.msra.mxu0 %v86
    %2745 = vmatprep.subr.mxu0 0.0
    %2746 = vmatpush1.msra.mxu0 0.0
    %2747 = vmatprep.subr.mxu0 0.0
    %2748 = vmatpush1.msra.mxu0 0.0
    %2749 = vmatprep.subr.mxu0 0.0
    %2750 = vmatpush1.msra.mxu0 0.0
    %2751 = vmatprep.subr.mxu0 0.0
    %2752 = vmatpush1.msra.mxu0 0.0
    %2753 = vmatprep.subr.mxu0 0.0
    %2754 = vmatpush1.msra.mxu0 0.0
    %2755 = vmatprep.subr.mxu0 0.0
    %2756 = vmatpush1.msra.mxu0 0.0
    %2757 = vmatprep.subr.mxu0 0.0
    %2758 = vmatpush1.msra.mxu0 0.0
    %2759 = vmatprep.subr.mxu0 0.0
    %2760 = vmatpush1.msra.mxu0 0.0
    %2761 = vmatprep.subr.mxu0 0.0
    %2762 = vmatpush1.msra.mxu0 0.0
    %2763 = vmatprep.subr.mxu0 0.0
    %2764 = vmatpush1.msra.mxu0 0.0
    %2765 = vmatprep.subr.mxu0 0.0
    %2766 = vmatpush1.msra.mxu0 0.0
    %2767 = vmatprep.subr.mxu0 0.0
    %2768 = vmatpush1.msra.mxu0 0.0
    %2769 = vmatprep.subr.mxu0 0.0
    %2770 = vmatpush1.msra.mxu0 0.0
    %2771 = vmatprep.subr.mxu0 0.0
    %2772 = vmatpush1.msra.mxu0 0.0
    %2773 = vmatprep.subr.mxu0 0.0
    %2774 = vmatpush1.msra.mxu0 0.0
    %2775 = vmatprep.subr.mxu0 0.0
    %2776 = vmatpush1.msra.mxu0 0.0
    %2777 = vmatprep.subr.mxu0 0.0
    %2778 = vmatpush1.msra.mxu0 0.0
    %2779 = vmatprep.subr.mxu0 0.0
    %2780 = vmatpush1.msra.mxu0 0.0
    %2781 = vmatprep.subr.mxu0 0.0
    %2782 = vmatpush1.msra.mxu0 0.0
    %2783 = vmatprep.subr.mxu0 0.0
    %2784 = vmatpush1.msra.mxu0 0.0
    %2785 = vmatprep.subr.mxu0 0.0
    %2786 = vmatpush1.msra.mxu0 0.0
    %2787 = vmatprep.subr.mxu0 0.0
    %2788 = vmatpush1.msra.mxu0 0.0
    %2789 = vmatprep.subr.mxu0 0.0
    %2790 = vmatpush1.msra.mxu0 0.0
    %2791 = vmatprep.subr.mxu0 0.0
    %2792 = vmatpush1.msra.mxu0 0.0
    %2793 = vmatprep.subr.mxu0 0.0
    %2794 = vmatpush1.msra.mxu0 0.0
    %2795 = vmatprep.subr.mxu0 0.0
    %2796 = vmatpush1.msra.mxu0 0.0
    %2797 = vmatprep.subr.mxu0 0.0
    %2798 = vmatpush1.msra.mxu0 0.0
    %2799 = vmatprep.subr.mxu0 0.0
    %2800 = vmatpush1.msra.mxu0 0.0
    %2801 = vmatprep.mubr.f32.mxu0 0.0
    %2802 = vmatmul.mubr.f32.gmra.mrb[0].mxu0 %v2581
    %v2803 = vpop.f32.mrb[0].mxu0
    %v2804 = vadd.f32 %v116, %v2803
    %v2805 = vpop.f32.mrb[0].mxu0
    %2806 = vdwg.mxu0
    %v2807 = vmul.f32 %v2729, %v2804
    %v2808 = vadd.f32 %v2577, %v2807
    %v2809 = vtanh.pop %v2808
    %v2810 = vsub.f32 1.0, %v2736
    %v2811 = vmul.f32 %v2810, %v2809
    %v2812 = vmul.f32 %v2736, %v2364
    %v2813 = vadd.f32 %v2811, %v2812
    %s2814 = scalar_lea.vmem [#allocation2], 12
    %v2815 = vld [vmem:[%s2814] sm:$0x3]
    %v2817 = vsel %vm120, %v2815, 0
    %2819 = vmatprep.subr.mxu0 0.0
    %2820 = vmatpush1.msra.mxu0 %v65
    %2821 = vmatprep.subr.mxu0 0.0
    %2822 = vmatpush1.msra.mxu0 %v66
    %2823 = vmatprep.subr.mxu0 0.0
    %2824 = vmatpush1.msra.mxu0 0.0
    %2825 = vmatprep.subr.mxu0 0.0
    %2826 = vmatpush1.msra.mxu0 0.0
    %2827 = vmatprep.subr.mxu0 0.0
    %2828 = vmatpush1.msra.mxu0 0.0
    %2829 = vmatprep.subr.mxu0 0.0
    %2830 = vmatpush1.msra.mxu0 0.0
    %2831 = vmatprep.subr.mxu0 0.0
    %2832 = vmatpush1.msra.mxu0 0.0
    %2833 = vmatprep.subr.mxu0 0.0
    %2834 = vmatpush1.msra.mxu0 0.0
    %2835 = vmatprep.subr.mxu0 0.0
    %2836 = vmatpush1.msra.mxu0 0.0
    %2837 = vmatprep.subr.mxu0 0.0
    %2838 = vmatpush1.msra.mxu0 0.0
    %2839 = vmatprep.subr.mxu0 0.0
    %2840 = vmatpush1.msra.mxu0 0.0
    %2841 = vmatprep.subr.mxu0 0.0
    %2842 = vmatpush1.msra.mxu0 0.0
    %2843 = vmatprep.subr.mxu0 0.0
    %2844 = vmatpush1.msra.mxu0 0.0
    %2845 = vmatprep.subr.mxu0 0.0
    %2846 = vmatpush1.msra.mxu0 0.0
    %2847 = vmatprep.subr.mxu0 0.0
    %2848 = vmatpush1.msra.mxu0 0.0
    %2849 = vmatprep.subr.mxu0 0.0
    %2850 = vmatpush1.msra.mxu0 0.0
    %2851 = vmatprep.subr.mxu0 0.0
    %2852 = vmatpush1.msra.mxu0 0.0
    %2853 = vmatprep.subr.mxu0 0.0
    %2854 = vmatpush1.msra.mxu0 0.0
    %2855 = vmatprep.subr.mxu0 0.0
    %2856 = vmatpush1.msra.mxu0 0.0
    %2857 = vmatprep.subr.mxu0 0.0
    %2858 = vmatpush1.msra.mxu0 0.0
    %2859 = vmatprep.subr.mxu0 0.0
    %2860 = vmatpush1.msra.mxu0 0.0
    %2861 = vmatprep.subr.mxu0 0.0
    %2862 = vmatpush1.msra.mxu0 0.0
    %2863 = vmatprep.subr.mxu0 0.0
    %2864 = vmatpush1.msra.mxu0 0.0
    %2865 = vmatprep.subr.mxu0 0.0
    %2866 = vmatpush1.msra.mxu0 0.0
    %2867 = vmatprep.subr.mxu0 0.0
    %2868 = vmatpush1.msra.mxu0 0.0
    %2869 = vmatprep.subr.mxu0 0.0
    %2870 = vmatpush1.msra.mxu0 0.0
    %2871 = vmatprep.subr.mxu0 0.0
    %2872 = vmatpush1.msra.mxu0 0.0
    %2873 = vmatprep.subr.mxu0 0.0
    %2874 = vmatpush1.msra.mxu0 0.0
    %2875 = vmatprep.subr.mxu0 0.0
    %2876 = vmatpush1.msra.mxu0 0.0
    %2877 = vmatprep.subr.mxu0 0.0
    %2878 = vmatpush1.msra.mxu0 0.0
    %2879 = vmatprep.subr.mxu0 0.0
    %2880 = vmatpush1.msra.mxu0 0.0
    %2881 = vmatprep.subr.mxu0 0.0
    %2882 = vmatpush1.msra.mxu0 0.0
    %2883 = vmatprep.mubr.f32.mxu0 0.0
    %2884 = vmatmul.mubr.f32.gmra.mrb[0].mxu0 %v2817
    %v2885 = vpop.f32.mrb[0].mxu0
    %v2886 = vadd.f32 %v92, %v2885
    %v2887 = vpop.f32.mrb[0].mxu0
    %2888 = vdwg.mxu0
    %2889 = vmatprep.subr.mxu0 0.0
    %2890 = vmatpush1.msra.mxu0 %v68
    %2891 = vmatprep.subr.mxu0 0.0
    %2892 = vmatpush1.msra.mxu0 %v69
    %2893 = vmatprep.subr.mxu0 0.0
    %2894 = vmatpush1.msra.mxu0 0.0
    %2895 = vmatprep.subr.mxu0 0.0
    %2896 = vmatpush1.msra.mxu0 0.0
    %2897 = vmatprep.subr.mxu0 0.0
    %2898 = vmatpush1.msra.mxu0 0.0
    %2899 = vmatprep.subr.mxu0 0.0
    %2900 = vmatpush1.msra.mxu0 0.0
    %2901 = vmatprep.subr.mxu0 0.0
    %2902 = vmatpush1.msra.mxu0 0.0
    %2903 = vmatprep.subr.mxu0 0.0
    %2904 = vmatpush1.msra.mxu0 0.0
    %2905 = vmatprep.subr.mxu0 0.0
    %2906 = vmatpush1.msra.mxu0 0.0
    %2907 = vmatprep.subr.mxu0 0.0
    %2908 = vmatpush1.msra.mxu0 0.0
    %2909 = vmatprep.subr.mxu0 0.0
    %2910 = vmatpush1.msra.mxu0 0.0
    %2911 = vmatprep.subr.mxu0 0.0
    %2912 = vmatpush1.msra.mxu0 0.0
    %2913 = vmatprep.subr.mxu0 0.0
    %2914 = vmatpush1.msra.mxu0 0.0
    %2915 = vmatprep.subr.mxu0 0.0
    %2916 = vmatpush1.msra.mxu0 0.0
    %2917 = vmatprep.subr.mxu0 0.0
    %2918 = vmatpush1.msra.mxu0 0.0
    %2919 = vmatprep.subr.mxu0 0.0
    %2920 = vmatpush1.msra.mxu0 0.0
    %2921 = vmatprep.subr.mxu0 0.0
    %2922 = vmatpush1.msra.mxu0 0.0
    %2923 = vmatprep.subr.mxu0 0.0
    %2924 = vmatpush1.msra.mxu0 0.0
    %2925 = vmatprep.subr.mxu0 0.0
    %2926 = vmatpush1.msra.mxu0 0.0
    %2927 = vmatprep.subr.mxu0 0.0
    %2928 = vmatpush1.msra.mxu0 0.0
    %2929 = vmatprep.subr.mxu0 0.0
    %2930 = vmatpush1.msra.mxu0 0.0
    %2931 = vmatprep.subr.mxu0 0.0
    %2932 = vmatpush1.msra.mxu0 0.0
    %2933 = vmatprep.subr.mxu0 0.0
    %2934 = vmatpush1.msra.mxu0 0.0
    %2935 = vmatprep.subr.mxu0 0.0
    %2936 = vmatpush1.msra.mxu0 0.0
    %2937 = vmatprep.subr.mxu0 0.0
    %2938 = vmatpush1.msra.mxu0 0.0
    %2939 = vmatprep.subr.mxu0 0.0
    %2940 = vmatpush1.msra.mxu0 0.0
    %2941 = vmatprep.subr.mxu0 0.0
    %2942 = vmatpush1.msra.mxu0 0.0
    %2943 = vmatprep.subr.mxu0 0.0
    %2944 = vmatpush1.msra.mxu0 0.0
    %2945 = vmatprep.subr.mxu0 0.0
    %2946 = vmatpush1.msra.mxu0 0.0
    %2947 = vmatprep.subr.mxu0 0.0
    %2948 = vmatpush1.msra.mxu0 0.0
    %2949 = vmatprep.subr.mxu0 0.0
    %2950 = vmatpush1.msra.mxu0 0.0
    %2951 = vmatprep.subr.mxu0 0.0
    %2952 = vmatpush1.msra.mxu0 0.0
    %2953 = vmatprep.mubr.f32.mxu0 0.0
    %2954 = vmatmul.mubr.f32.gmra.mrb[0].mxu0 %v2817
    %v2955 = vpop.f32.mrb[0].mxu0
    %v2956 = vadd.f32 %v100, %v2955
    %v2957 = vpop.f32.mrb[0].mxu0
    %2958 = vdwg.mxu0
    %2959 = vmatprep.subr.mxu0 0.0
    %2960 = vmatpush1.msra.mxu0 %v71
    %2961 = vmatprep.subr.mxu0 0.0
    %2962 = vmatpush1.msra.mxu0 %v72
    %2963 = vmatprep.subr.mxu0 0.0
    %2964 = vmatpush1.msra.mxu0 0.0
    %2965 = vmatprep.subr.mxu0 0.0
    %2966 = vmatpush1.msra.mxu0 0.0
    %2967 = vmatprep.subr.mxu0 0.0
    %2968 = vmatpush1.msra.mxu0 0.0
    %2969 = vmatprep.subr.mxu0 0.0
    %2970 = vmatpush1.msra.mxu0 0.0
    %2971 = vmatprep.subr.mxu0 0.0
    %2972 = vmatpush1.msra.mxu0 0.0
    %2973 = vmatprep.subr.mxu0 0.0
    %2974 = vmatpush1.msra.mxu0 0.0
    %2975 = vmatprep.subr.mxu0 0.0
    %2976 = vmatpush1.msra.mxu0 0.0
    %2977 = vmatprep.subr.mxu0 0.0
    %2978 = vmatpush1.msra.mxu0 0.0
    %2979 = vmatprep.subr.mxu0 0.0
    %2980 = vmatpush1.msra.mxu0 0.0
    %2981 = vmatprep.subr.mxu0 0.0
    %2982 = vmatpush1.msra.mxu0 0.0
    %2983 = vmatprep.subr.mxu0 0.0
    %2984 = vmatpush1.msra.mxu0 0.0
    %2985 = vmatprep.subr.mxu0 0.0
    %2986 = vmatpush1.msra.mxu0 0.0
    %2987 = vmatprep.subr.mxu0 0.0
    %2988 = vmatpush1.msra.mxu0 0.0
    %2989 = vmatprep.subr.mxu0 0.0
    %2990 = vmatpush1.msra.mxu0 0.0
    %2991 = vmatprep.subr.mxu0 0.0
    %2992 = vmatpush1.msra.mxu0 0.0
    %2993 = vmatprep.subr.mxu0 0.0
    %2994 = vmatpush1.msra.mxu0 0.0
    %2995 = vmatprep.subr.mxu0 0.0
    %2996 = vmatpush1.msra.mxu0 0.0
    %2997 = vmatprep.subr.mxu0 0.0
    %2998 = vmatpush1.msra.mxu0 0.0
    %2999 = vmatprep.subr.mxu0 0.0
    %3000 = vmatpush1.msra.mxu0 0.0
    %3001 = vmatprep.subr.mxu0 0.0
    %3002 = vmatpush1.msra.mxu0 0.0
    %3003 = vmatprep.subr.mxu0 0.0
    %3004 = vmatpush1.msra.mxu0 0.0
    %3005 = vmatprep.subr.mxu0 0.0
    %3006 = vmatpush1.msra.mxu0 0.0
    %3007 = vmatprep.subr.mxu0 0.0
    %3008 = vmatpush1.msra.mxu0 0.0
    %3009 = vmatprep.subr.mxu0 0.0
    %3010 = vmatpush1.msra.mxu0 0.0
    %3011 = vmatprep.subr.mxu0 0.0
    %3012 = vmatpush1.msra.mxu0 0.0
    %3013 = vmatprep.subr.mxu0 0.0
    %3014 = vmatpush1.msra.mxu0 0.0
    %3015 = vmatprep.subr.mxu0 0.0
    %3016 = vmatpush1.msra.mxu0 0.0
    %3017 = vmatprep.subr.mxu0 0.0
    %3018 = vmatpush1.msra.mxu0 0.0
    %3019 = vmatprep.subr.mxu0 0.0
    %3020 = vmatpush1.msra.mxu0 0.0
    %3021 = vmatprep.subr.mxu0 0.0
    %3022 = vmatpush1.msra.mxu0 0.0
    %3023 = vmatprep.mubr.f32.mxu0 0.0
    %3024 = vmatmul.mubr.f32.gmra.mrb[0].mxu0 %v2817
    %v3025 = vpop.f32.mrb[0].mxu0
    %v3026 = vadd.f32 %v108, %v3025
    %v3027 = vpop.f32.mrb[0].mxu0
    %3028 = vdwg.mxu0
    %v3030 = vsel %vm334, %v2813, 0
    %3032 = vmatprep.subr.mxu0 0.0
    %3033 = vmatpush1.msra.mxu0 %v73
    %3034 = vmatprep.subr.mxu0 0.0
    %3035 = vmatpush1.msra.mxu0 %v74
    %3036 = vmatprep.subr.mxu0 0.0
    %3037 = vmatpush1.msra.mxu0 %v75
    %3038 = vmatprep.subr.mxu0 0.0
    %3039 = vmatpush1.msra.mxu0 %v76
    %3040 = vmatprep.subr.mxu0 0.0
    %3041 = vmatpush1.msra.mxu0 0.0
    %3042 = vmatprep.subr.mxu0 0.0
    %3043 = vmatpush1.msra.mxu0 0.0
    %3044 = vmatprep.subr.mxu0 0.0
    %3045 = vmatpush1.msra.mxu0 0.0
    %3046 = vmatprep.subr.mxu0 0.0
    %3047 = vmatpush1.msra.mxu0 0.0
    %3048 = vmatprep.subr.mxu0 0.0
    %3049 = vmatpush1.msra.mxu0 0.0
    %3050 = vmatprep.subr.mxu0 0.0
    %3051 = vmatpush1.msra.mxu0 0.0
    %3052 = vmatprep.subr.mxu0 0.0
    %3053 = vmatpush1.msra.mxu0 0.0
    %3054 = vmatprep.subr.mxu0 0.0
    %3055 = vmatpush1.msra.mxu0 0.0
    %3056 = vmatprep.subr.mxu0 0.0
    %3057 = vmatpush1.msra.mxu0 0.0
    %3058 = vmatprep.subr.mxu0 0.0
    %3059 = vmatpush1.msra.mxu0 0.0
    %3060 = vmatprep.subr.mxu0 0.0
    %3061 = vmatpush1.msra.mxu0 0.0
    %3062 = vmatprep.subr.mxu0 0.0
    %3063 = vmatpush1.msra.mxu0 0.0
    %3064 = vmatprep.subr.mxu0 0.0
    %3065 = vmatpush1.msra.mxu0 0.0
    %3066 = vmatprep.subr.mxu0 0.0
    %3067 = vmatpush1.msra.mxu0 0.0
    %3068 = vmatprep.subr.mxu0 0.0
    %3069 = vmatpush1.msra.mxu0 0.0
    %3070 = vmatprep.subr.mxu0 0.0
    %3071 = vmatpush1.msra.mxu0 0.0
    %3072 = vmatprep.subr.mxu0 0.0
    %3073 = vmatpush1.msra.mxu0 0.0
    %3074 = vmatprep.subr.mxu0 0.0
    %3075 = vmatpush1.msra.mxu0 0.0
    %3076 = vmatprep.subr.mxu0 0.0
    %3077 = vmatpush1.msra.mxu0 0.0
    %3078 = vmatprep.subr.mxu0 0.0
    %3079 = vmatpush1.msra.mxu0 0.0
    %3080 = vmatprep.subr.mxu0 0.0
    %3081 = vmatpush1.msra.mxu0 0.0
    %3082 = vmatprep.subr.mxu0 0.0
    %3083 = vmatpush1.msra.mxu0 0.0
    %3084 = vmatprep.subr.mxu0 0.0
    %3085 = vmatpush1.msra.mxu0 0.0
    %3086 = vmatprep.subr.mxu0 0.0
    %3087 = vmatpush1.msra.mxu0 0.0
    %3088 = vmatprep.subr.mxu0 0.0
    %3089 = vmatpush1.msra.mxu0 0.0
    %3090 = vmatprep.subr.mxu0 0.0
    %3091 = vmatpush1.msra.mxu0 0.0
    %3092 = vmatprep.subr.mxu0 0.0
    %3093 = vmatpush1.msra.mxu0 0.0
    %3094 = vmatprep.subr.mxu0 0.0
    %3095 = vmatpush1.msra.mxu0 0.0
    %3096 = vmatprep.mubr.f32.mxu0 0.0
    %3097 = vmatmul.mubr.f32.gmra.mrb[0].mxu0 %v3030
    %v3098 = vpop.f32.mrb[0].mxu0
    %v3099 = vadd.f32 0.0, %v3098
    %v3100 = vpop.f32.mrb[0].mxu0
    %3101 = vdwg.mxu0
    %3102 = vmatprep.subr.mxu0 0.0
    %3103 = vmatpush1.msra.mxu0 %v78
    %3104 = vmatprep.subr.mxu0 0.0
    %3105 = vmatpush1.msra.mxu0 %v79
    %3106 = vmatprep.subr.mxu0 0.0
    %3107 = vmatpush1.msra.mxu0 %v80
    %3108 = vmatprep.subr.mxu0 0.0
    %3109 = vmatpush1.msra.mxu0 %v81
    %3110 = vmatprep.subr.mxu0 0.0
    %3111 = vmatpush1.msra.mxu0 0.0
    %3112 = vmatprep.subr.mxu0 0.0
    %3113 = vmatpush1.msra.mxu0 0.0
    %3114 = vmatprep.subr.mxu0 0.0
    %3115 = vmatpush1.msra.mxu0 0.0
    %3116 = vmatprep.subr.mxu0 0.0
    %3117 = vmatpush1.msra.mxu0 0.0
    %3118 = vmatprep.subr.mxu0 0.0
    %3119 = vmatpush1.msra.mxu0 0.0
    %3120 = vmatprep.subr.mxu0 0.0
    %3121 = vmatpush1.msra.mxu0 0.0
    %3122 = vmatprep.subr.mxu0 0.0
    %3123 = vmatpush1.msra.mxu0 0.0
    %3124 = vmatprep.subr.mxu0 0.0
    %3125 = vmatpush1.msra.mxu0 0.0
    %3126 = vmatprep.subr.mxu0 0.0
    %3127 = vmatpush1.msra.mxu0 0.0
    %3128 = vmatprep.subr.mxu0 0.0
    %3129 = vmatpush1.msra.mxu0 0.0
    %3130 = vmatprep.subr.mxu0 0.0
    %3131 = vmatpush1.msra.mxu0 0.0
    %3132 = vmatprep.subr.mxu0 0.0
    %3133 = vmatpush1.msra.mxu0 0.0
    %3134 = vmatprep.subr.mxu0 0.0
    %3135 = vmatpush1.msra.mxu0 0.0
    %3136 = vmatprep.subr.mxu0 0.0
    %3137 = vmatpush1.msra.mxu0 0.0
    %3138 = vmatprep.subr.mxu0 0.0
    %3139 = vmatpush1.msra.mxu0 0.0
    %3140 = vmatprep.subr.mxu0 0.0
    %3141 = vmatpush1.msra.mxu0 0.0
    %3142 = vmatprep.subr.mxu0 0.0
    %3143 = vmatpush1.msra.mxu0 0.0
    %3144 = vmatprep.subr.mxu0 0.0
    %3145 = vmatpush1.msra.mxu0 0.0
    %3146 = vmatprep.subr.mxu0 0.0
    %3147 = vmatpush1.msra.mxu0 0.0
    %3148 = vmatprep.subr.mxu0 0.0
    %3149 = vmatpush1.msra.mxu0 0.0
    %3150 = vmatprep.subr.mxu0 0.0
    %3151 = vmatpush1.msra.mxu0 0.0
    %3152 = vmatprep.subr.mxu0 0.0
    %3153 = vmatpush1.msra.mxu0 0.0
    %3154 = vmatprep.subr.mxu0 0.0
    %3155 = vmatpush1.msra.mxu0 0.0
    %3156 = vmatprep.subr.mxu0 0.0
    %3157 = vmatpush1.msra.mxu0 0.0
    %3158 = vmatprep.subr.mxu0 0.0
    %3159 = vmatpush1.msra.mxu0 0.0
    %3160 = vmatprep.subr.mxu0 0.0
    %3161 = vmatpush1.msra.mxu0 0.0
    %3162 = vmatprep.subr.mxu0 0.0
    %3163 = vmatpush1.msra.mxu0 0.0
    %3164 = vmatprep.subr.mxu0 0.0
    %3165 = vmatpush1.msra.mxu0 0.0
    %3166 = vmatprep.mubr.f32.mxu0 0.0
    %3167 = vmatmul.mubr.f32.gmra.mrb[0].mxu0 %v3030
    %v3168 = vpop.f32.mrb[0].mxu0
    %v3169 = vadd.f32 0.0, %v3168
    %v3170 = vpop.f32.mrb[0].mxu0
    %3171 = vdwg.mxu0
    %v3172 = vadd.f32 %v2886, %v3099
    %v3173 = vxor.u32 %v3172, 2147483648
    %v3174 = vmul.f32 %v3173, 1.442695
    %v3175 = vpow.pop %v3174
    %v3176 = vadd.f32 %v3175, 1.0
    %v3177 = vrcp.pop %v3176
    %v3178 = vmul.f32 1.0, %v3177
    %v3179 = vadd.f32 %v2956, %v3169
    %v3180 = vxor.u32 %v3179, 2147483648
    %v3181 = vmul.f32 %v3180, 1.442695
    %v3182 = vpow.pop %v3181
    %v3183 = vadd.f32 %v3182, 1.0
    %v3184 = vrcp.pop %v3183
    %v3185 = vmul.f32 1.0, %v3184
    %3186 = vmatprep.subr.mxu0 0.0
    %3187 = vmatpush1.msra.mxu0 %v83
    %3188 = vmatprep.subr.mxu0 0.0
    %3189 = vmatpush1.msra.mxu0 %v84
    %3190 = vmatprep.subr.mxu0 0.0
    %3191 = vmatpush1.msra.mxu0 %v85
    %3192 = vmatprep.subr.mxu0 0.0
    %3193 = vmatpush1.msra.mxu0 %v86
    %3194 = vmatprep.subr.mxu0 0.0
    %3195 = vmatpush1.msra.mxu0 0.0
    %3196 = vmatprep.subr.mxu0 0.0
    %3197 = vmatpush1.msra.mxu0 0.0
    %3198 = vmatprep.subr.mxu0 0.0
    %3199 = vmatpush1.msra.mxu0 0.0
    %3200 = vmatprep.subr.mxu0 0.0
    %3201 = vmatpush1.msra.mxu0 0.0
    %3202 = vmatprep.subr.mxu0 0.0
    %3203 = vmatpush1.msra.mxu0 0.0
    %3204 = vmatprep.subr.mxu0 0.0
    %3205 = vmatpush1.msra.mxu0 0.0
    %3206 = vmatprep.subr.mxu0 0.0
    %3207 = vmatpush1.msra.mxu0 0.0
    %3208 = vmatprep.subr.mxu0 0.0
    %3209 = vmatpush1.msra.mxu0 0.0
    %3210 = vmatprep.subr.mxu0 0.0
    %3211 = vmatpush1.msra.mxu0 0.0
    %3212 = vmatprep.subr.mxu0 0.0
    %3213 = vmatpush1.msra.mxu0 0.0
    %3214 = vmatprep.subr.mxu0 0.0
    %3215 = vmatpush1.msra.mxu0 0.0
    %3216 = vmatprep.subr.mxu0 0.0
    %3217 = vmatpush1.msra.mxu0 0.0
    %3218 = vmatprep.subr.mxu0 0.0
    %3219 = vmatpush1.msra.mxu0 0.0
    %3220 = vmatprep.subr.mxu0 0.0
    %3221 = vmatpush1.msra.mxu0 0.0
    %3222 = vmatprep.subr.mxu0 0.0
    %3223 = vmatpush1.msra.mxu0 0.0
    %3224 = vmatprep.subr.mxu0 0.0
    %3225 = vmatpush1.msra.mxu0 0.0
    %3226 = vmatprep.subr.mxu0 0.0
    %3227 = vmatpush1.msra.mxu0 0.0
    %3228 = vmatprep.subr.mxu0 0.0
    %3229 = vmatpush1.msra.mxu0 0.0
    %3230 = vmatprep.subr.mxu0 0.0
    %3231 = vmatpush1.msra.mxu0 0.0
    %3232 = vmatprep.subr.mxu0 0.0
    %3233 = vmatpush1.msra.mxu0 0.0
    %3234 = vmatprep.subr.mxu0 0.0
    %3235 = vmatpush1.msra.mxu0 0.0
    %3236 = vmatprep.subr.mxu0 0.0
    %3237 = vmatpush1.msra.mxu0 0.0
    %3238 = vmatprep.subr.mxu0 0.0
    %3239 = vmatpush1.msra.mxu0 0.0
    %3240 = vmatprep.subr.mxu0 0.0
    %3241 = vmatpush1.msra.mxu0 0.0
    %3242 = vmatprep.subr.mxu0 0.0
    %3243 = vmatpush1.msra.mxu0 0.0
    %3244 = vmatprep.subr.mxu0 0.0
    %3245 = vmatpush1.msra.mxu0 0.0
    %3246 = vmatprep.subr.mxu0 0.0
    %3247 = vmatpush1.msra.mxu0 0.0
    %3248 = vmatprep.subr.mxu0 0.0
    %3249 = vmatpush1.msra.mxu0 0.0
    %3250 = vmatprep.mubr.f32.mxu0 0.0
    %3251 = vmatmul.mubr.f32.gmra.mrb[0].mxu0 %v3030
    %v3252 = vpop.f32.mrb[0].mxu0
    %v3253 = vadd.f32 %v116, %v3252
    %v3254 = vpop.f32.mrb[0].mxu0
    %3255 = vdwg.mxu0
    %v3256 = vmul.f32 %v3178, %v3253
    %v3257 = vadd.f32 %v3026, %v3256
    %v3258 = vtanh.pop %v3257
    %v3259 = vsub.f32 1.0, %v3185
    %v3260 = vmul.f32 %v3259, %v3258
    %v3261 = vmul.f32 %v3185, %v2813
    %v3262 = vadd.f32 %v3260, %v3261
    %s3263 = scalar_lea.vmem [#allocation2], 14
    %v3264 = vld [vmem:[%s3263] sm:$0x3]
    %v3266 = vsel %vm120, %v3264, 0
    %3268 = vmatprep.subr.mxu0 0.0
    %3269 = vmatpush1.msra.mxu0 %v65
    %3270 = vmatprep.subr.mxu0 0.0
    %3271 = vmatpush1.msra.mxu0 %v66
    %3272 = vmatprep.subr.mxu0 0.0
    %3273 = vmatpush1.msra.mxu0 0.0
    %3274 = vmatprep.subr.mxu0 0.0
    %3275 = vmatpush1.msra.mxu0 0.0
    %3276 = vmatprep.subr.mxu0 0.0
    %3277 = vmatpush1.msra.mxu0 0.0
    %3278 = vmatprep.subr.mxu0 0.0
    %3279 = vmatpush1.msra.mxu0 0.0
    %3280 = vmatprep.subr.mxu0 0.0
    %3281 = vmatpush1.msra.mxu0 0.0
    %3282 = vmatprep.subr.mxu0 0.0
    %3283 = vmatpush1.msra.mxu0 0.0
    %3284 = vmatprep.subr.mxu0 0.0
    %3285 = vmatpush1.msra.mxu0 0.0
    %3286 = vmatprep.subr.mxu0 0.0
    %3287 = vmatpush1.msra.mxu0 0.0
    %3288 = vmatprep.subr.mxu0 0.0
    %3289 = vmatpush1.msra.mxu0 0.0
    %3290 = vmatprep.subr.mxu0 0.0
    %3291 = vmatpush1.msra.mxu0 0.0
    %3292 = vmatprep.subr.mxu0 0.0
    %3293 = vmatpush1.msra.mxu0 0.0
    %3294 = vmatprep.subr.mxu0 0.0
    %3295 = vmatpush1.msra.mxu0 0.0
    %3296 = vmatprep.subr.mxu0 0.0
    %3297 = vmatpush1.msra.mxu0 0.0
    %3298 = vmatprep.subr.mxu0 0.0
    %3299 = vmatpush1.msra.mxu0 0.0
    %3300 = vmatprep.subr.mxu0 0.0
    %3301 = vmatpush1.msra.mxu0 0.0
    %3302 = vmatprep.subr.mxu0 0.0
    %3303 = vmatpush1.msra.mxu0 0.0
    %3304 = vmatprep.subr.mxu0 0.0
    %3305 = vmatpush1.msra.mxu0 0.0
    %3306 = vmatprep.subr.mxu0 0.0
    %3307 = vmatpush1.msra.mxu0 0.0
    %3308 = vmatprep.subr.mxu0 0.0
    %3309 = vmatpush1.msra.mxu0 0.0
    %3310 = vmatprep.subr.mxu0 0.0
    %3311 = vmatpush1.msra.mxu0 0.0
    %3312 = vmatprep.subr.mxu0 0.0
    %3313 = vmatpush1.msra.mxu0 0.0
    %3314 = vmatprep.subr.mxu0 0.0
    %3315 = vmatpush1.msra.mxu0 0.0
    %3316 = vmatprep.subr.mxu0 0.0
    %3317 = vmatpush1.msra.mxu0 0.0
    %3318 = vmatprep.subr.mxu0 0.0
    %3319 = vmatpush1.msra.mxu0 0.0
    %3320 = vmatprep.subr.mxu0 0.0
    %3321 = vmatpush1.msra.mxu0 0.0
    %3322 = vmatprep.subr.mxu0 0.0
    %3323 = vmatpush1.msra.mxu0 0.0
    %3324 = vmatprep.subr.mxu0 0.0
    %3325 = vmatpush1.msra.mxu0 0.0
    %3326 = vmatprep.subr.mxu0 0.0
    %3327 = vmatpush1.msra.mxu0 0.0
    %3328 = vmatprep.subr.mxu0 0.0
    %3329 = vmatpush1.msra.mxu0 0.0
    %3330 = vmatprep.subr.mxu0 0.0
    %3331 = vmatpush1.msra.mxu0 0.0
    %3332 = vmatprep.mubr.f32.mxu0 0.0
    %3333 = vmatmul.mubr.f32.gmra.mrb[0].mxu0 %v3266
    %v3334 = vpop.f32.mrb[0].mxu0
    %v3335 = vadd.f32 %v92, %v3334
    %v3336 = vpop.f32.mrb[0].mxu0
    %3337 = vdwg.mxu0
    %3338 = vmatprep.subr.mxu0 0.0
    %3339 = vmatpush1.msra.mxu0 %v68
    %3340 = vmatprep.subr.mxu0 0.0
    %3341 = vmatpush1.msra.mxu0 %v69
    %3342 = vmatprep.subr.mxu0 0.0
    %3343 = vmatpush1.msra.mxu0 0.0
    %3344 = vmatprep.subr.mxu0 0.0
    %3345 = vmatpush1.msra.mxu0 0.0
    %3346 = vmatprep.subr.mxu0 0.0
    %3347 = vmatpush1.msra.mxu0 0.0
    %3348 = vmatprep.subr.mxu0 0.0
    %3349 = vmatpush1.msra.mxu0 0.0
    %3350 = vmatprep.subr.mxu0 0.0
    %3351 = vmatpush1.msra.mxu0 0.0
    %3352 = vmatprep.subr.mxu0 0.0
    %3353 = vmatpush1.msra.mxu0 0.0
    %3354 = vmatprep.subr.mxu0 0.0
    %3355 = vmatpush1.msra.mxu0 0.0
    %3356 = vmatprep.subr.mxu0 0.0
    %3357 = vmatpush1.msra.mxu0 0.0
    %3358 = vmatprep.subr.mxu0 0.0
    %3359 = vmatpush1.msra.mxu0 0.0
    %3360 = vmatprep.subr.mxu0 0.0
    %3361 = vmatpush1.msra.mxu0 0.0
    %3362 = vmatprep.subr.mxu0 0.0
    %3363 = vmatpush1.msra.mxu0 0.0
    %3364 = vmatprep.subr.mxu0 0.0
    %3365 = vmatpush1.msra.mxu0 0.0
    %3366 = vmatprep.subr.mxu0 0.0
    %3367 = vmatpush1.msra.mxu0 0.0
    %3368 = vmatprep.subr.mxu0 0.0
    %3369 = vmatpush1.msra.mxu0 0.0
    %3370 = vmatprep.subr.mxu0 0.0
    %3371 = vmatpush1.msra.mxu0 0.0
    %3372 = vmatprep.subr.mxu0 0.0
    %3373 = vmatpush1.msra.mxu0 0.0
    %3374 = vmatprep.subr.mxu0 0.0
    %3375 = vmatpush1.msra.mxu0 0.0
    %3376 = vmatprep.subr.mxu0 0.0
    %3377 = vmatpush1.msra.mxu0 0.0
    %3378 = vmatprep.subr.mxu0 0.0
    %3379 = vmatpush1.msra.mxu0 0.0
    %3380 = vmatprep.subr.mxu0 0.0
    %3381 = vmatpush1.msra.mxu0 0.0
    %3382 = vmatprep.subr.mxu0 0.0
    %3383 = vmatpush1.msra.mxu0 0.0
    %3384 = vmatprep.subr.mxu0 0.0
    %3385 = vmatpush1.msra.mxu0 0.0
    %3386 = vmatprep.subr.mxu0 0.0
    %3387 = vmatpush1.msra.mxu0 0.0
    %3388 = vmatprep.subr.mxu0 0.0
    %3389 = vmatpush1.msra.mxu0 0.0
    %3390 = vmatprep.subr.mxu0 0.0
    %3391 = vmatpush1.msra.mxu0 0.0
    %3392 = vmatprep.subr.mxu0 0.0
    %3393 = vmatpush1.msra.mxu0 0.0
    %3394 = vmatprep.subr.mxu0 0.0
    %3395 = vmatpush1.msra.mxu0 0.0
    %3396 = vmatprep.subr.mxu0 0.0
    %3397 = vmatpush1.msra.mxu0 0.0
    %3398 = vmatprep.subr.mxu0 0.0
    %3399 = vmatpush1.msra.mxu0 0.0
    %3400 = vmatprep.subr.mxu0 0.0
    %3401 = vmatpush1.msra.mxu0 0.0
    %3402 = vmatprep.mubr.f32.mxu0 0.0
    %3403 = vmatmul.mubr.f32.gmra.mrb[0].mxu0 %v3266
    %v3404 = vpop.f32.mrb[0].mxu0
    %v3405 = vadd.f32 %v100, %v3404
    %v3406 = vpop.f32.mrb[0].mxu0
    %3407 = vdwg.mxu0
    %3408 = vmatprep.subr.mxu0 0.0
    %3409 = vmatpush1.msra.mxu0 %v71
    %3410 = vmatprep.subr.mxu0 0.0
    %3411 = vmatpush1.msra.mxu0 %v72
    %3412 = vmatprep.subr.mxu0 0.0
    %3413 = vmatpush1.msra.mxu0 0.0
    %3414 = vmatprep.subr.mxu0 0.0
    %3415 = vmatpush1.msra.mxu0 0.0
    %3416 = vmatprep.subr.mxu0 0.0
    %3417 = vmatpush1.msra.mxu0 0.0
    %3418 = vmatprep.subr.mxu0 0.0
    %3419 = vmatpush1.msra.mxu0 0.0
    %3420 = vmatprep.subr.mxu0 0.0
    %3421 = vmatpush1.msra.mxu0 0.0
    %3422 = vmatprep.subr.mxu0 0.0
    %3423 = vmatpush1.msra.mxu0 0.0
    %3424 = vmatprep.subr.mxu0 0.0
    %3425 = vmatpush1.msra.mxu0 0.0
    %3426 = vmatprep.subr.mxu0 0.0
    %3427 = vmatpush1.msra.mxu0 0.0
    %3428 = vmatprep.subr.mxu0 0.0
    %3429 = vmatpush1.msra.mxu0 0.0
    %3430 = vmatprep.subr.mxu0 0.0
    %3431 = vmatpush1.msra.mxu0 0.0
    %3432 = vmatprep.subr.mxu0 0.0
    %3433 = vmatpush1.msra.mxu0 0.0
    %3434 = vmatprep.subr.mxu0 0.0
    %3435 = vmatpush1.msra.mxu0 0.0
    %3436 = vmatprep.subr.mxu0 0.0
    %3437 = vmatpush1.msra.mxu0 0.0
    %3438 = vmatprep.subr.mxu0 0.0
    %3439 = vmatpush1.msra.mxu0 0.0
    %3440 = vmatprep.subr.mxu0 0.0
    %3441 = vmatpush1.msra.mxu0 0.0
    %3442 = vmatprep.subr.mxu0 0.0
    %3443 = vmatpush1.msra.mxu0 0.0
    %3444 = vmatprep.subr.mxu0 0.0
    %3445 = vmatpush1.msra.mxu0 0.0
    %3446 = vmatprep.subr.mxu0 0.0
    %3447 = vmatpush1.msra.mxu0 0.0
    %3448 = vmatprep.subr.mxu0 0.0
    %3449 = vmatpush1.msra.mxu0 0.0
    %3450 = vmatprep.subr.mxu0 0.0
    %3451 = vmatpush1.msra.mxu0 0.0
    %3452 = vmatprep.subr.mxu0 0.0
    %3453 = vmatpush1.msra.mxu0 0.0
    %3454 = vmatprep.subr.mxu0 0.0
    %3455 = vmatpush1.msra.mxu0 0.0
    %3456 = vmatprep.subr.mxu0 0.0
    %3457 = vmatpush1.msra.mxu0 0.0
    %3458 = vmatprep.subr.mxu0 0.0
    %3459 = vmatpush1.msra.mxu0 0.0
    %3460 = vmatprep.subr.mxu0 0.0
    %3461 = vmatpush1.msra.mxu0 0.0
    %3462 = vmatprep.subr.mxu0 0.0
    %3463 = vmatpush1.msra.mxu0 0.0
    %3464 = vmatprep.subr.mxu0 0.0
    %3465 = vmatpush1.msra.mxu0 0.0
    %3466 = vmatprep.subr.mxu0 0.0
    %3467 = vmatpush1.msra.mxu0 0.0
    %3468 = vmatprep.subr.mxu0 0.0
    %3469 = vmatpush1.msra.mxu0 0.0
    %3470 = vmatprep.subr.mxu0 0.0
    %3471 = vmatpush1.msra.mxu0 0.0
    %3472 = vmatprep.mubr.f32.mxu0 0.0
    %3473 = vmatmul.mubr.f32.gmra.mrb[0].mxu0 %v3266
    %v3474 = vpop.f32.mrb[0].mxu0
    %v3475 = vadd.f32 %v108, %v3474
    %v3476 = vpop.f32.mrb[0].mxu0
    %3477 = vdwg.mxu0
    %v3479 = vsel %vm334, %v3262, 0
    %3481 = vmatprep.subr.mxu0 0.0
    %3482 = vmatpush1.msra.mxu0 %v73
    %3483 = vmatprep.subr.mxu0 0.0
    %3484 = vmatpush1.msra.mxu0 %v74
    %3485 = vmatprep.subr.mxu0 0.0
    %3486 = vmatpush1.msra.mxu0 %v75
    %3487 = vmatprep.subr.mxu0 0.0
    %3488 = vmatpush1.msra.mxu0 %v76
    %3489 = vmatprep.subr.mxu0 0.0
    %3490 = vmatpush1.msra.mxu0 0.0
    %3491 = vmatprep.subr.mxu0 0.0
    %3492 = vmatpush1.msra.mxu0 0.0
    %3493 = vmatprep.subr.mxu0 0.0
    %3494 = vmatpush1.msra.mxu0 0.0
    %3495 = vmatprep.subr.mxu0 0.0
    %3496 = vmatpush1.msra.mxu0 0.0
    %3497 = vmatprep.subr.mxu0 0.0
    %3498 = vmatpush1.msra.mxu0 0.0
    %3499 = vmatprep.subr.mxu0 0.0
    %3500 = vmatpush1.msra.mxu0 0.0
    %3501 = vmatprep.subr.mxu0 0.0
    %3502 = vmatpush1.msra.mxu0 0.0
    %3503 = vmatprep.subr.mxu0 0.0
    %3504 = vmatpush1.msra.mxu0 0.0
    %3505 = vmatprep.subr.mxu0 0.0
    %3506 = vmatpush1.msra.mxu0 0.0
    %3507 = vmatprep.subr.mxu0 0.0
    %3508 = vmatpush1.msra.mxu0 0.0
    %3509 = vmatprep.subr.mxu0 0.0
    %3510 = vmatpush1.msra.mxu0 0.0
    %3511 = vmatprep.subr.mxu0 0.0
    %3512 = vmatpush1.msra.mxu0 0.0
    %3513 = vmatprep.subr.mxu0 0.0
    %3514 = vmatpush1.msra.mxu0 0.0
    %3515 = vmatprep.subr.mxu0 0.0
    %3516 = vmatpush1.msra.mxu0 0.0
    %3517 = vmatprep.subr.mxu0 0.0
    %3518 = vmatpush1.msra.mxu0 0.0
    %3519 = vmatprep.subr.mxu0 0.0
    %3520 = vmatpush1.msra.mxu0 0.0
    %3521 = vmatprep.subr.mxu0 0.0
    %3522 = vmatpush1.msra.mxu0 0.0
    %3523 = vmatprep.subr.mxu0 0.0
    %3524 = vmatpush1.msra.mxu0 0.0
    %3525 = vmatprep.subr.mxu0 0.0
    %3526 = vmatpush1.msra.mxu0 0.0
    %3527 = vmatprep.subr.mxu0 0.0
    %3528 = vmatpush1.msra.mxu0 0.0
    %3529 = vmatprep.subr.mxu0 0.0
    %3530 = vmatpush1.msra.mxu0 0.0
    %3531 = vmatprep.subr.mxu0 0.0
    %3532 = vmatpush1.msra.mxu0 0.0
    %3533 = vmatprep.subr.mxu0 0.0
    %3534 = vmatpush1.msra.mxu0 0.0
    %3535 = vmatprep.subr.mxu0 0.0
    %3536 = vmatpush1.msra.mxu0 0.0
    %3537 = vmatprep.subr.mxu0 0.0
    %3538 = vmatpush1.msra.mxu0 0.0
    %3539 = vmatprep.subr.mxu0 0.0
    %3540 = vmatpush1.msra.mxu0 0.0
    %3541 = vmatprep.subr.mxu0 0.0
    %3542 = vmatpush1.msra.mxu0 0.0
    %3543 = vmatprep.subr.mxu0 0.0
    %3544 = vmatpush1.msra.mxu0 0.0
    %3545 = vmatprep.mubr.f32.mxu0 0.0
    %3546 = vmatmul.mubr.f32.gmra.mrb[0].mxu0 %v3479
    %v3547 = vpop.f32.mrb[0].mxu0
    %v3548 = vadd.f32 0.0, %v3547
    %v3549 = vpop.f32.mrb[0].mxu0
    %3550 = vdwg.mxu0
    %3551 = vmatprep.subr.mxu0 0.0
    %3552 = vmatpush1.msra.mxu0 %v78
    %3553 = vmatprep.subr.mxu0 0.0
    %3554 = vmatpush1.msra.mxu0 %v79
    %3555 = vmatprep.subr.mxu0 0.0
    %3556 = vmatpush1.msra.mxu0 %v80
    %3557 = vmatprep.subr.mxu0 0.0
    %3558 = vmatpush1.msra.mxu0 %v81
    %3559 = vmatprep.subr.mxu0 0.0
    %3560 = vmatpush1.msra.mxu0 0.0
    %3561 = vmatprep.subr.mxu0 0.0
    %3562 = vmatpush1.msra.mxu0 0.0
    %3563 = vmatprep.subr.mxu0 0.0
    %3564 = vmatpush1.msra.mxu0 0.0
    %3565 = vmatprep.subr.mxu0 0.0
    %3566 = vmatpush1.msra.mxu0 0.0
    %3567 = vmatprep.subr.mxu0 0.0
    %3568 = vmatpush1.msra.mxu0 0.0
    %3569 = vmatprep.subr.mxu0 0.0
    %3570 = vmatpush1.msra.mxu0 0.0
    %3571 = vmatprep.subr.mxu0 0.0
    %3572 = vmatpush1.msra.mxu0 0.0
    %3573 = vmatprep.subr.mxu0 0.0
    %3574 = vmatpush1.msra.mxu0 0.0
    %3575 = vmatprep.subr.mxu0 0.0
    %3576 = vmatpush1.msra.mxu0 0.0
    %3577 = vmatprep.subr.mxu0 0.0
    %3578 = vmatpush1.msra.mxu0 0.0
    %3579 = vmatprep.subr.mxu0 0.0
    %3580 = vmatpush1.msra.mxu0 0.0
    %3581 = vmatprep.subr.mxu0 0.0
    %3582 = vmatpush1.msra.mxu0 0.0
    %3583 = vmatprep.subr.mxu0 0.0
    %3584 = vmatpush1.msra.mxu0 0.0
    %3585 = vmatprep.subr.mxu0 0.0
    %3586 = vmatpush1.msra.mxu0 0.0
    %3587 = vmatprep.subr.mxu0 0.0
    %3588 = vmatpush1.msra.mxu0 0.0
    %3589 = vmatprep.subr.mxu0 0.0
    %3590 = vmatpush1.msra.mxu0 0.0
    %3591 = vmatprep.subr.mxu0 0.0
    %3592 = vmatpush1.msra.mxu0 0.0
    %3593 = vmatprep.subr.mxu0 0.0
    %3594 = vmatpush1.msra.mxu0 0.0
    %3595 = vmatprep.subr.mxu0 0.0
    %3596 = vmatpush1.msra.mxu0 0.0
    %3597 = vmatprep.subr.mxu0 0.0
    %3598 = vmatpush1.msra.mxu0 0.0
    %3599 = vmatprep.subr.mxu0 0.0
    %3600 = vmatpush1.msra.mxu0 0.0
    %3601 = vmatprep.subr.mxu0 0.0
    %3602 = vmatpush1.msra.mxu0 0.0
    %3603 = vmatprep.subr.mxu0 0.0
    %3604 = vmatpush1.msra.mxu0 0.0
    %3605 = vmatprep.subr.mxu0 0.0
    %3606 = vmatpush1.msra.mxu0 0.0
    %3607 = vmatprep.subr.mxu0 0.0
    %3608 = vmatpush1.msra.mxu0 0.0
    %3609 = vmatprep.subr.mxu0 0.0
    %3610 = vmatpush1.msra.mxu0 0.0
    %3611 = vmatprep.subr.mxu0 0.0
    %3612 = vmatpush1.msra.mxu0 0.0
    %3613 = vmatprep.subr.mxu0 0.0
    %3614 = vmatpush1.msra.mxu0 0.0
    %3615 = vmatprep.mubr.f32.mxu0 0.0
    %3616 = vmatmul.mubr.f32.gmra.mrb[0].mxu0 %v3479
    %v3617 = vpop.f32.mrb[0].mxu0
    %v3618 = vadd.f32 0.0, %v3617
    %v3619 = vpop.f32.mrb[0].mxu0
    %3620 = vdwg.mxu0
    %v3621 = vadd.f32 %v3335, %v3548
    %v3622 = vxor.u32 %v3621, 2147483648
    %v3623 = vmul.f32 %v3622, 1.442695
    %v3624 = vpow.pop %v3623
    %v3625 = vadd.f32 %v3624, 1.0
    %v3626 = vrcp.pop %v3625
    %v3627 = vmul.f32 1.0, %v3626
    %v3628 = vadd.f32 %v3405, %v3618
    %v3629 = vxor.u32 %v3628, 2147483648
    %v3630 = vmul.f32 %v3629, 1.442695
    %v3631 = vpow.pop %v3630
    %v3632 = vadd.f32 %v3631, 1.0
    %v3633 = vrcp.pop %v3632
    %v3634 = vmul.f32 1.0, %v3633
    %3635 = vmatprep.subr.mxu0 0.0
    %3636 = vmatpush1.msra.mxu0 %v83
    %3637 = vmatprep.subr.mxu0 0.0
    %3638 = vmatpush1.msra.mxu0 %v84
    %3639 = vmatprep.subr.mxu0 0.0
    %3640 = vmatpush1.msra.mxu0 %v85
    %3641 = vmatprep.subr.mxu0 0.0
    %3642 = vmatpush1.msra.mxu0 %v86
    %3643 = vmatprep.subr.mxu0 0.0
    %3644 = vmatpush1.msra.mxu0 0.0
    %3645 = vmatprep.subr.mxu0 0.0
    %3646 = vmatpush1.msra.mxu0 0.0
    %3647 = vmatprep.subr.mxu0 0.0
    %3648 = vmatpush1.msra.mxu0 0.0
    %3649 = vmatprep.subr.mxu0 0.0
    %3650 = vmatpush1.msra.mxu0 0.0
    %3651 = vmatprep.subr.mxu0 0.0
    %3652 = vmatpush1.msra.mxu0 0.0
    %3653 = vmatprep.subr.mxu0 0.0
    %3654 = vmatpush1.msra.mxu0 0.0
    %3655 = vmatprep.subr.mxu0 0.0
    %3656 = vmatpush1.msra.mxu0 0.0
    %3657 = vmatprep.subr.mxu0 0.0
    %3658 = vmatpush1.msra.mxu0 0.0
    %3659 = vmatprep.subr.mxu0 0.0
    %3660 = vmatpush1.msra.mxu0 0.0
    %3661 = vmatprep.subr.mxu0 0.0
    %3662 = vmatpush1.msra.mxu0 0.0
    %3663 = vmatprep.subr.mxu0 0.0
    %3664 = vmatpush1.msra.mxu0 0.0
    %3665 = vmatprep.subr.mxu0 0.0
    %3666 = vmatpush1.msra.mxu0 0.0
    %3667 = vmatprep.subr.mxu0 0.0
    %3668 = vmatpush1.msra.mxu0 0.0
    %3669 = vmatprep.subr.mxu0 0.0
    %3670 = vmatpush1.msra.mxu0 0.0
    %3671 = vmatprep.subr.mxu0 0.0
    %3672 = vmatpush1.msra.mxu0 0.0
    %3673 = vmatprep.subr.mxu0 0.0
    %3674 = vmatpush1.msra.mxu0 0.0
    %3675 = vmatprep.subr.mxu0 0.0
    %3676 = vmatpush1.msra.mxu0 0.0
    %3677 = vmatprep.subr.mxu0 0.0
    %3678 = vmatpush1.msra.mxu0 0.0
    %3679 = vmatprep.subr.mxu0 0.0
    %3680 = vmatpush1.msra.mxu0 0.0
    %3681 = vmatprep.subr.mxu0 0.0
    %3682 = vmatpush1.msra.mxu0 0.0
    %3683 = vmatprep.subr.mxu0 0.0
    %3684 = vmatpush1.msra.mxu0 0.0
    %3685 = vmatprep.subr.mxu0 0.0
    %3686 = vmatpush1.msra.mxu0 0.0
    %3687 = vmatprep.subr.mxu0 0.0
    %3688 = vmatpush1.msra.mxu0 0.0
    %3689 = vmatprep.subr.mxu0 0.0
    %3690 = vmatpush1.msra.mxu0 0.0
    %3691 = vmatprep.subr.mxu0 0.0
    %3692 = vmatpush1.msra.mxu0 0.0
    %3693 = vmatprep.subr.mxu0 0.0
    %3694 = vmatpush1.msra.mxu0 0.0
    %3695 = vmatprep.subr.mxu0 0.0
    %3696 = vmatpush1.msra.mxu0 0.0
    %3697 = vmatprep.subr.mxu0 0.0
    %3698 = vmatpush1.msra.mxu0 0.0
    %3699 = vmatprep.mubr.f32.mxu0 0.0
    %3700 = vmatmul.mubr.f32.gmra.mrb[0].mxu0 %v3479
    %v3701 = vpop.f32.mrb[0].mxu0
    %v3702 = vadd.f32 %v116, %v3701
    %v3703 = vpop.f32.mrb[0].mxu0
    %3704 = vdwg.mxu0
    %v3705 = vmul.f32 %v3627, %v3702
    %v3706 = vadd.f32 %v3475, %v3705
    %v3707 = vtanh.pop %v3706
    %v3708 = vsub.f32 1.0, %v3634
    %v3709 = vmul.f32 %v3708, %v3707
    %v3710 = vmul.f32 %v3634, %v3262
    %v3711 = vadd.f32 %v3709, %v3710
    %vm3712 = vcmask 254976
    %3713 = vst.msk [vmem:[#allocation9] sm:$0x3] %vm3712, %v3711
    %v3714 = vsel %vm3712, %v568, -inf
    %v3715 = vrot.slane %v3714, 4
    %v3716 = vmax.f32 %v3714, %v3715
    %v3717 = vrot.slane %v3716, 2
    %v3718 = vmax.f32 %v3716, %v3717
    %v3719 = vrot.slane %v3718, 1
    %v3720 = vmax.f32 %v3718, %v3719
    %v3721 = vsel %vm3712, %v1017, -inf
    %v3722 = vrot.slane %v3721, 4
    %v3723 = vmax.f32 %v3721, %v3722
    %v3724 = vrot.slane %v3723, 2
    %v3725 = vmax.f32 %v3723, %v3724
    %v3726 = vrot.slane %v3725, 1
    %v3727 = vmax.f32 %v3725, %v3726
    %v3728 = vsel %vm3712, %v1466, -inf
    %v3729 = vrot.slane %v3728, 4
    %v3730 = vmax.f32 %v3728, %v3729
    %v3731 = vrot.slane %v3730, 2
    %v3732 = vmax.f32 %v3730, %v3731
    %v3733 = vrot.slane %v3732, 1
    %v3734 = vmax.f32 %v3732, %v3733
    %v3735 = vsel %vm3712, %v1915, -inf
    %v3736 = vrot.slane %v3735, 4
    %v3737 = vmax.f32 %v3735, %v3736
    %v3738 = vrot.slane %v3737, 2
    %v3739 = vmax.f32 %v3737, %v3738
    %v3740 = vrot.slane %v3739, 1
    %v3741 = vmax.f32 %v3739, %v3740
    %v3742 = vsel %vm3712, %v2364, -inf
    %v3743 = vrot.slane %v3742, 4
    %v3744 = vmax.f32 %v3742, %v3743
    %v3745 = vrot.slane %v3744, 2
    %v3746 = vmax.f32 %v3744, %v3745
    %v3747 = vrot.slane %v3746, 1
    %v3748 = vmax.f32 %v3746, %v3747
    %v3749 = vsel %vm3712, %v2813, -inf
    %v3750 = vrot.slane %v3749, 4
    %v3751 = vmax.f32 %v3749, %v3750
    %v3752 = vrot.slane %v3751, 2
    %v3753 = vmax.f32 %v3751, %v3752
    %v3754 = vrot.slane %v3753, 1
    %v3755 = vmax.f32 %v3753, %v3754
    %v3756 = vsel %vm3712, %v3262, -inf
    %v3757 = vrot.slane %v3756, 4
    %v3758 = vmax.f32 %v3756, %v3757
    %v3759 = vrot.slane %v3758, 2
    %v3760 = vmax.f32 %v3758, %v3759
    %v3761 = vrot.slane %v3760, 1
    %v3762 = vmax.f32 %v3760, %v3761
    %v3763 = vsel %vm3712, %v3711, -inf
    %v3764 = vrot.slane %v3763, 4
    %v3765 = vmax.f32 %v3763, %v3764
    %v3766 = vrot.slane %v3765, 2
    %v3767 = vmax.f32 %v3765, %v3766
    %v3768 = vrot.slane %v3767, 1
    %v3769 = vmax.f32 %v3767, %v3768
    %v3770 = vsub.f32 %v568, %v3720
    %v3771 = vsub.f32 %v1017, %v3727
    %v3772 = vsub.f32 %v1466, %v3734
    %v3773 = vsub.f32 %v1915, %v3741
    %v3774 = vsub.f32 %v2364, %v3748
    %v3775 = vsub.f32 %v2813, %v3755
    %v3776 = vsub.f32 %v3262, %v3762
    %v3777 = vsub.f32 %v3711, %v3769
    %v3778 = vmul.f32 %v3770, 1.442695
    %v3779 = vpow.pop %v3778
    %v3780 = vmul.f32 %v3771, 1.442695
    %v3781 = vpow.pop %v3780
    %v3782 = vmul.f32 %v3772, 1.442695
    %v3783 = vpow.pop %v3782
    %v3784 = vmul.f32 %v3773, 1.442695
    %v3785 = vpow.pop %v3784
    %v3786 = vmul.f32 %v3774, 1.442695
    %v3787 = vpow.pop %v3786
    %v3788 = vmul.f32 %v3775, 1.442695
    %v3789 = vpow.pop %v3788
    %v3790 = vmul.f32 %v3776, 1.442695
    %v3791 = vpow.pop %v3790
    %v3792 = vmul.f32 %v3777, 1.442695
    %v3793 = vpow.pop %v3792
    %v3794 = vsel %vm3712, %v3779, 0.0
    %v3795 = vrot.slane %v3794, 4
    %v3796 = vadd.f32 %v3794, %v3795
    %v3797 = vrot.slane %v3796, 2
    %v3798 = vadd.f32 %v3796, %v3797
    %v3799 = vrot.slane %v3798, 1
    %v3800 = vadd.f32 %v3798, %v3799
    %v3801 = vsel %vm3712, %v3781, 0.0
    %v3802 = vrot.slane %v3801, 4
    %v3803 = vadd.f32 %v3801, %v3802
    %v3804 = vrot.slane %v3803, 2
    %v3805 = vadd.f32 %v3803, %v3804
    %v3806 = vrot.slane %v3805, 1
    %v3807 = vadd.f32 %v3805, %v3806
    %v3808 = vsel %vm3712, %v3783, 0.0
    %v3809 = vrot.slane %v3808, 4
    %v3810 = vadd.f32 %v3808, %v3809
    %v3811 = vrot.slane %v3810, 2
    %v3812 = vadd.f32 %v3810, %v3811
    %v3813 = vrot.slane %v3812, 1
    %v3814 = vadd.f32 %v3812, %v3813
    %v3815 = vsel %vm3712, %v3785, 0.0
    %v3816 = vrot.slane %v3815, 4
    %v3817 = vadd.f32 %v3815, %v3816
    %v3818 = vrot.slane %v3817, 2
    %v3819 = vadd.f32 %v3817, %v3818
    %v3820 = vrot.slane %v3819, 1
    %v3821 = vadd.f32 %v3819, %v3820
    %v3822 = vsel %vm3712, %v3787, 0.0
    %v3823 = vrot.slane %v3822, 4
    %v3824 = vadd.f32 %v3822, %v3823
    %v3825 = vrot.slane %v3824, 2
    %v3826 = vadd.f32 %v3824, %v3825
    %v3827 = vrot.slane %v3826, 1
    %v3828 = vadd.f32 %v3826, %v3827
    %v3829 = vsel %vm3712, %v3789, 0.0
    %v3830 = vrot.slane %v3829, 4
    %v3831 = vadd.f32 %v3829, %v3830
    %v3832 = vrot.slane %v3831, 2
    %v3833 = vadd.f32 %v3831, %v3832
    %v3834 = vrot.slane %v3833, 1
    %v3835 = vadd.f32 %v3833, %v3834
    %v3836 = vsel %vm3712, %v3791, 0.0
    %v3837 = vrot.slane %v3836, 4
    %v3838 = vadd.f32 %v3836, %v3837
    %v3839 = vrot.slane %v3838, 2
    %v3840 = vadd.f32 %v3838, %v3839
    %v3841 = vrot.slane %v3840, 1
    %v3842 = vadd.f32 %v3840, %v3841
    %v3843 = vsel %vm3712, %v3793, 0.0
    %v3844 = vrot.slane %v3843, 4
    %v3845 = vadd.f32 %v3843, %v3844
    %v3846 = vrot.slane %v3845, 2
    %v3847 = vadd.f32 %v3845, %v3846
    %v3848 = vrot.slane %v3847, 1
    %v3849 = vadd.f32 %v3847, %v3848
    %v3850 = vlog2.pop %v3800
    %v3851 = vmul.f32 %v3850, 0.6931472
    %v3852 = vlog2.pop %v3807
    %v3853 = vmul.f32 %v3852, 0.6931472
    %v3854 = vlog2.pop %v3814
    %v3855 = vmul.f32 %v3854, 0.6931472
    %v3856 = vlog2.pop %v3821
    %v3857 = vmul.f32 %v3856, 0.6931472
    %v3858 = vlog2.pop %v3828
    %v3859 = vmul.f32 %v3858, 0.6931472
    %v3860 = vlog2.pop %v3835
    %v3861 = vmul.f32 %v3860, 0.6931472
    %v3862 = vlog2.pop %v3842
    %v3863 = vmul.f32 %v3862, 0.6931472
    %v3864 = vlog2.pop %v3849
    %v3865 = vmul.f32 %v3864, 0.6931472
    %v3866 = vadd.f32 %v3851, %v3720
    %v3867 = vadd.f32 %v3853, %v3727
    %v3868 = vadd.f32 %v3855, %v3734
    %v3869 = vadd.f32 %v3857, %v3741
    %v3870 = vadd.f32 %v3859, %v3748
    %v3871 = vadd.f32 %v3861, %v3755
    %v3872 = vadd.f32 %v3863, %v3762
    %v3873 = vadd.f32 %v3865, %v3769
    %v3874 = vsub.f32 %v568, %v3866
    %v3875 = vsub.f32 %v1017, %v3867
    %v3876 = vsub.f32 %v1466, %v3868
    %v3877 = vsub.f32 %v1915, %v3869
    %v3878 = vsub.f32 %v2364, %v3870
    %v3879 = vsub.f32 %v2813, %v3871
    %v3880 = vsub.f32 %v3262, %v3872
    %v3881 = vsub.f32 %v3711, %v3873
    %3882 = vst.msk [vmem:[#allocation8] sm:$0x3] %vm3712, %v3874
    %3883 = vst.msk [vmem:[#allocation8 + $0x2] sm:$0x3] %vm3712, %v3875
    %3884 = vst.msk [vmem:[#allocation8 + $0x4] sm:$0x3] %vm3712, %v3876
    %3885 = vst.msk [vmem:[#allocation8 + $0x6] sm:$0x3] %vm3712, %v3877
    %3886 = vst.msk [vmem:[#allocation8 + $0x8] sm:$0x3] %vm3712, %v3878
    %3887 = vst.msk [vmem:[#allocation8 + $0xa] sm:$0x3] %vm3712, %v3879
    %3888 = vst.msk [vmem:[#allocation8 + $0xc] sm:$0x3] %vm3712, %v3880
    %3889 = vst.msk [vmem:[#allocation8 + $0xe] sm:$0x3] %vm3712, %v3881
    // Predicated region
    $region34: #{tpu_custom_call.1} parent=1 // pred_check
      _
    $region35: #{tpu_custom_call.1} parent=1 // pred_check_branch
      %3891 = sbr.rel (0) target = $region37
    $region36: #{tpu_custom_call.1} parent=1 // pred_region
      %s3893 = ssub.s32 256, 256
      %3894 = vsyncadd [#allocation4], %s3893
      %s3895 = sshll.u32 [#allocation8], 4
      %s3896 = int_to_ptr.vmem [resolvable:$true] %s3895
      %3901 = dma.vmem_to_hbm [thread:$0]  %s3896, 256, %s5, [#allocation4], 32, 32, 2
    $region37: #{tpu_custom_call.1} parent=1 // pred_fallthru
      _
    // Predicated region
    $region38: #{tpu_custom_call.1} parent=1 // pred_check
      _
    $region39: #{tpu_custom_call.1} parent=1 // pred_check_branch
      %3903 = sbr.rel (0) target = $region41
    $region40: #{tpu_custom_call.1} parent=1 // pred_region
      %s3905 = ssub.s32 32, 32
      %3906 = vsyncadd [#allocation10], %s3905
      %s3908 = sshll.u32 [#allocation9], 4
      %s3909 = int_to_ptr.vmem [resolvable:$true] %s3908
      %3911 = dma.vmem_to_hbm [thread:$0]  %s3909, 32, %s6, [#allocation10]
    $region41: #{tpu_custom_call.1} parent=1 // pred_fallthru
      _
    // Predicated region
    $region42: #{tpu_custom_call.1} parent=1 // pred_check
      _
    $region43: #{tpu_custom_call.1} parent=1 // pred_check_branch
      %3913 = sbr.rel (0) target = $region45
    $region44: #{tpu_custom_call.1} parent=1 // pred_region
      %3914 = dma.done [#allocation4], 256
    $region45: #{tpu_custom_call.1} parent=1 // pred_fallthru
      _
    // Predicated region
    $region46: #{tpu_custom_call.1} parent=1 // pred_check
      _
    $region47: #{tpu_custom_call.1} parent=1 // pred_check_branch
      %3916 = sbr.rel (0) target = $region49
    $region48: #{tpu_custom_call.1} parent=1 // pred_region
      %3917 = dma.done [#allocation10], 32
    $region49: #{tpu_custom_call.1} parent=1 // pred_fallthru
      _
    %3918 = vsyncpa [#allocation3], 1
    %3919 = vsyncpa [#allocation6], 1
    %3920 = vsyncpa [#allocation4], 1
    %3921 = vsyncpa [#allocation10], 1

</llo_original>
